<compile_context>
chip_gen: v6e
topology: v6e:2x2x1
jax: 0.10.0
libtpu: 0.0.40
codegen_flags: <defaults>
</compile_context>

<pallas_src>
import functools

import jax
import jax.numpy as jnp
from jax.experimental import pallas as pl
from jax.experimental.pallas import tpu as pltpu


def _round_up(x, m):
    return (x + m - 1) // m * m


def _default_act_dtype():
    """bf16 element-wise carry only on chips with a bf16 VPU/EUP (v6e+)."""
    try:
        kind = jax.devices()[0].device_kind.lower()
    except Exception:  # pragma: no cover
        return jnp.float32
    if "tpu" not in kind:
        return jnp.float32
    if any(t in kind for t in ("v2", "v3", "v4", "v5")):
        return jnp.float32
    return jnp.bfloat16


def _vmem_tile_bytes(shape, dtype):
    """Padded VMEM footprint of one buffer ((8/16,128)-tile granularity)."""
    itemsize = jnp.dtype(dtype).itemsize
    sub = max(8, 32 // itemsize)
    shape = tuple(int(s) for s in shape)
    if len(shape) == 1:
        lead, r, c = 1, 1, shape[0]
    else:
        r, c = shape[-2], shape[-1]
        lead = 1
        for s in shape[:-2]:
            lead *= s
    return lead * _round_up(r, sub) * _round_up(c, 128) * itemsize


# ----------------------------------------------------------------------------
# Kernel
# ----------------------------------------------------------------------------
def make_inn_kernel(n, d, nlayers, nsublayers, vp, matmul_dtype, act_dtype):
    """Full INN forward for one [bm, n] batch tile (feature-major compute)."""
    nlin = nsublayers + 2  # linears per FCNet: in->w, nsublayers x (w->w), w->out
    n_pad = _round_up(n, 8)
    nt_dims = (((1,), (1,)), ((), ()))  # contract last dims: A @ B^T (MXU-native)

    def kernel(x_ref, *refs):
        o_ref = refs[-1]
        prefs = refs[:-1]  # flat [W0, b0, W1, b1, ...] in consumption order

        tile = x_ref[...].astype(jnp.float32)            # [bm, n] batch-major

        # ---- layout: batch-major tile -> feature-major halves ---------------
        # Fuse the [bm, n] -> [n, bm] transpose into an NT matmul with a
        # constant identity: no XLU relayout of a lane-sparse (bm, n) source,
        # and no extra HBM transpose passes in the wrapper.
        ri = jax.lax.broadcasted_iota(jnp.int32, (n, n), 0)
        ci = jax.lax.broadcasted_iota(jnp.int32, (n, n), 1)
        eye = (ri == ci).astype(jnp.float32)             # [n, n]
        xy_fm = jax.lax.dot_general(eye, tile, nt_dims,
                                    preferred_element_type=jnp.float32)  # [n, bm]
        x = xy_fm[:d, :]                                 # [d, bm]
        y = xy_fm[d:, :]                                 # [n-d, bm]
        # TODO(synk): for large n with an unaligned d, pad the d boundary to a
        # sublane multiple (pad W rows/cols in pack_params_for_kernel) so the
        # per-layer x/y updates avoid masked sublane selects.

        idx = [0]

        def run_fcnet(h0):
            # FCNet feature-major: h_{k+1} = sigmoid(W_k @ h_k + b_k),
            # W_k: [out, in], b_k: [out, 1], h: [in, bm].
            # sigmoid(z) == 0.5*tanh(0.5*z)+0.5 -> one EUP push, no divide.
            h = h0.astype(matmul_dtype)
            out = None
            for k in range(nlin):
                W = prefs[idx[0]][...]        # [out_k, in_k] (matmul_dtype)
                b = prefs[idx[0] + 1][...]    # [out_k, 1]    (f32)
                idx[0] += 2
                z = jnp.dot(W, h, preferred_element_type=jnp.float32) + b
                a = 0.5 * jnp.tanh(0.5 * z.astype(act_dtype)) + 0.5
                if k + 1 < nlin:
                    h = a.astype(matmul_dtype)   # carry dtype feeds next MXU op
                else:
                    out = a.astype(jnp.float32)  # coupling math stays f32
            return out

        ul = "up"
        for _ in range(nlayers):
            inp = y if ul == "up" else x
            outdim = d if ul == "up" else (n - d)
            if vp:
                m = run_fcnet(inp)                        # VPINNMod
                if ul == "up":
                    x = x + m
                else:
                    y = y + m
            else:
                st = run_fcnet(inp)                       # fused s/t NVPINNMod
                s = st[:outdim, :]
                t = st[outdim:, :]
                if ul == "up":
                    x = x * jnp.exp(s) + t
                else:
                    y = y * jnp.exp(s) + t
            ul = "low" if ul == "up" else "up"

        # ---- layout: feature-major -> batch-major lane-dense store ----------
        parts = [x, y]
        if n_pad != n:  # keep the transpose source sublane-aligned
            parts.append(jnp.zeros((n_pad - n, x.shape[1]), jnp.float32))
        out_fm = jnp.concatenate(parts, axis=0)          # [n_pad, bm]
        out_bm = jnp.transpose(out_fm)                   # [bm, n_pad] (XLU slot, idle)
        o_ref[...] = out_bm[:, :n].astype(o_ref.dtype)

    return kernel


# ----------------------------------------------------------------------------
# Parameter construction (PyTorch layout: W [out, in], b [out])
# ----------------------------------------------------------------------------
def build_inn_params(key, n, d, nlayers, nsublayers, width, vp):
    """Flat list [W0, b0, W1, b1, ...] matching the PyTorch module order."""
    params = []
    ul = "up"
    for _ in range(nlayers):
        indim = (n - d) if ul == "up" else d
        outdim = d if ul == "up" else (n - d)
        n_nets = 1 if vp else 2  # VP: m ; NVP: s then t
        dims = [indim] + [width] * (nsublayers + 1) + [outdim]
        for _ in range(n_nets):
            for k in range(len(dims) - 1):
                key, kw, kb = jax.random.split(key, 3)
                W = 0.5 * jax.random.normal(kw, (dims[k + 1], dims[k]), jnp.float32)
                b = 0.1 * jax.random.normal(kb, (dims[k + 1],), jnp.float32)
                params += [W, b]
        ul = "low" if ul == "up" else "up"
    return params


def pack_params_for_kernel(params, *, nlayers, nsublayers, vp, matmul_dtype):
    """Convert PyTorch-layout params to the kernel's consumption format.

    VP:  pass-through (W [out,in] cast to matmul_dtype, bias as [out,1] f32).
    NVP: fuse the s-net and t-net of each coupling layer into one FCNet with
         block-diagonal weights (first layer: row-concat, since both nets
         share the same input), so the kernel runs a single fused pass.
    """
    nlin = nsublayers + 2
    packed = []
    idx = 0
    for _ in range(nlayers):
        if vp:
            for _ in range(nlin):
                W, b = params[idx], params[idx + 1]
                idx += 2
                packed += [W.astype(matmul_dtype),
                           b[:, None].astype(jnp.float32)]
        else:
            s_par = params[idx: idx + 2 * nlin]
            idx += 2 * nlin
            t_par = params[idx: idx + 2 * nlin]
            idx += 2 * nlin
            for k in range(nlin):
                Ws, bs = s_par[2 * k], s_par[2 * k + 1]
                Wt, bt = t_par[2 * k], t_par[2 * k + 1]
                if k == 0:
                    Wf = jnp.concatenate([Ws, Wt], axis=0)        # [2w, indim]
                else:
                    os_, is_ = Ws.shape
                    ot_, it_ = Wt.shape
                    Wf = jnp.zeros((os_ + ot_, is_ + it_), Ws.dtype)
                    Wf = Wf.at[:os_, :is_].set(Ws).at[os_:, is_:].set(Wt)
                bf = jnp.concatenate([bs, bt], axis=0)
                packed += [Wf.astype(matmul_dtype),
                           bf[:, None].astype(jnp.float32)]
    return packed


# ----------------------------------------------------------------------------
# Wrapper
# ----------------------------------------------------------------------------
def inn_forward(x, params, *, n, d, nlayers, nsublayers, vp,
                bm=512, matmul_dtype=jnp.bfloat16, act_dtype=None):
    B = x.shape[0]
    assert x.shape[1] == n
    if act_dtype is None:
        act_dtype = _default_act_dtype()   # f32 on <= v5, bf16 on v6e/v7x

    kparams = pack_params_for_kernel(
        params, nlayers=nlayers, nsublayers=nsublayers, vp=vp,
        matmul_dtype=matmul_dtype)

    # Batch tile: multiple of 128 (lane-dense after the in-kernel transpose),
    # as large as requested, but capped so the "parallel" grid keeps >= 2
    # steps (v7x: 2 TensorCores).  Last tile may be partial (OOB handled).
    bm = max(128, _round_up(bm, 128))
    bm = min(bm, max(128, _round_up(-(-B // 2), 128)))
    num_tiles = pl.cdiv(B, bm)

    in_specs = [pl.BlockSpec((bm, n), lambda i: (i, 0))]
    for p in kparams:
        # Whole-array block, constant index map: DMA'd once, revisits skipped.
        in_specs.append(pl.BlockSpec(p.shape, lambda i: (0, 0)))
    # TODO(synk): on v7x, additionally mark these constant-index weight specs
    # pipeline_mode=pl.Buffered(1) to drop their second (useless) VMEM copy.

    # VMEM budget from actual padded buffer sizes (not a hard-coded limit):
    # double-buffered in/out activation tiles + double-buffered weight copies
    # + a working-set allowance for the live [width, bm] activations.
    io_bytes = 2 * 2 * _vmem_tile_bytes((bm, n), x.dtype)
    w_bytes = 2 * sum(_vmem_tile_bytes(p.shape, p.dtype) for p in kparams)
    wmax = max(int(p.shape[0]) for p in kparams)
    work_bytes = 8 * _vmem_tile_bytes((wmax, bm), jnp.float32)
    vmem_limit = int(min(max(io_bytes + w_bytes + work_bytes + (2 << 20),
                             16 << 20), 48 << 20))

    # Advisory cost estimate so XLA can overlap surrounding HLOs.
    flops = 0
    transcendentals = 0
    ul = "up"
    for _ in range(nlayers):
        indim = (n - d) if ul == "up" else d
        outdim = d if ul == "up" else (n - d)
        mult = 1 if vp else 2
        dims = [indim] + [mult * width_of(kparams, nsublayers)] * 0  # placeholder
        ul = ul  # (replaced below)
        break
    # (compute properly without the placeholder above)
    flops = 0
    transcendentals = 0
    ul = "up"
    width_hidden = None
    # infer hidden width from packed params: first W is [mult*width, indim]
    width_hidden = int(kparams[0].shape[0]) // (1 if vp else 2)
    for _ in range(nlayers):
        indim = (n - d) if ul == "up" else d
        outdim = d if ul == "up" else (n - d)
        mult = 1 if vp else 2
        dims = [indim] + [mult * width_hidden] * (nsublayers + 1) + [mult * outdim]
        for k in range(len(dims) - 1):
            flops += 2 * B * dims[k] * dims[k + 1]
            transcendentals += B * dims[k + 1]      # tanh-form sigmoid
        if not vp:
            transcendentals += B * outdim           # exp in the coupling update
        flops += 3 * B * outdim                     # coupling mul/add (approx)
        ul = "low" if ul == "up" else "up"
    flops += 2 * B * n * n                          # in-kernel identity transpose
    bytes_accessed = (2 * B * n * jnp.dtype(x.dtype).itemsize
                      + sum(int(p.size) * jnp.dtype(p.dtype).itemsize
                            for p in kparams))
    cost = pl.CostEstimate(flops=int(flops),
                           transcendentals=int(transcendentals),
                           bytes_accessed=int(bytes_accessed))

    return pl.pallas_call(
        make_inn_kernel(n, d, nlayers, nsublayers, vp, matmul_dtype, act_dtype),
        out_shape=jax.ShapeDtypeStruct((B, n), x.dtype),
        grid=(num_tiles,),
        in_specs=in_specs,
        out_specs=pl.BlockSpec((bm, n), lambda i: (i, 0)),
        compiler_params=pltpu.CompilerParams(
            dimension_semantics=("parallel",),
            vmem_limit_bytes=vmem_limit),
        cost_estimate=cost,
    )(x, *kparams)


def width_of(kparams, nsublayers):  # kept only for signature compatibility above
    return int(kparams[0].shape[0])


# ----------------------------------------------------------------------------
# Pure-JAX reference (mirrors the PyTorch forward exactly, [B, n] layout)
# ----------------------------------------------------------------------------
def inn_reference(x, params, *, n, d, nlayers, nsublayers, vp):
    nlin = nsublayers + 2
    idx = 0

    def run_fcnet(h):
        nonlocal idx
        for _ in range(nlin):
            W, b = params[idx], params[idx + 1]   # W [out, in], b [out]
            idx += 2
            h = jax.nn.sigmoid(h @ W.T + b)
        return h

    xy = x
    ul = "up"
    for _ in range(nlayers):
        xl, yl = xy[:, :d], xy[:, d:]
        inp = yl if ul == "up" else xl
        if vp:
            m = run_fcnet(inp)
            new = (xl + m) if ul == "up" else (yl + m)
        else:
            s = run_fcnet(inp)
            t = run_fcnet(inp)
            new = (xl * jnp.exp(s) + t) if ul == "up" else (yl * jnp.exp(s) + t)
        xy = jnp.concatenate([new, yl], 1) if ul == "up" else jnp.concatenate([xl, new], 1)
        ul = "low" if ul == "up" else "up"
    return xy


# ----------------------------------------------------------------------------
# Demo
# ----------------------------------------------------------------------------
if __name__ == "__main__":
    # INN hyper-parameters (small, consistent with the module's __init__).
    n, d = 8, 3
    nlayers, nsublayers, width = 3, 2, 32
    B = 600  # -> 2 lane-dense batch tiles (384 + partial 216): exercises the
             # multi-step "parallel" grid and the OOB-masked partial tile.

    key = jax.random.PRNGKey(0)
    key, kx = jax.random.split(key)
    x = jax.random.normal(kx, (B, n), jnp.float32)

    for vp in (True, False):
        key, kp = jax.random.split(key)
        params = build_inn_params(kp, n, d, nlayers, nsublayers, width, vp)
        ref = inn_reference(x, params, n=n, d=d, nlayers=nlayers,
                            nsublayers=nsublayers, vp=vp)

        # Exact-math path: f32 MXU operands, f32 element-wise -> tight check.
        fwd_f32 = functools.partial(
            inn_forward, n=n, d=d, nlayers=nlayers, nsublayers=nsublayers,
            vp=vp, matmul_dtype=jnp.float32, act_dtype=jnp.float32)
        out = jax.block_until_ready(jax.jit(fwd_f32)(x, params))
        assert out.shape == (B, n)
        assert jnp.allclose(out, ref, atol=1e-4, rtol=1e-4), \
            f"f32 Pallas output mismatch vs reference (vp={vp})"

        # Default fast path: bf16 MXU operands, f32 element-wise (v5e-safe).
        fwd_bf16 = functools.partial(
            inn_forward, n=n, d=d, nlayers=nlayers, nsublayers=nsublayers,
            vp=vp, matmul_dtype=jnp.bfloat16, act_dtype=jnp.float32)
        out_bf16 = jax.block_until_ready(jax.jit(fwd_bf16)(x, params))
        assert jnp.allclose(out_bf16, ref, atol=0.3, rtol=0.1), \
            f"bf16-matmul Pallas output mismatch vs reference (vp={vp})"

    # bf16 activation carry: v6e/v7x-only optimization (v5e EUP/VPU lack a
    # bf16 path, so element-wise math stays f32 there).
    if _default_act_dtype() is jnp.bfloat16:
        key, kp = jax.random.split(key)
        params = build_inn_params(kp, n, d, nlayers, nsublayers, width, True)
        ref = inn_reference(x, params, n=n, d=d, nlayers=nlayers,
                            nsublayers=nsublayers, vp=True)
        fwd_carry = functools.partial(
            inn_forward, n=n, d=d, nlayers=nlayers, nsublayers=nsublayers,
            vp=True, matmul_dtype=jnp.bfloat16, act_dtype=jnp.bfloat16)
        out_c = jax.block_until_ready(jax.jit(fwd_carry)(x, params))
        assert jnp.allclose(out_c, ref, atol=0.3, rtol=0.1), \
            "bf16-activation-carry Pallas output mismatch vs f32 reference"

    print("KERNEL_OK")
</pallas_src>

<mosaic_0001>
module attributes {stable_mosaic.version = 11 : i64} {
  func.func @kernel(%arg0: i32, %arg1: memref<384x8xf32, #tpu.memory_space<vmem>>, %arg2: memref<32x5xf32, #tpu.memory_space<vmem>>, %arg3: memref<32x1xf32, #tpu.memory_space<vmem>>, %arg4: memref<32x32xf32, #tpu.memory_space<vmem>>, %arg5: memref<32x1xf32, #tpu.memory_space<vmem>>, %arg6: memref<32x32xf32, #tpu.memory_space<vmem>>, %arg7: memref<32x1xf32, #tpu.memory_space<vmem>>, %arg8: memref<3x32xf32, #tpu.memory_space<vmem>>, %arg9: memref<3x1xf32, #tpu.memory_space<vmem>>, %arg10: memref<32x3xf32, #tpu.memory_space<vmem>>, %arg11: memref<32x1xf32, #tpu.memory_space<vmem>>, %arg12: memref<32x32xf32, #tpu.memory_space<vmem>>, %arg13: memref<32x1xf32, #tpu.memory_space<vmem>>, %arg14: memref<32x32xf32, #tpu.memory_space<vmem>>, %arg15: memref<32x1xf32, #tpu.memory_space<vmem>>, %arg16: memref<5x32xf32, #tpu.memory_space<vmem>>, %arg17: memref<5x1xf32, #tpu.memory_space<vmem>>, %arg18: memref<32x5xf32, #tpu.memory_space<vmem>>, %arg19: memref<32x1xf32, #tpu.memory_space<vmem>>, %arg20: memref<32x32xf32, #tpu.memory_space<vmem>>, %arg21: memref<32x1xf32, #tpu.memory_space<vmem>>, %arg22: memref<32x32xf32, #tpu.memory_space<vmem>>, %arg23: memref<32x1xf32, #tpu.memory_space<vmem>>, %arg24: memref<3x32xf32, #tpu.memory_space<vmem>>, %arg25: memref<3x1xf32, #tpu.memory_space<vmem>>, %arg26: memref<384x8xf32, #tpu.memory_space<vmem>>) attributes {dimension_semantics = [#tpu.dimension_semantics<parallel>], iteration_bounds = array<i64: 2>, scalar_prefetch = 0 : i64, scratch_operands = 0 : i64, tpu.core_type = #tpu.core_type<tc>, window_params = [{transform_indices = @transform_0, window_bounds = array<i64: 384, 8>}, {pipeline_mode = #tpu.pipeline_mode<synchronous>, transform_indices = @transform_1, window_bounds = array<i64: 32, 5>}, {pipeline_mode = #tpu.pipeline_mode<synchronous>, transform_indices = @transform_2, window_bounds = array<i64: 32, 1>}, {pipeline_mode = #tpu.pipeline_mode<synchronous>, transform_indices = @transform_3, window_bounds = array<i64: 32, 32>}, {pipeline_mode = #tpu.pipeline_mode<synchronous>, transform_indices = @transform_4, window_bounds = array<i64: 32, 1>}, {pipeline_mode = #tpu.pipeline_mode<synchronous>, transform_indices = @transform_5, window_bounds = array<i64: 32, 32>}, {pipeline_mode = #tpu.pipeline_mode<synchronous>, transform_indices = @transform_6, window_bounds = array<i64: 32, 1>}, {pipeline_mode = #tpu.pipeline_mode<synchronous>, transform_indices = @transform_7, window_bounds = array<i64: 3, 32>}, {pipeline_mode = #tpu.pipeline_mode<synchronous>, transform_indices = @transform_8, window_bounds = array<i64: 3, 1>}, {pipeline_mode = #tpu.pipeline_mode<synchronous>, transform_indices = @transform_9, window_bounds = array<i64: 32, 3>}, {pipeline_mode = #tpu.pipeline_mode<synchronous>, transform_indices = @transform_10, window_bounds = array<i64: 32, 1>}, {pipeline_mode = #tpu.pipeline_mode<synchronous>, transform_indices = @transform_11, window_bounds = array<i64: 32, 32>}, {pipeline_mode = #tpu.pipeline_mode<synchronous>, transform_indices = @transform_12, window_bounds = array<i64: 32, 1>}, {pipeline_mode = #tpu.pipeline_mode<synchronous>, transform_indices = @transform_13, window_bounds = array<i64: 32, 32>}, {pipeline_mode = #tpu.pipeline_mode<synchronous>, transform_indices = @transform_14, window_bounds = array<i64: 32, 1>}, {pipeline_mode = #tpu.pipeline_mode<synchronous>, transform_indices = @transform_15, window_bounds = array<i64: 5, 32>}, {pipeline_mode = #tpu.pipeline_mode<synchronous>, transform_indices = @transform_16, window_bounds = array<i64: 5, 1>}, {pipeline_mode = #tpu.pipeline_mode<synchronous>, transform_indices = @transform_17, window_bounds = array<i64: 32, 5>}, {pipeline_mode = #tpu.pipeline_mode<synchronous>, transform_indices = @transform_18, window_bounds = array<i64: 32, 1>}, {pipeline_mode = #tpu.pipeline_mode<synchronous>, transform_indices = @transform_19, window_bounds = array<i64: 32, 32>}, {pipeline_mode = #tpu.pipeline_mode<synchronous>, transform_indices = @transform_20, window_bounds = array<i64: 32, 1>}, {pipeline_mode = #tpu.pipeline_mode<synchronous>, transform_indices = @transform_21, window_bounds = array<i64: 32, 32>}, {pipeline_mode = #tpu.pipeline_mode<synchronous>, transform_indices = @transform_22, window_bounds = array<i64: 32, 1>}, {pipeline_mode = #tpu.pipeline_mode<synchronous>, transform_indices = @transform_23, window_bounds = array<i64: 3, 32>}, {pipeline_mode = #tpu.pipeline_mode<synchronous>, transform_indices = @transform_24, window_bounds = array<i64: 3, 1>}, {transform_indices = @transform_25, window_bounds = array<i64: 384, 8>}]} {
    %c0 = arith.constant 0 : index
    %c0_0 = arith.constant 0 : index
    %0 = vector.load %arg1[%c0, %c0_0] : memref<384x8xf32, #tpu.memory_space<vmem>>, vector<384x8xf32>
    %1 = tpu.iota {dimensions = array<i32: 0>} : vector<8x8xi32>
    %2 = tpu.iota {dimensions = array<i32: 1>} : vector<8x8xi32>
    %3 = arith.cmpi eq, %1, %2 : vector<8x8xi32>
    %4 = arith.extui %3 : vector<8x8xi1> to vector<8x8xi32>
    %5 = arith.sitofp %4 : vector<8x8xi32> to vector<8x8xf32>
    %cst = arith.constant dense<0.000000e+00> : vector<8x384xf32>
    %6 = tpu.matmul %5, %0, %cst {dimension_numbers = #tpu.dot_dimension_numbers<[1], [1], [0], [0], [0, 0, 1, 0], [], []>} : vector<8x8xf32>, vector<384x8xf32>, vector<8x384xf32> -> vector<8x384xf32>
    %7 = vector.extract_strided_slice %6 {offsets = [0, 0], sizes = [3, 384], strides = [1, 1]} : vector<8x384xf32> to vector<3x384xf32>
    %8 = vector.extract_strided_slice %6 {offsets = [3, 0], sizes = [5, 384], strides = [1, 1]} : vector<8x384xf32> to vector<5x384xf32>
    %c0_1 = arith.constant 0 : index
    %c0_2 = arith.constant 0 : index
    %9 = vector.load %arg2[%c0_1, %c0_2] : memref<32x5xf32, #tpu.memory_space<vmem>>, vector<32x5xf32>
    %c0_3 = arith.constant 0 : index
    %c0_4 = arith.constant 0 : index
    %10 = vector.load %arg3[%c0_3, %c0_4] : memref<32x1xf32, #tpu.memory_space<vmem>>, vector<32x1xf32>
    %cst_5 = arith.constant dense<0.000000e+00> : vector<32x384xf32>
    %11 = tpu.matmul %9, %8, %cst_5 {dimension_numbers = #tpu.dot_dimension_numbers<[1], [0], [0], [1], [0, 0, 1, 1], [], []>} : vector<32x5xf32>, vector<5x384xf32>, vector<32x384xf32> -> vector<32x384xf32>
    %12 = vector.broadcast %10 : vector<32x1xf32> to vector<32x384xf32>
    %13 = arith.addf %11, %12 : vector<32x384xf32>
    %cst_6 = arith.constant 5.000000e-01 : f32
    %14 = vector.broadcast %cst_6 : f32 to vector<32x384xf32>
    %15 = arith.mulf %14, %13 : vector<32x384xf32>
    %16 = math.tanh %15 : vector<32x384xf32>
    %cst_7 = arith.constant 5.000000e-01 : f32
    %17 = vector.broadcast %cst_7 : f32 to vector<32x384xf32>
    %18 = arith.mulf %17, %16 : vector<32x384xf32>
    %cst_8 = arith.constant 5.000000e-01 : f32
    %19 = vector.broadcast %cst_8 : f32 to vector<32x384xf32>
    %20 = arith.addf %18, %19 : vector<32x384xf32>
    %c0_9 = arith.constant 0 : index
    %c0_10 = arith.constant 0 : index
    %21 = vector.load %arg4[%c0_9, %c0_10] : memref<32x32xf32, #tpu.memory_space<vmem>>, vector<32x32xf32>
    %c0_11 = arith.constant 0 : index
    %c0_12 = arith.constant 0 : index
    %22 = vector.load %arg5[%c0_11, %c0_12] : memref<32x1xf32, #tpu.memory_space<vmem>>, vector<32x1xf32>
    %cst_13 = arith.constant dense<0.000000e+00> : vector<32x384xf32>
    %23 = tpu.matmul %21, %20, %cst_13 {dimension_numbers = #tpu.dot_dimension_numbers<[1], [0], [0], [1], [0, 0, 1, 1], [], []>} : vector<32x32xf32>, vector<32x384xf32>, vector<32x384xf32> -> vector<32x384xf32>
    %24 = vector.broadcast %22 : vector<32x1xf32> to vector<32x384xf32>
    %25 = arith.addf %23, %24 : vector<32x384xf32>
    %cst_14 = arith.constant 5.000000e-01 : f32
    %26 = vector.broadcast %cst_14 : f32 to vector<32x384xf32>
    %27 = arith.mulf %26, %25 : vector<32x384xf32>
    %28 = math.tanh %27 : vector<32x384xf32>
    %cst_15 = arith.constant 5.000000e-01 : f32
    %29 = vector.broadcast %cst_15 : f32 to vector<32x384xf32>
    %30 = arith.mulf %29, %28 : vector<32x384xf32>
    %cst_16 = arith.constant 5.000000e-01 : f32
    %31 = vector.broadcast %cst_16 : f32 to vector<32x384xf32>
    %32 = arith.addf %30, %31 : vector<32x384xf32>
    %c0_17 = arith.constant 0 : index
    %c0_18 = arith.constant 0 : index
    %33 = vector.load %arg6[%c0_17, %c0_18] : memref<32x32xf32, #tpu.memory_space<vmem>>, vector<32x32xf32>
    %c0_19 = arith.constant 0 : index
    %c0_20 = arith.constant 0 : index
    %34 = vector.load %arg7[%c0_19, %c0_20] : memref<32x1xf32, #tpu.memory_space<vmem>>, vector<32x1xf32>
    %cst_21 = arith.constant dense<0.000000e+00> : vector<32x384xf32>
    %35 = tpu.matmul %33, %32, %cst_21 {dimension_numbers = #tpu.dot_dimension_numbers<[1], [0], [0], [1], [0, 0, 1, 1], [], []>} : vector<32x32xf32>, vector<32x384xf32>, vector<32x384xf32> -> vector<32x384xf32>
    %36 = vector.broadcast %34 : vector<32x1xf32> to vector<32x384xf32>
    %37 = arith.addf %35, %36 : vector<32x384xf32>
    %cst_22 = arith.constant 5.000000e-01 : f32
    %38 = vector.broadcast %cst_22 : f32 to vector<32x384xf32>
    %39 = arith.mulf %38, %37 : vector<32x384xf32>
    %40 = math.tanh %39 : vector<32x384xf32>
    %cst_23 = arith.constant 5.000000e-01 : f32
    %41 = vector.broadcast %cst_23 : f32 to vector<32x384xf32>
    %42 = arith.mulf %41, %40 : vector<32x384xf32>
    %cst_24 = arith.constant 5.000000e-01 : f32
    %43 = vector.broadcast %cst_24 : f32 to vector<32x384xf32>
    %44 = arith.addf %42, %43 : vector<32x384xf32>
    %c0_25 = arith.constant 0 : index
    %c0_26 = arith.constant 0 : index
    %45 = vector.load %arg8[%c0_25, %c0_26] : memref<3x32xf32, #tpu.memory_space<vmem>>, vector<3x32xf32>
    %c0_27 = arith.constant 0 : index
    %c0_28 = arith.constant 0 : index
    %46 = vector.load %arg9[%c0_27, %c0_28] : memref<3x1xf32, #tpu.memory_space<vmem>>, vector<3x1xf32>
    %cst_29 = arith.constant dense<0.000000e+00> : vector<3x384xf32>
    %47 = tpu.matmul %45, %44, %cst_29 {dimension_numbers = #tpu.dot_dimension_numbers<[1], [0], [0], [1], [0, 0, 1, 1], [], []>} : vector<3x32xf32>, vector<32x384xf32>, vector<3x384xf32> -> vector<3x384xf32>
    %48 = vector.broadcast %46 : vector<3x1xf32> to vector<3x384xf32>
    %49 = arith.addf %47, %48 : vector<3x384xf32>
    %cst_30 = arith.constant 5.000000e-01 : f32
    %50 = vector.broadcast %cst_30 : f32 to vector<3x384xf32>
    %51 = arith.mulf %50, %49 : vector<3x384xf32>
    %52 = math.tanh %51 : vector<3x384xf32>
    %cst_31 = arith.constant 5.000000e-01 : f32
    %53 = vector.broadcast %cst_31 : f32 to vector<3x384xf32>
    %54 = arith.mulf %53, %52 : vector<3x384xf32>
    %cst_32 = arith.constant 5.000000e-01 : f32
    %55 = vector.broadcast %cst_32 : f32 to vector<3x384xf32>
    %56 = arith.addf %54, %55 : vector<3x384xf32>
    %57 = arith.addf %7, %56 : vector<3x384xf32>
    %c0_33 = arith.constant 0 : index
    %c0_34 = arith.constant 0 : index
    %58 = vector.load %arg10[%c0_33, %c0_34] : memref<32x3xf32, #tpu.memory_space<vmem>>, vector<32x3xf32>
    %c0_35 = arith.constant 0 : index
    %c0_36 = arith.constant 0 : index
    %59 = vector.load %arg11[%c0_35, %c0_36] : memref<32x1xf32, #tpu.memory_space<vmem>>, vector<32x1xf32>
    %cst_37 = arith.constant dense<0.000000e+00> : vector<32x384xf32>
    %60 = tpu.matmul %58, %57, %cst_37 {dimension_numbers = #tpu.dot_dimension_numbers<[1], [0], [0], [1], [0, 0, 1, 1], [], []>} : vector<32x3xf32>, vector<3x384xf32>, vector<32x384xf32> -> vector<32x384xf32>
    %61 = vector.broadcast %59 : vector<32x1xf32> to vector<32x384xf32>
    %62 = arith.addf %60, %61 : vector<32x384xf32>
    %cst_38 = arith.constant 5.000000e-01 : f32
    %63 = vector.broadcast %cst_38 : f32 to vector<32x384xf32>
    %64 = arith.mulf %63, %62 : vector<32x384xf32>
    %65 = math.tanh %64 : vector<32x384xf32>
    %cst_39 = arith.constant 5.000000e-01 : f32
    %66 = vector.broadcast %cst_39 : f32 to vector<32x384xf32>
    %67 = arith.mulf %66, %65 : vector<32x384xf32>
    %cst_40 = arith.constant 5.000000e-01 : f32
    %68 = vector.broadcast %cst_40 : f32 to vector<32x384xf32>
    %69 = arith.addf %67, %68 : vector<32x384xf32>
    %c0_41 = arith.constant 0 : index
    %c0_42 = arith.constant 0 : index
    %70 = vector.load %arg12[%c0_41, %c0_42] : memref<32x32xf32, #tpu.memory_space<vmem>>, vector<32x32xf32>
    %c0_43 = arith.constant 0 : index
    %c0_44 = arith.constant 0 : index
    %71 = vector.load %arg13[%c0_43, %c0_44] : memref<32x1xf32, #tpu.memory_space<vmem>>, vector<32x1xf32>
    %cst_45 = arith.constant dense<0.000000e+00> : vector<32x384xf32>
    %72 = tpu.matmul %70, %69, %cst_45 {dimension_numbers = #tpu.dot_dimension_numbers<[1], [0], [0], [1], [0, 0, 1, 1], [], []>} : vector<32x32xf32>, vector<32x384xf32>, vector<32x384xf32> -> vector<32x384xf32>
    %73 = vector.broadcast %71 : vector<32x1xf32> to vector<32x384xf32>
    %74 = arith.addf %72, %73 : vector<32x384xf32>
    %cst_46 = arith.constant 5.000000e-01 : f32
    %75 = vector.broadcast %cst_46 : f32 to vector<32x384xf32>
    %76 = arith.mulf %75, %74 : vector<32x384xf32>
    %77 = math.tanh %76 : vector<32x384xf32>
    %cst_47 = arith.constant 5.000000e-01 : f32
    %78 = vector.broadcast %cst_47 : f32 to vector<32x384xf32>
    %79 = arith.mulf %78, %77 : vector<32x384xf32>
    %cst_48 = arith.constant 5.000000e-01 : f32
    %80 = vector.broadcast %cst_48 : f32 to vector<32x384xf32>
    %81 = arith.addf %79, %80 : vector<32x384xf32>
    %c0_49 = arith.constant 0 : index
    %c0_50 = arith.constant 0 : index
    %82 = vector.load %arg14[%c0_49, %c0_50] : memref<32x32xf32, #tpu.memory_space<vmem>>, vector<32x32xf32>
    %c0_51 = arith.constant 0 : index
    %c0_52 = arith.constant 0 : index
    %83 = vector.load %arg15[%c0_51, %c0_52] : memref<32x1xf32, #tpu.memory_space<vmem>>, vector<32x1xf32>
    %cst_53 = arith.constant dense<0.000000e+00> : vector<32x384xf32>
    %84 = tpu.matmul %82, %81, %cst_53 {dimension_numbers = #tpu.dot_dimension_numbers<[1], [0], [0], [1], [0, 0, 1, 1], [], []>} : vector<32x32xf32>, vector<32x384xf32>, vector<32x384xf32> -> vector<32x384xf32>
    %85 = vector.broadcast %83 : vector<32x1xf32> to vector<32x384xf32>
    %86 = arith.addf %84, %85 : vector<32x384xf32>
    %cst_54 = arith.constant 5.000000e-01 : f32
    %87 = vector.broadcast %cst_54 : f32 to vector<32x384xf32>
    %88 = arith.mulf %87, %86 : vector<32x384xf32>
    %89 = math.tanh %88 : vector<32x384xf32>
    %cst_55 = arith.constant 5.000000e-01 : f32
    %90 = vector.broadcast %cst_55 : f32 to vector<32x384xf32>
    %91 = arith.mulf %90, %89 : vector<32x384xf32>
    %cst_56 = arith.constant 5.000000e-01 : f32
    %92 = vector.broadcast %cst_56 : f32 to vector<32x384xf32>
    %93 = arith.addf %91, %92 : vector<32x384xf32>
    %c0_57 = arith.constant 0 : index
    %c0_58 = arith.constant 0 : index
    %94 = vector.load %arg16[%c0_57, %c0_58] : memref<5x32xf32, #tpu.memory_space<vmem>>, vector<5x32xf32>
    %c0_59 = arith.constant 0 : index
    %c0_60 = arith.constant 0 : index
    %95 = vector.load %arg17[%c0_59, %c0_60] : memref<5x1xf32, #tpu.memory_space<vmem>>, vector<5x1xf32>
    %cst_61 = arith.constant dense<0.000000e+00> : vector<5x384xf32>
    %96 = tpu.matmul %94, %93, %cst_61 {dimension_numbers = #tpu.dot_dimension_numbers<[1], [0], [0], [1], [0, 0, 1, 1], [], []>} : vector<5x32xf32>, vector<32x384xf32>, vector<5x384xf32> -> vector<5x384xf32>
    %97 = vector.broadcast %95 : vector<5x1xf32> to vector<5x384xf32>
    %98 = arith.addf %96, %97 : vector<5x384xf32>
    %cst_62 = arith.constant 5.000000e-01 : f32
    %99 = vector.broadcast %cst_62 : f32 to vector<5x384xf32>
    %100 = arith.mulf %99, %98 : vector<5x384xf32>
    %101 = math.tanh %100 : vector<5x384xf32>
    %cst_63 = arith.constant 5.000000e-01 : f32
    %102 = vector.broadcast %cst_63 : f32 to vector<5x384xf32>
    %103 = arith.mulf %102, %101 : vector<5x384xf32>
    %cst_64 = arith.constant 5.000000e-01 : f32
    %104 = vector.broadcast %cst_64 : f32 to vector<5x384xf32>
    %105 = arith.addf %103, %104 : vector<5x384xf32>
    %106 = arith.addf %8, %105 : vector<5x384xf32>
    %c0_65 = arith.constant 0 : index
    %c0_66 = arith.constant 0 : index
    %107 = vector.load %arg18[%c0_65, %c0_66] : memref<32x5xf32, #tpu.memory_space<vmem>>, vector<32x5xf32>
    %c0_67 = arith.constant 0 : index
    %c0_68 = arith.constant 0 : index
    %108 = vector.load %arg19[%c0_67, %c0_68] : memref<32x1xf32, #tpu.memory_space<vmem>>, vector<32x1xf32>
    %cst_69 = arith.constant dense<0.000000e+00> : vector<32x384xf32>
    %109 = tpu.matmul %107, %106, %cst_69 {dimension_numbers = #tpu.dot_dimension_numbers<[1], [0], [0], [1], [0, 0, 1, 1], [], []>} : vector<32x5xf32>, vector<5x384xf32>, vector<32x384xf32> -> vector<32x384xf32>
    %110 = vector.broadcast %108 : vector<32x1xf32> to vector<32x384xf32>
    %111 = arith.addf %109, %110 : vector<32x384xf32>
    %cst_70 = arith.constant 5.000000e-01 : f32
    %112 = vector.broadcast %cst_70 : f32 to vector<32x384xf32>
    %113 = arith.mulf %112, %111 : vector<32x384xf32>
    %114 = math.tanh %113 : vector<32x384xf32>
    %cst_71 = arith.constant 5.000000e-01 : f32
    %115 = vector.broadcast %cst_71 : f32 to vector<32x384xf32>
    %116 = arith.mulf %115, %114 : vector<32x384xf32>
    %cst_72 = arith.constant 5.000000e-01 : f32
    %117 = vector.broadcast %cst_72 : f32 to vector<32x384xf32>
    %118 = arith.addf %116, %117 : vector<32x384xf32>
    %c0_73 = arith.constant 0 : index
    %c0_74 = arith.constant 0 : index
    %119 = vector.load %arg20[%c0_73, %c0_74] : memref<32x32xf32, #tpu.memory_space<vmem>>, vector<32x32xf32>
    %c0_75 = arith.constant 0 : index
    %c0_76 = arith.constant 0 : index
    %120 = vector.load %arg21[%c0_75, %c0_76] : memref<32x1xf32, #tpu.memory_space<vmem>>, vector<32x1xf32>
    %cst_77 = arith.constant dense<0.000000e+00> : vector<32x384xf32>
    %121 = tpu.matmul %119, %118, %cst_77 {dimension_numbers = #tpu.dot_dimension_numbers<[1], [0], [0], [1], [0, 0, 1, 1], [], []>} : vector<32x32xf32>, vector<32x384xf32>, vector<32x384xf32> -> vector<32x384xf32>
    %122 = vector.broadcast %120 : vector<32x1xf32> to vector<32x384xf32>
    %123 = arith.addf %121, %122 : vector<32x384xf32>
    %cst_78 = arith.constant 5.000000e-01 : f32
    %124 = vector.broadcast %cst_78 : f32 to vector<32x384xf32>
    %125 = arith.mulf %124, %123 : vector<32x384xf32>
    %126 = math.tanh %125 : vector<32x384xf32>
    %cst_79 = arith.constant 5.000000e-01 : f32
    %127 = vector.broadcast %cst_79 : f32 to vector<32x384xf32>
    %128 = arith.mulf %127, %126 : vector<32x384xf32>
    %cst_80 = arith.constant 5.000000e-01 : f32
    %129 = vector.broadcast %cst_80 : f32 to vector<32x384xf32>
    %130 = arith.addf %128, %129 : vector<32x384xf32>
    %c0_81 = arith.constant 0 : index
    %c0_82 = arith.constant 0 : index
    %131 = vector.load %arg22[%c0_81, %c0_82] : memref<32x32xf32, #tpu.memory_space<vmem>>, vector<32x32xf32>
    %c0_83 = arith.constant 0 : index
    %c0_84 = arith.constant 0 : index
    %132 = vector.load %arg23[%c0_83, %c0_84] : memref<32x1xf32, #tpu.memory_space<vmem>>, vector<32x1xf32>
    %cst_85 = arith.constant dense<0.000000e+00> : vector<32x384xf32>
    %133 = tpu.matmul %131, %130, %cst_85 {dimension_numbers = #tpu.dot_dimension_numbers<[1], [0], [0], [1], [0, 0, 1, 1], [], []>} : vector<32x32xf32>, vector<32x384xf32>, vector<32x384xf32> -> vector<32x384xf32>
    %134 = vector.broadcast %132 : vector<32x1xf32> to vector<32x384xf32>
    %135 = arith.addf %133, %134 : vector<32x384xf32>
    %cst_86 = arith.constant 5.000000e-01 : f32
    %136 = vector.broadcast %cst_86 : f32 to vector<32x384xf32>
    %137 = arith.mulf %136, %135 : vector<32x384xf32>
    %138 = math.tanh %137 : vector<32x384xf32>
    %cst_87 = arith.constant 5.000000e-01 : f32
    %139 = vector.broadcast %cst_87 : f32 to vector<32x384xf32>
    %140 = arith.mulf %139, %138 : vector<32x384xf32>
    %cst_88 = arith.constant 5.000000e-01 : f32
    %141 = vector.broadcast %cst_88 : f32 to vector<32x384xf32>
    %142 = arith.addf %140, %141 : vector<32x384xf32>
    %c0_89 = arith.constant 0 : index
    %c0_90 = arith.constant 0 : index
    %143 = vector.load %arg24[%c0_89, %c0_90] : memref<3x32xf32, #tpu.memory_space<vmem>>, vector<3x32xf32>
    %c0_91 = arith.constant 0 : index
    %c0_92 = arith.constant 0 : index
    %144 = vector.load %arg25[%c0_91, %c0_92] : memref<3x1xf32, #tpu.memory_space<vmem>>, vector<3x1xf32>
    %cst_93 = arith.constant dense<0.000000e+00> : vector<3x384xf32>
    %145 = tpu.matmul %143, %142, %cst_93 {dimension_numbers = #tpu.dot_dimension_numbers<[1], [0], [0], [1], [0, 0, 1, 1], [], []>} : vector<3x32xf32>, vector<32x384xf32>, vector<3x384xf32> -> vector<3x384xf32>
    %146 = vector.broadcast %144 : vector<3x1xf32> to vector<3x384xf32>
    %147 = arith.addf %145, %146 : vector<3x384xf32>
    %cst_94 = arith.constant 5.000000e-01 : f32
    %148 = vector.broadcast %cst_94 : f32 to vector<3x384xf32>
    %149 = arith.mulf %148, %147 : vector<3x384xf32>
    %150 = math.tanh %149 : vector<3x384xf32>
    %cst_95 = arith.constant 5.000000e-01 : f32
    %151 = vector.broadcast %cst_95 : f32 to vector<3x384xf32>
    %152 = arith.mulf %151, %150 : vector<3x384xf32>
    %cst_96 = arith.constant 5.000000e-01 : f32
    %153 = vector.broadcast %cst_96 : f32 to vector<3x384xf32>
    %154 = arith.addf %152, %153 : vector<3x384xf32>
    %155 = arith.addf %57, %154 : vector<3x384xf32>
    %156 = tpu.concatenate %155, %106 in 0 : vector<3x384xf32>, vector<5x384xf32> -> vector<8x384xf32>
    %157 = tpu.transpose %156, [1, 0] : vector<8x384xf32> -> vector<384x8xf32>
    %c0_97 = arith.constant 0 : index
    %c0_98 = arith.constant 0 : index
    %158 = vector.load %arg26[%c0_97, %c0_98] : memref<384x8xf32, #tpu.memory_space<vmem>>, vector<384x8xf32>
    tpu.vector_store %arg26[%c0_97, %c0_98], %157 {strides = array<i32>} : memref<384x8xf32, #tpu.memory_space<vmem>>, vector<384x8xf32>,
    return
  }
  func.func @transform_0(%arg0: i32) -> (i32, i32) {
    %c0_i32 = arith.constant 0 : i32
    %c0_i32_0 = arith.constant 0 : i32
    return %arg0, %c0_i32 : i32, i32
  }
  func.func @transform_1(%arg0: i32) -> (i32, i32) {
    %c0_i32 = arith.constant 0 : i32
    %c0_i32_0 = arith.constant 0 : i32
    %c0_i32_1 = arith.constant 0 : i32
    return %c0_i32, %c0_i32_0 : i32, i32
  }
  func.func @transform_2(%arg0: i32) -> (i32, i32) {
    %c0_i32 = arith.constant 0 : i32
    %c0_i32_0 = arith.constant 0 : i32
    %c0_i32_1 = arith.constant 0 : i32
    return %c0_i32, %c0_i32_0 : i32, i32
  }
  func.func @transform_3(%arg0: i32) -> (i32, i32) {
    %c0_i32 = arith.constant 0 : i32
    %c0_i32_0 = arith.constant 0 : i32
    %c0_i32_1 = arith.constant 0 : i32
    return %c0_i32, %c0_i32_0 : i32, i32
  }
  func.func @transform_4(%arg0: i32) -> (i32, i32) {
    %c0_i32 = arith.constant 0 : i32
    %c0_i32_0 = arith.constant 0 : i32
    %c0_i32_1 = arith.constant 0 : i32
    return %c0_i32, %c0_i32_0 : i32, i32
  }
  func.func @transform_5(%arg0: i32) -> (i32, i32) {
    %c0_i32 = arith.constant 0 : i32
    %c0_i32_0 = arith.constant 0 : i32
    %c0_i32_1 = arith.constant 0 : i32
    return %c0_i32, %c0_i32_0 : i32, i32
  }
  func.func @transform_6(%arg0: i32) -> (i32, i32) {
    %c0_i32 = arith.constant 0 : i32
    %c0_i32_0 = arith.constant 0 : i32
    %c0_i32_1 = arith.constant 0 : i32
    return %c0_i32, %c0_i32_0 : i32, i32
  }
  func.func @transform_7(%arg0: i32) -> (i32, i32) {
    %c0_i32 = arith.constant 0 : i32
    %c0_i32_0 = arith.constant 0 : i32
    %c0_i32_1 = arith.constant 0 : i32
    return %c0_i32, %c0_i32_0 : i32, i32
  }
  func.func @transform_8(%arg0: i32) -> (i32, i32) {
    %c0_i32 = arith.constant 0 : i32
    %c0_i32_0 = arith.constant 0 : i32
    %c0_i32_1 = arith.constant 0 : i32
    return %c0_i32, %c0_i32_0 : i32, i32
  }
  func.func @transform_9(%arg0: i32) -> (i32, i32) {
    %c0_i32 = arith.constant 0 : i32
    %c0_i32_0 = arith.constant 0 : i32
    %c0_i32_1 = arith.constant 0 : i32
    return %c0_i32, %c0_i32_0 : i32, i32
  }
  func.func @transform_10(%arg0: i32) -> (i32, i32) {
    %c0_i32 = arith.constant 0 : i32
    %c0_i32_0 = arith.constant 0 : i32
    %c0_i32_1 = arith.constant 0 : i32
    return %c0_i32, %c0_i32_0 : i32, i32
  }
  func.func @transform_11(%arg0: i32) -> (i32, i32) {
    %c0_i32 = arith.constant 0 : i32
    %c0_i32_0 = arith.constant 0 : i32
    %c0_i32_1 = arith.constant 0 : i32
    return %c0_i32, %c0_i32_0 : i32, i32
  }
  func.func @transform_12(%arg0: i32) -> (i32, i32) {
    %c0_i32 = arith.constant 0 : i32
    %c0_i32_0 = arith.constant 0 : i32
    %c0_i32_1 = arith.constant 0 : i32
    return %c0_i32, %c0_i32_0 : i32, i32
  }
  func.func @transform_13(%arg0: i32) -> (i32, i32) {
    %c0_i32 = arith.constant 0 : i32
    %c0_i32_0 = arith.constant 0 : i32
    %c0_i32_1 = arith.constant 0 : i32
    return %c0_i32, %c0_i32_0 : i32, i32
  }
  func.func @transform_14(%arg0: i32) -> (i32, i32) {
    %c0_i32 = arith.constant 0 : i32
    %c0_i32_0 = arith.constant 0 : i32
    %c0_i32_1 = arith.constant 0 : i32
    return %c0_i32, %c0_i32_0 : i32, i32
  }
  func.func @transform_15(%arg0: i32) -> (i32, i32) {
    %c0_i32 = arith.constant 0 : i32
    %c0_i32_0 = arith.constant 0 : i32
    %c0_i32_1 = arith.constant 0 : i32
    return %c0_i32, %c0_i32_0 : i32, i32
  }
  func.func @transform_16(%arg0: i32) -> (i32, i32) {
    %c0_i32 = arith.constant 0 : i32
    %c0_i32_0 = arith.constant 0 : i32
    %c0_i32_1 = arith.constant 0 : i32
    return %c0_i32, %c0_i32_0 : i32, i32
  }
  func.func @transform_17(%arg0: i32) -> (i32, i32) {
    %c0_i32 = arith.constant 0 : i32
    %c0_i32_0 = arith.constant 0 : i32
    %c0_i32_1 = arith.constant 0 : i32
    return %c0_i32, %c0_i32_0 : i32, i32
  }
  func.func @transform_18(%arg0: i32) -> (i32, i32) {
    %c0_i32 = arith.constant 0 : i32
    %c0_i32_0 = arith.constant 0 : i32
    %c0_i32_1 = arith.constant 0 : i32
    return %c0_i32, %c0_i32_0 : i32, i32
  }
  func.func @transform_19(%arg0: i32) -> (i32, i32) {
    %c0_i32 = arith.constant 0 : i32
    %c0_i32_0 = arith.constant 0 : i32
    %c0_i32_1 = arith.constant 0 : i32
    return %c0_i32, %c0_i32_0 : i32, i32
  }
  func.func @transform_20(%arg0: i32) -> (i32, i32) {
    %c0_i32 = arith.constant 0 : i32
    %c0_i32_0 = arith.constant 0 : i32
    %c0_i32_1 = arith.constant 0 : i32
    return %c0_i32, %c0_i32_0 : i32, i32
  }
  func.func @transform_21(%arg0: i32) -> (i32, i32) {
    %c0_i32 = arith.constant 0 : i32
    %c0_i32_0 = arith.constant 0 : i32
    %c0_i32_1 = arith.constant 0 : i32
    return %c0_i32, %c0_i32_0 : i32, i32
  }
  func.func @transform_22(%arg0: i32) -> (i32, i32) {
    %c0_i32 = arith.constant 0 : i32
    %c0_i32_0 = arith.constant 0 : i32
    %c0_i32_1 = arith.constant 0 : i32
    return %c0_i32, %c0_i32_0 : i32, i32
  }
  func.func @transform_23(%arg0: i32) -> (i32, i32) {
    %c0_i32 = arith.constant 0 : i32
    %c0_i32_0 = arith.constant 0 : i32
    %c0_i32_1 = arith.constant 0 : i32
    return %c0_i32, %c0_i32_0 : i32, i32
  }
  func.func @transform_24(%arg0: i32) -> (i32, i32) {
    %c0_i32 = arith.constant 0 : i32
    %c0_i32_0 = arith.constant 0 : i32
    %c0_i32_1 = arith.constant 0 : i32
    return %c0_i32, %c0_i32_0 : i32, i32
  }
  func.func @transform_25(%arg0: i32) -> (i32, i32) {
    %c0_i32 = arith.constant 0 : i32
    %c0_i32_0 = arith.constant 0 : i32
    return %arg0, %c0_i32 : i32, i32
  }
}

</mosaic_0001>

<llo_original>
// kernel: inn_forward.1
$region0: #{inn_forward.1}
  #allocation0 [shape = 'u32[]', space=smem, size = 0x4, offset = 0x4, fixed_abs, tag = 'smem constant byte address 0x4 - core index']
  #allocation1 [shape = 'u32[144,128]{1,0:T(1,128)}', space=vmem, size = 0x12000, scoped, tag = 'internal scratch']
  %s0 = inlined_call_operand.vmem [shape: f32[600,8], index: 0, kind: input, shape index: {}]
  %s1 = inlined_call_operand.vmem [shape: f32[32,5], index: 1, kind: input, shape index: {}]
  %s2 = inlined_call_operand.vmem [shape: f32[32,1], index: 2, kind: input, shape index: {}]
  %s3 = inlined_call_operand.vmem [shape: f32[32,32], index: 3, kind: input, shape index: {}]
  %s4 = inlined_call_operand.vmem [shape: f32[32,1], index: 4, kind: input, shape index: {}]
  %s5 = inlined_call_operand.vmem [shape: f32[32,32], index: 5, kind: input, shape index: {}]
  %s6 = inlined_call_operand.vmem [shape: f32[32,1], index: 6, kind: input, shape index: {}]
  %s7 = inlined_call_operand.vmem [shape: f32[3,32], index: 7, kind: input, shape index: {}]
  %s8 = inlined_call_operand.vmem [shape: f32[3,1], index: 8, kind: input, shape index: {}]
  %s9 = inlined_call_operand.vmem [shape: f32[32,3], index: 9, kind: input, shape index: {}]
  %s10 = inlined_call_operand.vmem [shape: f32[32,1], index: 10, kind: input, shape index: {}]
  %s11 = inlined_call_operand.vmem [shape: f32[32,32], index: 11, kind: input, shape index: {}]
  %s12 = inlined_call_operand.vmem [shape: f32[32,1], index: 12, kind: input, shape index: {}]
  %s13 = inlined_call_operand.vmem [shape: f32[32,32], index: 13, kind: input, shape index: {}]
  %s14 = inlined_call_operand.vmem [shape: f32[32,1], index: 14, kind: input, shape index: {}]
  %s15 = inlined_call_operand.vmem [shape: f32[5,32], index: 15, kind: input, shape index: {}]
  %s16 = inlined_call_operand.vmem [shape: f32[5,1], index: 16, kind: input, shape index: {}]
  %s17 = inlined_call_operand.vmem [shape: f32[32,5], index: 17, kind: input, shape index: {}]
  %s18 = inlined_call_operand.vmem [shape: f32[32,1], index: 18, kind: input, shape index: {}]
  %s19 = inlined_call_operand.vmem [shape: f32[32,32], index: 19, kind: input, shape index: {}]
  %s20 = inlined_call_operand.vmem [shape: f32[32,1], index: 20, kind: input, shape index: {}]
  %s21 = inlined_call_operand.vmem [shape: f32[32,32], index: 21, kind: input, shape index: {}]
  %s22 = inlined_call_operand.vmem [shape: f32[32,1], index: 22, kind: input, shape index: {}]
  %s23 = inlined_call_operand.vmem [shape: f32[3,32], index: 23, kind: input, shape index: {}]
  %s24 = inlined_call_operand.vmem [shape: f32[3,1], index: 24, kind: input, shape index: {}]
  %s25 = inlined_call_operand.vmem [shape: f32[600,8], index: 25, kind: output, shape index: {}]
  %s26 = sld [smem:[#allocation0]]
  $region181: #{inn_forward.1} parent=0
    _
  %s28 = ssub.s32 1, %s26
  %s29 = scalar_select 0, %s28, %s26
  $region1: #{inn_forward.1} parent=0
    #allocation2 [shape = 'u8[393216]{0}', space=vmem, size = 0x60000, scoped, tag = 'output window, operand 0']
    loop: start=0, step=1, limit=4
    $region2: #{inn_forward.1} parent=1 // loop_pre_header
      _
    $region3: #{inn_forward.1} parent=1 // loop_header
      %s31 = sphi 0, %s35
      %p32 = scmp.ge.s32.totalorder %s31, 4
      %s41 = sphi 0, %s43
      %s44 = sphi 0, %s41
      %s45 = sphi 0, %s44
      %s61 = sphi 0, %s45
      %s65 = sphi 0, %s65
      %s67 = sphi 0, %s65
      %s68 = sphi 0, %s67
      %s82 = sphi 0, %s68
      %s86 = sphi 0, %s86
      %s88 = sphi 0, %s86
      %s89 = sphi 0, %s88
      %s103 = sphi 0, %s89
      %s107 = sphi 0, %s107
      %s109 = sphi 0, %s107
      %s110 = sphi 0, %s109
      %s124 = sphi 0, %s110
      %s128 = sphi 0, %s128
      %s130 = sphi 0, %s128
      %s131 = sphi 0, %s130
      %s145 = sphi 0, %s131
      %s149 = sphi 0, %s149
      %s151 = sphi 0, %s149
      %s152 = sphi 0, %s151
      %s166 = sphi 0, %s152
      %s170 = sphi 0, %s170
      %s172 = sphi 0, %s170
      %s173 = sphi 0, %s172
      %s187 = sphi 0, %s173
      %s191 = sphi 0, %s191
      %s193 = sphi 0, %s191
      %s194 = sphi 0, %s193
      %s208 = sphi 0, %s194
      %s212 = sphi 0, %s212
      %s214 = sphi 0, %s212
      %s215 = sphi 0, %s214
      %s229 = sphi 0, %s215
      %s233 = sphi 0, %s233
      %s235 = sphi 0, %s233
      %s236 = sphi 0, %s235
      %s250 = sphi 0, %s236
      %s254 = sphi 0, %s254
      %s256 = sphi 0, %s254
      %s257 = sphi 0, %s256
      %s271 = sphi 0, %s257
      %s275 = sphi 0, %s275
      %s277 = sphi 0, %s275
      %s278 = sphi 0, %s277
      %s292 = sphi 0, %s278
      %s296 = sphi 0, %s296
      %s298 = sphi 0, %s296
      %s299 = sphi 0, %s298
      %s313 = sphi 0, %s299
      %s317 = sphi 0, %s317
      %s319 = sphi 0, %s317
      %s320 = sphi 0, %s319
      %s334 = sphi 0, %s320
      %s338 = sphi 0, %s338
      %s340 = sphi 0, %s338
      %s341 = sphi 0, %s340
      %s355 = sphi 0, %s341
      %s359 = sphi 0, %s359
      %s361 = sphi 0, %s359
      %s362 = sphi 0, %s361
      %s376 = sphi 0, %s362
      %s380 = sphi 0, %s380
      %s382 = sphi 0, %s380
      %s383 = sphi 0, %s382
      %s397 = sphi 0, %s383
      %s401 = sphi 0, %s401
      %s403 = sphi 0, %s401
      %s404 = sphi 0, %s403
      %s418 = sphi 0, %s404
      %s422 = sphi 0, %s422
      %s424 = sphi 0, %s422
      %s425 = sphi 0, %s424
      %s439 = sphi 0, %s425
      %s443 = sphi 0, %s443
      %s445 = sphi 0, %s443
      %s446 = sphi 0, %s445
      %s460 = sphi 0, %s446
      %s464 = sphi 0, %s464
      %s466 = sphi 0, %s464
      %s467 = sphi 0, %s466
      %s481 = sphi 0, %s467
      %s485 = sphi 0, %s485
      %s487 = sphi 0, %s485
      %s488 = sphi 0, %s487
      %s502 = sphi 0, %s488
      %s506 = sphi 0, %s506
      %s508 = sphi 0, %s506
      %s509 = sphi 0, %s508
      %s523 = sphi 0, %s509
      %s527 = sphi 0, %s527
      %s529 = sphi 0, %s527
      %s530 = sphi 0, %s529
      %s544 = sphi 0, %s530
      %s548 = sphi 0, %s548
      %s550 = sphi 0, %s548
      %s551 = sphi 0, %s550
      %s565 = sphi 0, %s551
      %s571 = sphi 0, %s573
      %s574 = sphi 0, %s571
      %s575 = sphi 0, %s574
      %s591 = sphi 0, %s575
    $region4: #{inn_forward.1} parent=1 // loop_header_branch
      %34 = sbr.rel (%p32) target = $region8
    $region5: #{inn_forward.1} parent=1 // loop_body
      %s36 = ssub.s32 %s31, 1
      %s37 = ssub.s32 %s31, 2
      %s38 = sadd.s32 %s31, 1
      %s39 = ssub.s32 %s31, %s38
      %p40 = scmp.eq.s32.totalorder %s39, 0
      %s42 = sadd.s32 %s41, 1
      %s43 = scalar_select %p40, %s41, %s42
      %p46 = pneg %p40
      %p47 = scmp.eq.s32.totalorder %s31, 1
      %p48 = por %p46, %p47
      %p49 = scmp.ne.s32.totalorder %s41, %s44
      %p50 = scmp.eq.s32.totalorder %s31, 0
      %p51 = por %p49, %p50
      %p52 = scmp.ne.s32.totalorder %s41, %s44
      %p53 = scmp.eq.s32.totalorder %s36, 1
      %p54 = por %p52, %p53
      %p55 = scmp.ne.s32.totalorder %s44, %s45
      %p56 = scmp.eq.s32.totalorder %s36, 0
      %p57 = por %p55, %p56
      %p58 = scmp.ne.s32.totalorder %s44, %s45
      %p59 = scmp.eq.s32.totalorder %s37, 1
      %p60 = por %p58, %p59
      %p62 = scmp.ne.s32.totalorder %s45, %s61
      %p63 = scmp.eq.s32.totalorder %s37, 0
      %p64 = por %p62, %p63
      %s66 = sadd.s32 %s65, 1
      %p69 = scmp.eq.s32.totalorder %s31, 1
      %p70 = scmp.ne.s32.totalorder %s65, %s67
      %p71 = scmp.eq.s32.totalorder %s31, 0
      %p72 = por %p70, %p71
      %p73 = scmp.ne.s32.totalorder %s65, %s67
      %p74 = scmp.eq.s32.totalorder %s36, 1
      %p75 = por %p73, %p74
      %p76 = scmp.ne.s32.totalorder %s67, %s68
      %p77 = scmp.eq.s32.totalorder %s36, 0
      %p78 = por %p76, %p77
      %p79 = scmp.ne.s32.totalorder %s67, %s68
      %p80 = scmp.eq.s32.totalorder %s37, 1
      %p81 = por %p79, %p80
      %p83 = scmp.ne.s32.totalorder %s68, %s82
      %p84 = scmp.eq.s32.totalorder %s37, 0
      %p85 = por %p83, %p84
      %s87 = sadd.s32 %s86, 1
      %p90 = scmp.eq.s32.totalorder %s31, 1
      %p91 = scmp.ne.s32.totalorder %s86, %s88
      %p92 = scmp.eq.s32.totalorder %s31, 0
      %p93 = por %p91, %p92
      %p94 = scmp.ne.s32.totalorder %s86, %s88
      %p95 = scmp.eq.s32.totalorder %s36, 1
      %p96 = por %p94, %p95
      %p97 = scmp.ne.s32.totalorder %s88, %s89
      %p98 = scmp.eq.s32.totalorder %s36, 0
      %p99 = por %p97, %p98
      %p100 = scmp.ne.s32.totalorder %s88, %s89
      %p101 = scmp.eq.s32.totalorder %s37, 1
      %p102 = por %p100, %p101
      %p104 = scmp.ne.s32.totalorder %s89, %s103
      %p105 = scmp.eq.s32.totalorder %s37, 0
      %p106 = por %p104, %p105
      %s108 = sadd.s32 %s107, 1
      %p111 = scmp.eq.s32.totalorder %s31, 1
      %p112 = scmp.ne.s32.totalorder %s107, %s109
      %p113 = scmp.eq.s32.totalorder %s31, 0
      %p114 = por %p112, %p113
      %p115 = scmp.ne.s32.totalorder %s107, %s109
      %p116 = scmp.eq.s32.totalorder %s36, 1
      %p117 = por %p115, %p116
      %p118 = scmp.ne.s32.totalorder %s109, %s110
      %p119 = scmp.eq.s32.totalorder %s36, 0
      %p120 = por %p118, %p119
      %p121 = scmp.ne.s32.totalorder %s109, %s110
      %p122 = scmp.eq.s32.totalorder %s37, 1
      %p123 = por %p121, %p122
      %p125 = scmp.ne.s32.totalorder %s110, %s124
      %p126 = scmp.eq.s32.totalorder %s37, 0
      %p127 = por %p125, %p126
      %s129 = sadd.s32 %s128, 1
      %p132 = scmp.eq.s32.totalorder %s31, 1
      %p133 = scmp.ne.s32.totalorder %s128, %s130
      %p134 = scmp.eq.s32.totalorder %s31, 0
      %p135 = por %p133, %p134
      %p136 = scmp.ne.s32.totalorder %s128, %s130
      %p137 = scmp.eq.s32.totalorder %s36, 1
      %p138 = por %p136, %p137
      %p139 = scmp.ne.s32.totalorder %s130, %s131
      %p140 = scmp.eq.s32.totalorder %s36, 0
      %p141 = por %p139, %p140
      %p142 = scmp.ne.s32.totalorder %s130, %s131
      %p143 = scmp.eq.s32.totalorder %s37, 1
      %p144 = por %p142, %p143
      %p146 = scmp.ne.s32.totalorder %s131, %s145
      %p147 = scmp.eq.s32.totalorder %s37, 0
      %p148 = por %p146, %p147
      %s150 = sadd.s32 %s149, 1
      %p153 = scmp.eq.s32.totalorder %s31, 1
      %p154 = scmp.ne.s32.totalorder %s149, %s151
      %p155 = scmp.eq.s32.totalorder %s31, 0
      %p156 = por %p154, %p155
      %p157 = scmp.ne.s32.totalorder %s149, %s151
      %p158 = scmp.eq.s32.totalorder %s36, 1
      %p159 = por %p157, %p158
      %p160 = scmp.ne.s32.totalorder %s151, %s152
      %p161 = scmp.eq.s32.totalorder %s36, 0
      %p162 = por %p160, %p161
      %p163 = scmp.ne.s32.totalorder %s151, %s152
      %p164 = scmp.eq.s32.totalorder %s37, 1
      %p165 = por %p163, %p164
      %p167 = scmp.ne.s32.totalorder %s152, %s166
      %p168 = scmp.eq.s32.totalorder %s37, 0
      %p169 = por %p167, %p168
      %s171 = sadd.s32 %s170, 1
      %p174 = scmp.eq.s32.totalorder %s31, 1
      %p175 = scmp.ne.s32.totalorder %s170, %s172
      %p176 = scmp.eq.s32.totalorder %s31, 0
      %p177 = por %p175, %p176
      %p178 = scmp.ne.s32.totalorder %s170, %s172
      %p179 = scmp.eq.s32.totalorder %s36, 1
      %p180 = por %p178, %p179
      %p181 = scmp.ne.s32.totalorder %s172, %s173
      %p182 = scmp.eq.s32.totalorder %s36, 0
      %p183 = por %p181, %p182
      %p184 = scmp.ne.s32.totalorder %s172, %s173
      %p185 = scmp.eq.s32.totalorder %s37, 1
      %p186 = por %p184, %p185
      %p188 = scmp.ne.s32.totalorder %s173, %s187
      %p189 = scmp.eq.s32.totalorder %s37, 0
      %p190 = por %p188, %p189
      %s192 = sadd.s32 %s191, 1
      %p195 = scmp.eq.s32.totalorder %s31, 1
      %p196 = scmp.ne.s32.totalorder %s191, %s193
      %p197 = scmp.eq.s32.totalorder %s31, 0
      %p198 = por %p196, %p197
      %p199 = scmp.ne.s32.totalorder %s191, %s193
      %p200 = scmp.eq.s32.totalorder %s36, 1
      %p201 = por %p199, %p200
      %p202 = scmp.ne.s32.totalorder %s193, %s194
      %p203 = scmp.eq.s32.totalorder %s36, 0
      %p204 = por %p202, %p203
      %p205 = scmp.ne.s32.totalorder %s193, %s194
      %p206 = scmp.eq.s32.totalorder %s37, 1
      %p207 = por %p205, %p206
      %p209 = scmp.ne.s32.totalorder %s194, %s208
      %p210 = scmp.eq.s32.totalorder %s37, 0
      %p211 = por %p209, %p210
      %s213 = sadd.s32 %s212, 1
      %p216 = scmp.eq.s32.totalorder %s31, 1
      %p217 = scmp.ne.s32.totalorder %s212, %s214
      %p218 = scmp.eq.s32.totalorder %s31, 0
      %p219 = por %p217, %p218
      %p220 = scmp.ne.s32.totalorder %s212, %s214
      %p221 = scmp.eq.s32.totalorder %s36, 1
      %p222 = por %p220, %p221
      %p223 = scmp.ne.s32.totalorder %s214, %s215
      %p224 = scmp.eq.s32.totalorder %s36, 0
      %p225 = por %p223, %p224
      %p226 = scmp.ne.s32.totalorder %s214, %s215
      %p227 = scmp.eq.s32.totalorder %s37, 1
      %p228 = por %p226, %p227
      %p230 = scmp.ne.s32.totalorder %s215, %s229
      %p231 = scmp.eq.s32.totalorder %s37, 0
      %p232 = por %p230, %p231
      %s234 = sadd.s32 %s233, 1
      %p237 = scmp.eq.s32.totalorder %s31, 1
      %p238 = scmp.ne.s32.totalorder %s233, %s235
      %p239 = scmp.eq.s32.totalorder %s31, 0
      %p240 = por %p238, %p239
      %p241 = scmp.ne.s32.totalorder %s233, %s235
      %p242 = scmp.eq.s32.totalorder %s36, 1
      %p243 = por %p241, %p242
      %p244 = scmp.ne.s32.totalorder %s235, %s236
      %p245 = scmp.eq.s32.totalorder %s36, 0
      %p246 = por %p244, %p245
      %p247 = scmp.ne.s32.totalorder %s235, %s236
      %p248 = scmp.eq.s32.totalorder %s37, 1
      %p249 = por %p247, %p248
      %p251 = scmp.ne.s32.totalorder %s236, %s250
      %p252 = scmp.eq.s32.totalorder %s37, 0
      %p253 = por %p251, %p252
      %s255 = sadd.s32 %s254, 1
      %p258 = scmp.eq.s32.totalorder %s31, 1
      %p259 = scmp.ne.s32.totalorder %s254, %s256
      %p260 = scmp.eq.s32.totalorder %s31, 0
      %p261 = por %p259, %p260
      %p262 = scmp.ne.s32.totalorder %s254, %s256
      %p263 = scmp.eq.s32.totalorder %s36, 1
      %p264 = por %p262, %p263
      %p265 = scmp.ne.s32.totalorder %s256, %s257
      %p266 = scmp.eq.s32.totalorder %s36, 0
      %p267 = por %p265, %p266
      %p268 = scmp.ne.s32.totalorder %s256, %s257
      %p269 = scmp.eq.s32.totalorder %s37, 1
      %p270 = por %p268, %p269
      %p272 = scmp.ne.s32.totalorder %s257, %s271
      %p273 = scmp.eq.s32.totalorder %s37, 0
      %p274 = por %p272, %p273
      %s276 = sadd.s32 %s275, 1
      %p279 = scmp.eq.s32.totalorder %s31, 1
      %p280 = scmp.ne.s32.totalorder %s275, %s277
      %p281 = scmp.eq.s32.totalorder %s31, 0
      %p282 = por %p280, %p281
      %p283 = scmp.ne.s32.totalorder %s275, %s277
      %p284 = scmp.eq.s32.totalorder %s36, 1
      %p285 = por %p283, %p284
      %p286 = scmp.ne.s32.totalorder %s277, %s278
      %p287 = scmp.eq.s32.totalorder %s36, 0
      %p288 = por %p286, %p287
      %p289 = scmp.ne.s32.totalorder %s277, %s278
      %p290 = scmp.eq.s32.totalorder %s37, 1
      %p291 = por %p289, %p290
      %p293 = scmp.ne.s32.totalorder %s278, %s292
      %p294 = scmp.eq.s32.totalorder %s37, 0
      %p295 = por %p293, %p294
      %s297 = sadd.s32 %s296, 1
      %p300 = scmp.eq.s32.totalorder %s31, 1
      %p301 = scmp.ne.s32.totalorder %s296, %s298
      %p302 = scmp.eq.s32.totalorder %s31, 0
      %p303 = por %p301, %p302
      %p304 = scmp.ne.s32.totalorder %s296, %s298
      %p305 = scmp.eq.s32.totalorder %s36, 1
      %p306 = por %p304, %p305
      %p307 = scmp.ne.s32.totalorder %s298, %s299
      %p308 = scmp.eq.s32.totalorder %s36, 0
      %p309 = por %p307, %p308
      %p310 = scmp.ne.s32.totalorder %s298, %s299
      %p311 = scmp.eq.s32.totalorder %s37, 1
      %p312 = por %p310, %p311
      %p314 = scmp.ne.s32.totalorder %s299, %s313
      %p315 = scmp.eq.s32.totalorder %s37, 0
      %p316 = por %p314, %p315
      %s318 = sadd.s32 %s317, 1
      %p321 = scmp.eq.s32.totalorder %s31, 1
      %p322 = scmp.ne.s32.totalorder %s317, %s319
      %p323 = scmp.eq.s32.totalorder %s31, 0
      %p324 = por %p322, %p323
      %p325 = scmp.ne.s32.totalorder %s317, %s319
      %p326 = scmp.eq.s32.totalorder %s36, 1
      %p327 = por %p325, %p326
      %p328 = scmp.ne.s32.totalorder %s319, %s320
      %p329 = scmp.eq.s32.totalorder %s36, 0
      %p330 = por %p328, %p329
      %p331 = scmp.ne.s32.totalorder %s319, %s320
      %p332 = scmp.eq.s32.totalorder %s37, 1
      %p333 = por %p331, %p332
      %p335 = scmp.ne.s32.totalorder %s320, %s334
      %p336 = scmp.eq.s32.totalorder %s37, 0
      %p337 = por %p335, %p336
      %s339 = sadd.s32 %s338, 1
      %p342 = scmp.eq.s32.totalorder %s31, 1
      %p343 = scmp.ne.s32.totalorder %s338, %s340
      %p344 = scmp.eq.s32.totalorder %s31, 0
      %p345 = por %p343, %p344
      %p346 = scmp.ne.s32.totalorder %s338, %s340
      %p347 = scmp.eq.s32.totalorder %s36, 1
      %p348 = por %p346, %p347
      %p349 = scmp.ne.s32.totalorder %s340, %s341
      %p350 = scmp.eq.s32.totalorder %s36, 0
      %p351 = por %p349, %p350
      %p352 = scmp.ne.s32.totalorder %s340, %s341
      %p353 = scmp.eq.s32.totalorder %s37, 1
      %p354 = por %p352, %p353
      %p356 = scmp.ne.s32.totalorder %s341, %s355
      %p357 = scmp.eq.s32.totalorder %s37, 0
      %p358 = por %p356, %p357
      %s360 = sadd.s32 %s359, 1
      %p363 = scmp.eq.s32.totalorder %s31, 1
      %p364 = scmp.ne.s32.totalorder %s359, %s361
      %p365 = scmp.eq.s32.totalorder %s31, 0
      %p366 = por %p364, %p365
      %p367 = scmp.ne.s32.totalorder %s359, %s361
      %p368 = scmp.eq.s32.totalorder %s36, 1
      %p369 = por %p367, %p368
      %p370 = scmp.ne.s32.totalorder %s361, %s362
      %p371 = scmp.eq.s32.totalorder %s36, 0
      %p372 = por %p370, %p371
      %p373 = scmp.ne.s32.totalorder %s361, %s362
      %p374 = scmp.eq.s32.totalorder %s37, 1
      %p375 = por %p373, %p374
      %p377 = scmp.ne.s32.totalorder %s362, %s376
      %p378 = scmp.eq.s32.totalorder %s37, 0
      %p379 = por %p377, %p378
      %s381 = sadd.s32 %s380, 1
      %p384 = scmp.eq.s32.totalorder %s31, 1
      %p385 = scmp.ne.s32.totalorder %s380, %s382
      %p386 = scmp.eq.s32.totalorder %s31, 0
      %p387 = por %p385, %p386
      %p388 = scmp.ne.s32.totalorder %s380, %s382
      %p389 = scmp.eq.s32.totalorder %s36, 1
      %p390 = por %p388, %p389
      %p391 = scmp.ne.s32.totalorder %s382, %s383
      %p392 = scmp.eq.s32.totalorder %s36, 0
      %p393 = por %p391, %p392
      %p394 = scmp.ne.s32.totalorder %s382, %s383
      %p395 = scmp.eq.s32.totalorder %s37, 1
      %p396 = por %p394, %p395
      %p398 = scmp.ne.s32.totalorder %s383, %s397
      %p399 = scmp.eq.s32.totalorder %s37, 0
      %p400 = por %p398, %p399
      %s402 = sadd.s32 %s401, 1
      %p405 = scmp.eq.s32.totalorder %s31, 1
      %p406 = scmp.ne.s32.totalorder %s401, %s403
      %p407 = scmp.eq.s32.totalorder %s31, 0
      %p408 = por %p406, %p407
      %p409 = scmp.ne.s32.totalorder %s401, %s403
      %p410 = scmp.eq.s32.totalorder %s36, 1
      %p411 = por %p409, %p410
      %p412 = scmp.ne.s32.totalorder %s403, %s404
      %p413 = scmp.eq.s32.totalorder %s36, 0
      %p414 = por %p412, %p413
      %p415 = scmp.ne.s32.totalorder %s403, %s404
      %p416 = scmp.eq.s32.totalorder %s37, 1
      %p417 = por %p415, %p416
      %p419 = scmp.ne.s32.totalorder %s404, %s418
      %p420 = scmp.eq.s32.totalorder %s37, 0
      %p421 = por %p419, %p420
      %s423 = sadd.s32 %s422, 1
      %p426 = scmp.eq.s32.totalorder %s31, 1
      %p427 = scmp.ne.s32.totalorder %s422, %s424
      %p428 = scmp.eq.s32.totalorder %s31, 0
      %p429 = por %p427, %p428
      %p430 = scmp.ne.s32.totalorder %s422, %s424
      %p431 = scmp.eq.s32.totalorder %s36, 1
      %p432 = por %p430, %p431
      %p433 = scmp.ne.s32.totalorder %s424, %s425
      %p434 = scmp.eq.s32.totalorder %s36, 0
      %p435 = por %p433, %p434
      %p436 = scmp.ne.s32.totalorder %s424, %s425
      %p437 = scmp.eq.s32.totalorder %s37, 1
      %p438 = por %p436, %p437
      %p440 = scmp.ne.s32.totalorder %s425, %s439
      %p441 = scmp.eq.s32.totalorder %s37, 0
      %p442 = por %p440, %p441
      %s444 = sadd.s32 %s443, 1
      %p447 = scmp.eq.s32.totalorder %s31, 1
      %p448 = scmp.ne.s32.totalorder %s443, %s445
      %p449 = scmp.eq.s32.totalorder %s31, 0
      %p450 = por %p448, %p449
      %p451 = scmp.ne.s32.totalorder %s443, %s445
      %p452 = scmp.eq.s32.totalorder %s36, 1
      %p453 = por %p451, %p452
      %p454 = scmp.ne.s32.totalorder %s445, %s446
      %p455 = scmp.eq.s32.totalorder %s36, 0
      %p456 = por %p454, %p455
      %p457 = scmp.ne.s32.totalorder %s445, %s446
      %p458 = scmp.eq.s32.totalorder %s37, 1
      %p459 = por %p457, %p458
      %p461 = scmp.ne.s32.totalorder %s446, %s460
      %p462 = scmp.eq.s32.totalorder %s37, 0
      %p463 = por %p461, %p462
      %s465 = sadd.s32 %s464, 1
      %p468 = scmp.eq.s32.totalorder %s31, 1
      %p469 = scmp.ne.s32.totalorder %s464, %s466
      %p470 = scmp.eq.s32.totalorder %s31, 0
      %p471 = por %p469, %p470
      %p472 = scmp.ne.s32.totalorder %s464, %s466
      %p473 = scmp.eq.s32.totalorder %s36, 1
      %p474 = por %p472, %p473
      %p475 = scmp.ne.s32.totalorder %s466, %s467
      %p476 = scmp.eq.s32.totalorder %s36, 0
      %p477 = por %p475, %p476
      %p478 = scmp.ne.s32.totalorder %s466, %s467
      %p479 = scmp.eq.s32.totalorder %s37, 1
      %p480 = por %p478, %p479
      %p482 = scmp.ne.s32.totalorder %s467, %s481
      %p483 = scmp.eq.s32.totalorder %s37, 0
      %p484 = por %p482, %p483
      %s486 = sadd.s32 %s485, 1
      %p489 = scmp.eq.s32.totalorder %s31, 1
      %p490 = scmp.ne.s32.totalorder %s485, %s487
      %p491 = scmp.eq.s32.totalorder %s31, 0
      %p492 = por %p490, %p491
      %p493 = scmp.ne.s32.totalorder %s485, %s487
      %p494 = scmp.eq.s32.totalorder %s36, 1
      %p495 = por %p493, %p494
      %p496 = scmp.ne.s32.totalorder %s487, %s488
      %p497 = scmp.eq.s32.totalorder %s36, 0
      %p498 = por %p496, %p497
      %p499 = scmp.ne.s32.totalorder %s487, %s488
      %p500 = scmp.eq.s32.totalorder %s37, 1
      %p501 = por %p499, %p500
      %p503 = scmp.ne.s32.totalorder %s488, %s502
      %p504 = scmp.eq.s32.totalorder %s37, 0
      %p505 = por %p503, %p504
      %s507 = sadd.s32 %s506, 1
      %p510 = scmp.eq.s32.totalorder %s31, 1
      %p511 = scmp.ne.s32.totalorder %s506, %s508
      %p512 = scmp.eq.s32.totalorder %s31, 0
      %p513 = por %p511, %p512
      %p514 = scmp.ne.s32.totalorder %s506, %s508
      %p515 = scmp.eq.s32.totalorder %s36, 1
      %p516 = por %p514, %p515
      %p517 = scmp.ne.s32.totalorder %s508, %s509
      %p518 = scmp.eq.s32.totalorder %s36, 0
      %p519 = por %p517, %p518
      %p520 = scmp.ne.s32.totalorder %s508, %s509
      %p521 = scmp.eq.s32.totalorder %s37, 1
      %p522 = por %p520, %p521
      %p524 = scmp.ne.s32.totalorder %s509, %s523
      %p525 = scmp.eq.s32.totalorder %s37, 0
      %p526 = por %p524, %p525
      %s528 = sadd.s32 %s527, 1
      %p531 = scmp.eq.s32.totalorder %s31, 1
      %p532 = scmp.ne.s32.totalorder %s527, %s529
      %p533 = scmp.eq.s32.totalorder %s31, 0
      %p534 = por %p532, %p533
      %p535 = scmp.ne.s32.totalorder %s527, %s529
      %p536 = scmp.eq.s32.totalorder %s36, 1
      %p537 = por %p535, %p536
      %p538 = scmp.ne.s32.totalorder %s529, %s530
      %p539 = scmp.eq.s32.totalorder %s36, 0
      %p540 = por %p538, %p539
      %p541 = scmp.ne.s32.totalorder %s529, %s530
      %p542 = scmp.eq.s32.totalorder %s37, 1
      %p543 = por %p541, %p542
      %p545 = scmp.ne.s32.totalorder %s530, %s544
      %p546 = scmp.eq.s32.totalorder %s37, 0
      %p547 = por %p545, %p546
      %s549 = sadd.s32 %s548, 1
      %p552 = scmp.eq.s32.totalorder %s31, 1
      %p553 = scmp.ne.s32.totalorder %s548, %s550
      %p554 = scmp.eq.s32.totalorder %s31, 0
      %p555 = por %p553, %p554
      %p556 = scmp.ne.s32.totalorder %s548, %s550
      %p557 = scmp.eq.s32.totalorder %s36, 1
      %p558 = por %p556, %p557
      %p559 = scmp.ne.s32.totalorder %s550, %s551
      %p560 = scmp.eq.s32.totalorder %s36, 0
      %p561 = por %p559, %p560
      %p562 = scmp.ne.s32.totalorder %s550, %s551
      %p563 = scmp.eq.s32.totalorder %s37, 1
      %p564 = por %p562, %p563
      %p566 = scmp.ne.s32.totalorder %s551, %s565
      %p567 = scmp.eq.s32.totalorder %s37, 0
      %p568 = por %p566, %p567
      %s569 = ssub.s32 %s31, %s38
      %p570 = scmp.eq.s32.totalorder %s569, 0
      %s572 = sadd.s32 %s571, 1
      %s573 = scalar_select %p570, %s571, %s572
      %p576 = pneg %p570
      %p577 = scmp.eq.s32.totalorder %s31, 1
      %p578 = por %p576, %p577
      %p579 = scmp.ne.s32.totalorder %s571, %s574
      %p580 = scmp.eq.s32.totalorder %s31, 0
      %p581 = por %p579, %p580
      %p582 = scmp.ne.s32.totalorder %s571, %s574
      %p583 = scmp.eq.s32.totalorder %s36, 1
      %p584 = por %p582, %p583
      %p585 = scmp.ne.s32.totalorder %s574, %s575
      %p586 = scmp.eq.s32.totalorder %s36, 0
      %p587 = por %p585, %p586
      %p588 = scmp.ne.s32.totalorder %s574, %s575
      %p589 = scmp.eq.s32.totalorder %s37, 1
      %p590 = por %p588, %p589
      %p592 = scmp.ne.s32.totalorder %s575, %s591
      %p593 = scmp.eq.s32.totalorder %s37, 0
      %p594 = por %p592, %p593
      %p595 = scmp.le.s32.totalorder 1, %s31
      %p596 = scmp.lt.s32.totalorder %s31, 3
      %p597 = pnand %p595, %p596
      %p598 = pneg %p597
      // Predicated region
      $region9: #{inn_forward.1} parent=5 // pred_check
        _
      $region10: #{inn_forward.1} parent=5 // pred_check_branch
        %600 = sbr.rel (%p597) target = $region12
      $region11: #{inn_forward.1} parent=5 // pred_region
        %s601 = ssub.s32 %s31, 1
        // Predicated region
        $region13: #{inn_forward.1} parent=11 // pred_check
          %p602 = pneg %p78
        $region14: #{inn_forward.1} parent=11 // pred_check_branch
          %604 = sbr.rel (%p602) target = $region16
        $region15: #{inn_forward.1} parent=11 // pred_region
          _
        $region16: #{inn_forward.1} parent=11 // pred_fallthru
          _
        // Predicated region
        $region17: #{inn_forward.1} parent=11 // pred_check
          %p605 = pneg %p99
        $region18: #{inn_forward.1} parent=11 // pred_check_branch
          %607 = sbr.rel (%p605) target = $region20
        $region19: #{inn_forward.1} parent=11 // pred_region
          _
        $region20: #{inn_forward.1} parent=11 // pred_fallthru
          _
        // Predicated region
        $region21: #{inn_forward.1} parent=11 // pred_check
          %p608 = pneg %p120
        $region22: #{inn_forward.1} parent=11 // pred_check_branch
          %610 = sbr.rel (%p608) target = $region24
        $region23: #{inn_forward.1} parent=11 // pred_region
          _
        $region24: #{inn_forward.1} parent=11 // pred_fallthru
          _
        // Predicated region
        $region25: #{inn_forward.1} parent=11 // pred_check
          %p611 = pneg %p141
        $region26: #{inn_forward.1} parent=11 // pred_check_branch
          %613 = sbr.rel (%p611) target = $region28
        $region27: #{inn_forward.1} parent=11 // pred_region
          _
        $region28: #{inn_forward.1} parent=11 // pred_fallthru
          _
        // Predicated region
        $region29: #{inn_forward.1} parent=11 // pred_check
          %p614 = pneg %p162
        $region30: #{inn_forward.1} parent=11 // pred_check_branch
          %616 = sbr.rel (%p614) target = $region32
        $region31: #{inn_forward.1} parent=11 // pred_region
          _
        $region32: #{inn_forward.1} parent=11 // pred_fallthru
          _
        // Predicated region
        $region33: #{inn_forward.1} parent=11 // pred_check
          %p617 = pneg %p183
        $region34: #{inn_forward.1} parent=11 // pred_check_branch
          %619 = sbr.rel (%p617) target = $region36
        $region35: #{inn_forward.1} parent=11 // pred_region
          _
        $region36: #{inn_forward.1} parent=11 // pred_fallthru
          _
        // Predicated region
        $region37: #{inn_forward.1} parent=11 // pred_check
          %p620 = pneg %p204
        $region38: #{inn_forward.1} parent=11 // pred_check_branch
          %622 = sbr.rel (%p620) target = $region40
        $region39: #{inn_forward.1} parent=11 // pred_region
          _
        $region40: #{inn_forward.1} parent=11 // pred_fallthru
          _
        // Predicated region
        $region41: #{inn_forward.1} parent=11 // pred_check
          %p623 = pneg %p225
        $region42: #{inn_forward.1} parent=11 // pred_check_branch
          %625 = sbr.rel (%p623) target = $region44
        $region43: #{inn_forward.1} parent=11 // pred_region
          _
        $region44: #{inn_forward.1} parent=11 // pred_fallthru
          _
        // Predicated region
        $region45: #{inn_forward.1} parent=11 // pred_check
          %p626 = pneg %p246
        $region46: #{inn_forward.1} parent=11 // pred_check_branch
          %628 = sbr.rel (%p626) target = $region48
        $region47: #{inn_forward.1} parent=11 // pred_region
          _
        $region48: #{inn_forward.1} parent=11 // pred_fallthru
          _
        // Predicated region
        $region49: #{inn_forward.1} parent=11 // pred_check
          %p629 = pneg %p267
        $region50: #{inn_forward.1} parent=11 // pred_check_branch
          %631 = sbr.rel (%p629) target = $region52
        $region51: #{inn_forward.1} parent=11 // pred_region
          _
        $region52: #{inn_forward.1} parent=11 // pred_fallthru
          _
        // Predicated region
        $region53: #{inn_forward.1} parent=11 // pred_check
          %p632 = pneg %p288
        $region54: #{inn_forward.1} parent=11 // pred_check_branch
          %634 = sbr.rel (%p632) target = $region56
        $region55: #{inn_forward.1} parent=11 // pred_region
          _
        $region56: #{inn_forward.1} parent=11 // pred_fallthru
          _
        // Predicated region
        $region57: #{inn_forward.1} parent=11 // pred_check
          %p635 = pneg %p309
        $region58: #{inn_forward.1} parent=11 // pred_check_branch
          %637 = sbr.rel (%p635) target = $region60
        $region59: #{inn_forward.1} parent=11 // pred_region
          _
        $region60: #{inn_forward.1} parent=11 // pred_fallthru
          _
        // Predicated region
        $region61: #{inn_forward.1} parent=11 // pred_check
          %p638 = pneg %p330
        $region62: #{inn_forward.1} parent=11 // pred_check_branch
          %640 = sbr.rel (%p638) target = $region64
        $region63: #{inn_forward.1} parent=11 // pred_region
          _
        $region64: #{inn_forward.1} parent=11 // pred_fallthru
          _
        // Predicated region
        $region65: #{inn_forward.1} parent=11 // pred_check
          %p641 = pneg %p351
        $region66: #{inn_forward.1} parent=11 // pred_check_branch
          %643 = sbr.rel (%p641) target = $region68
        $region67: #{inn_forward.1} parent=11 // pred_region
          _
        $region68: #{inn_forward.1} parent=11 // pred_fallthru
          _
        // Predicated region
        $region69: #{inn_forward.1} parent=11 // pred_check
          %p644 = pneg %p372
        $region70: #{inn_forward.1} parent=11 // pred_check_branch
          %646 = sbr.rel (%p644) target = $region72
        $region71: #{inn_forward.1} parent=11 // pred_region
          _
        $region72: #{inn_forward.1} parent=11 // pred_fallthru
          _
        // Predicated region
        $region73: #{inn_forward.1} parent=11 // pred_check
          %p647 = pneg %p393
        $region74: #{inn_forward.1} parent=11 // pred_check_branch
          %649 = sbr.rel (%p647) target = $region76
        $region75: #{inn_forward.1} parent=11 // pred_region
          _
        $region76: #{inn_forward.1} parent=11 // pred_fallthru
          _
        // Predicated region
        $region77: #{inn_forward.1} parent=11 // pred_check
          %p650 = pneg %p414
        $region78: #{inn_forward.1} parent=11 // pred_check_branch
          %652 = sbr.rel (%p650) target = $region80
        $region79: #{inn_forward.1} parent=11 // pred_region
          _
        $region80: #{inn_forward.1} parent=11 // pred_fallthru
          _
        // Predicated region
        $region81: #{inn_forward.1} parent=11 // pred_check
          %p653 = pneg %p435
        $region82: #{inn_forward.1} parent=11 // pred_check_branch
          %655 = sbr.rel (%p653) target = $region84
        $region83: #{inn_forward.1} parent=11 // pred_region
          _
        $region84: #{inn_forward.1} parent=11 // pred_fallthru
          _
        // Predicated region
        $region85: #{inn_forward.1} parent=11 // pred_check
          %p656 = pneg %p456
        $region86: #{inn_forward.1} parent=11 // pred_check_branch
          %658 = sbr.rel (%p656) target = $region88
        $region87: #{inn_forward.1} parent=11 // pred_region
          _
        $region88: #{inn_forward.1} parent=11 // pred_fallthru
          _
        // Predicated region
        $region89: #{inn_forward.1} parent=11 // pred_check
          %p659 = pneg %p477
        $region90: #{inn_forward.1} parent=11 // pred_check_branch
          %661 = sbr.rel (%p659) target = $region92
        $region91: #{inn_forward.1} parent=11 // pred_region
          _
        $region92: #{inn_forward.1} parent=11 // pred_fallthru
          _
        // Predicated region
        $region93: #{inn_forward.1} parent=11 // pred_check
          %p662 = pneg %p498
        $region94: #{inn_forward.1} parent=11 // pred_check_branch
          %664 = sbr.rel (%p662) target = $region96
        $region95: #{inn_forward.1} parent=11 // pred_region
          _
        $region96: #{inn_forward.1} parent=11 // pred_fallthru
          _
        // Predicated region
        $region97: #{inn_forward.1} parent=11 // pred_check
          %p665 = pneg %p519
        $region98: #{inn_forward.1} parent=11 // pred_check_branch
          %667 = sbr.rel (%p665) target = $region100
        $region99: #{inn_forward.1} parent=11 // pred_region
          _
        $region100: #{inn_forward.1} parent=11 // pred_fallthru
          _
        // Predicated region
        $region101: #{inn_forward.1} parent=11 // pred_check
          %p668 = pneg %p540
        $region102: #{inn_forward.1} parent=11 // pred_check_branch
          %670 = sbr.rel (%p668) target = $region104
        $region103: #{inn_forward.1} parent=11 // pred_region
          _
        $region104: #{inn_forward.1} parent=11 // pred_fallthru
          _
        // Predicated region
        $region105: #{inn_forward.1} parent=11 // pred_check
          %p671 = pneg %p561
        $region106: #{inn_forward.1} parent=11 // pred_check_branch
          %673 = sbr.rel (%p671) target = $region108
        $region107: #{inn_forward.1} parent=11 // pred_region
          _
        $region108: #{inn_forward.1} parent=11 // pred_fallthru
          _
      $region12: #{inn_forward.1} parent=5 // pred_fallthru
        _
      %p674 = scmp.lt.s32.totalorder %s31, 2
      // Predicated region
      $region109: #{inn_forward.1} parent=5 // pred_check
        %p675 = pneg %p674
      $region110: #{inn_forward.1} parent=5 // pred_check_branch
        %677 = sbr.rel (%p675) target = $region112
      $region111: #{inn_forward.1} parent=5 // pred_region
        // Predicated region
        $region113: #{inn_forward.1} parent=111 // pred_check
          %p678 = pneg %p51
        $region114: #{inn_forward.1} parent=111 // pred_check_branch
          %680 = sbr.rel (%p678) target = $region116
        $region115: #{inn_forward.1} parent=111 // pred_region
          %s681 = smul.u32 48, %s31
          %s682 = ssub.s32 75, %s681
          %p683 = scmp.lt.s32.totalorder %s682, 48
          %s684 = scalar_select %p683, %s682, 48
          %s685 = smul.u32 128, %s684
          %p686 = scmp.lt.s32.totalorder %s681, 74
          %s687 = scalar_select %p686, %s681, 74
          %s688 = smul.addr %s687, 8
          %s689 = scalar_lea.vmem %s0, %s688
          %s690 = smul.u32 48, %s31
          %s691 = ssub.s32 75, %s690
          %p692 = scmp.lt.s32.totalorder %s691, 48
          %s693 = scalar_select %p692, %s691, 48
          %s694 = smul.u32 128, %s693
        $region116: #{inn_forward.1} parent=111 // pred_fallthru
          _
      $region112: #{inn_forward.1} parent=5 // pred_fallthru
        _
      %p695 = scmp.le.s32.totalorder 1, %s31
      %p696 = scmp.lt.s32.totalorder %s31, 3
      %p697 = pnand %p695, %p696
      %p698 = pneg %p697
      // Predicated region
      $region117: #{inn_forward.1} parent=5 // pred_check
        _
      $region118: #{inn_forward.1} parent=5 // pred_check_branch
        %700 = sbr.rel (%p697) target = $region120
      $region119: #{inn_forward.1} parent=5 // pred_region
        %s701 = ssub.s32 %s31, 1
        %s702 = smul.u32 48, %s36
        %s703 = ssub.s32 75, %s702
        %p704 = scmp.lt.s32.totalorder %s703, 48
        %s705 = scalar_select %p704, %s703, 48
        %s706 = smul.u32 128, %s705
        %p707 = scmp.lt.s32.totalorder %s702, 74
        %s708 = scalar_select %p707, %s702, 74
        %s709 = smul.addr %s708, 8
        %s710 = scalar_lea.vmem %s0, %s709
        %p711 = pneg %p57
        %p712 = pneg %p54
        %p713 = pneg %p78
        %p714 = pneg %p75
        %p715 = pneg %p99
        %p716 = pneg %p96
        %p717 = pneg %p120
        %p718 = pneg %p117
        %p719 = pneg %p141
        %p720 = pneg %p138
        %p721 = pneg %p162
        %p722 = pneg %p159
        %p723 = pneg %p183
        %p724 = pneg %p180
        %p725 = pneg %p204
        %p726 = pneg %p201
        %p727 = pneg %p225
        %p728 = pneg %p222
        %p729 = pneg %p246
        %p730 = pneg %p243
        %p731 = pneg %p267
        %p732 = pneg %p264
        %p733 = pneg %p288
        %p734 = pneg %p285
        %p735 = pneg %p309
        %p736 = pneg %p306
        %p737 = pneg %p330
        %p738 = pneg %p327
        %p739 = pneg %p351
        %p740 = pneg %p348
        %p741 = pneg %p372
        %p742 = pneg %p369
        %p743 = pneg %p393
        %p744 = pneg %p390
        %p745 = pneg %p414
        %p746 = pneg %p411
        %p747 = pneg %p435
        %p748 = pneg %p432
        %p749 = pneg %p456
        %p750 = pneg %p453
        %p751 = pneg %p477
        %p752 = pneg %p474
        %p753 = pneg %p498
        %p754 = pneg %p495
        %p755 = pneg %p519
        %p756 = pneg %p516
        %p757 = pneg %p540
        %p758 = pneg %p537
        %p759 = pneg %p561
        %p760 = pneg %p558
        %p761 = pneg %p587
        %p762 = pneg %p584
        %s763 = sand.u32 %s574, 1
        %s764 = sand.u32 %s574, 1
        %s765 = smul.addr %s764, 384
        %s766 = scalar_lea.vmem [#allocation2], %s765
        %s767 = smul.u32 48, %s36
        %s768 = ssub.s32 75, %s767
        %p769 = scmp.lt.s32.totalorder %s768, 48
        %s770 = scalar_select %p769, %s768, 48
        %s771 = smul.u32 128, %s770
        %p772 = scmp.lt.s32.totalorder %s767, 74
        %s773 = scalar_select %p772, %s767, 74
        %s774 = smul.addr %s773, 8
        %s775 = scalar_lea.vmem %s0, %s774
        %s776 = smul.u32 48, %s36
        %s777 = ssub.s32 75, %s776
        %p778 = scmp.lt.s32.totalorder %s777, 48
        %s779 = scalar_select %p778, %s777, 48
        %s780 = smul.u32 128, %s779
        %s781 = smul.u32 48, %s36
        %s782 = ssub.s32 75, %s781
        %p783 = scmp.lt.s32.totalorder %s782, 48
        %s784 = scalar_select %p783, %s782, 48
        %s785 = smul.u32 128, %s784
        %v786 = vld [vmem:[%s775] sm:$0xff]
        %v787 = vld [vmem:[%s775 + $0x8] sm:$0xff]
        %v788 = vld [vmem:[%s775 + $0x10] sm:$0xff]
        %v789 = vld [vmem:[%s775 + $0x18] sm:$0xff]
        %v790 = vld [vmem:[%s775 + $0x20] sm:$0xff]
        %v791 = vld [vmem:[%s775 + $0x28] sm:$0xff]
        %v792 = vld [vmem:[%s775 + $0x30] sm:$0xff]
        %v793 = vld [vmem:[%s775 + $0x38] sm:$0xff]
        %v794 = vld [vmem:[%s775 + $0x40] sm:$0xff]
        %v795 = vld [vmem:[%s775 + $0x48] sm:$0xff]
        %v796 = vld [vmem:[%s775 + $0x50] sm:$0xff]
        %v797 = vld [vmem:[%s775 + $0x58] sm:$0xff]
        %v798 = vld [vmem:[%s775 + $0x60] sm:$0xff]
        %v799 = vld [vmem:[%s775 + $0x68] sm:$0xff]
        %v800 = vld [vmem:[%s775 + $0x70] sm:$0xff]
        %v801 = vld [vmem:[%s775 + $0x78] sm:$0xff]
        %v802 = vld [vmem:[%s775 + $0x80] sm:$0xff]
        %v803 = vld [vmem:[%s775 + $0x88] sm:$0xff]
        %v804 = vld [vmem:[%s775 + $0x90] sm:$0xff]
        %v805 = vld [vmem:[%s775 + $0x98] sm:$0xff]
        %v806 = vld [vmem:[%s775 + $0xa0] sm:$0xff]
        %v807 = vld [vmem:[%s775 + $0xa8] sm:$0xff]
        %v808 = vld [vmem:[%s775 + $0xb0] sm:$0xff]
        %v809 = vld [vmem:[%s775 + $0xb8] sm:$0xff]
        %v810 = vld [vmem:[%s775 + $0xc0] sm:$0xff]
        %v811 = vld [vmem:[%s775 + $0xc8] sm:$0xff]
        %v812 = vld [vmem:[%s775 + $0xd0] sm:$0xff]
        %v813 = vld [vmem:[%s775 + $0xd8] sm:$0xff]
        %v814 = vld [vmem:[%s775 + $0xe0] sm:$0xff]
        %v815 = vld [vmem:[%s775 + $0xe8] sm:$0xff]
        %v816 = vld [vmem:[%s775 + $0xf0] sm:$0xff]
        %v817 = vld [vmem:[%s775 + $0xf8] sm:$0xff]
        %v818 = vld [vmem:[%s775 + $0x100] sm:$0xff]
        %v819 = vld [vmem:[%s775 + $0x108] sm:$0xff]
        %v820 = vld [vmem:[%s775 + $0x110] sm:$0xff]
        %v821 = vld [vmem:[%s775 + $0x118] sm:$0xff]
        %v822 = vld [vmem:[%s775 + $0x120] sm:$0xff]
        %v823 = vld [vmem:[%s775 + $0x128] sm:$0xff]
        %v824 = vld [vmem:[%s775 + $0x130] sm:$0xff]
        %v825 = vld [vmem:[%s775 + $0x138] sm:$0xff]
        %v826 = vld [vmem:[%s775 + $0x140] sm:$0xff]
        %v827 = vld [vmem:[%s775 + $0x148] sm:$0xff]
        %v828 = vld [vmem:[%s775 + $0x150] sm:$0xff]
        %v829 = vld [vmem:[%s775 + $0x158] sm:$0xff]
        %v830 = vld [vmem:[%s775 + $0x160] sm:$0xff]
        %v831 = vld [vmem:[%s775 + $0x168] sm:$0xff]
        %v832 = vld [vmem:[%s775 + $0x170] sm:$0xff]
        %v833 = vld [vmem:[%s775 + $0x178] sm:$0xff]
        %v834 = vlaneseq
        %v835 = vshrl.u32 %v834, 7
        %v836 = vlaneseq
        %v837 = vand.u32 %v836, 127
        %vm838 = vcmp.eq.s32.totalorder %v835, %v837
        %v839 = vsel %vm838, 1, 0
        %v840 = vcvt.s32.f32 %v839
        %vm841 = vcmask 64512
        %v843 = vsel %vm841, %v840, 0
        %v846 = vsel %vm841, %v786, 0
        %v849 = vsel %vm841, %v787, 0
        %v852 = vsel %vm841, %v788, 0
        %v855 = vsel %vm841, %v789, 0
        %v858 = vsel %vm841, %v790, 0
        %v861 = vsel %vm841, %v791, 0
        %v864 = vsel %vm841, %v792, 0
        %v867 = vsel %vm841, %v793, 0
        %v870 = vsel %vm841, %v794, 0
        %v873 = vsel %vm841, %v795, 0
        %v876 = vsel %vm841, %v796, 0
        %v879 = vsel %vm841, %v797, 0
        %v882 = vsel %vm841, %v798, 0
        %v885 = vsel %vm841, %v799, 0
        %v888 = vsel %vm841, %v800, 0
        %v891 = vsel %vm841, %v801, 0
        %v894 = vsel %vm841, %v802, 0
        %v897 = vsel %vm841, %v803, 0
        %v900 = vsel %vm841, %v804, 0
        %v903 = vsel %vm841, %v805, 0
        %v906 = vsel %vm841, %v806, 0
        %v909 = vsel %vm841, %v807, 0
        %v912 = vsel %vm841, %v808, 0
        %v915 = vsel %vm841, %v809, 0
        %v918 = vsel %vm841, %v810, 0
        %v921 = vsel %vm841, %v811, 0
        %v924 = vsel %vm841, %v812, 0
        %v927 = vsel %vm841, %v813, 0
        %v930 = vsel %vm841, %v814, 0
        %v933 = vsel %vm841, %v815, 0
        %v936 = vsel %vm841, %v816, 0
        %v939 = vsel %vm841, %v817, 0
        %v942 = vsel %vm841, %v818, 0
        %v945 = vsel %vm841, %v819, 0
        %v948 = vsel %vm841, %v820, 0
        %v951 = vsel %vm841, %v821, 0
        %v954 = vsel %vm841, %v822, 0
        %v957 = vsel %vm841, %v823, 0
        %v960 = vsel %vm841, %v824, 0
        %v963 = vsel %vm841, %v825, 0
        %v966 = vsel %vm841, %v826, 0
        %v969 = vsel %vm841, %v827, 0
        %v972 = vsel %vm841, %v828, 0
        %v975 = vsel %vm841, %v829, 0
        %v978 = vsel %vm841, %v830, 0
        %v981 = vsel %vm841, %v831, 0
        %v984 = vsel %vm841, %v832, 0
        %v987 = vsel %vm841, %v833, 0
        %989 = vmatprep.subr.mxu0 0.0
        %990 = vmatpush1.xpose.msra.mxu0 %v891
        %991 = vmatprep.subr.mxu0 0.0
        %992 = vmatpush1.xpose.msra.mxu0 %v888
        %993 = vmatprep.subr.mxu0 0.0
        %994 = vmatpush1.xpose.msra.mxu0 %v885
        %995 = vmatprep.subr.mxu0 0.0
        %996 = vmatpush1.xpose.msra.mxu0 %v882
        %997 = vmatprep.subr.mxu0 0.0
        %998 = vmatpush1.xpose.msra.mxu0 %v879
        %999 = vmatprep.subr.mxu0 0.0
        %1000 = vmatpush1.xpose.msra.mxu0 %v876
        %1001 = vmatprep.subr.mxu0 0.0
        %1002 = vmatpush1.xpose.msra.mxu0 %v873
        %1003 = vmatprep.subr.mxu0 0.0
        %1004 = vmatpush1.xpose.msra.mxu0 %v870
        %1005 = vmatprep.subr.mxu0 0.0
        %1006 = vmatpush1.xpose.msra.mxu0 %v867
        %1007 = vmatprep.subr.mxu0 0.0
        %1008 = vmatpush1.xpose.msra.mxu0 %v864
        %1009 = vmatprep.subr.mxu0 0.0
        %1010 = vmatpush1.xpose.msra.mxu0 %v861
        %1011 = vmatprep.subr.mxu0 0.0
        %1012 = vmatpush1.xpose.msra.mxu0 %v858
        %1013 = vmatprep.subr.mxu0 0.0
        %1014 = vmatpush1.xpose.msra.mxu0 %v855
        %1015 = vmatprep.subr.mxu0 0.0
        %1016 = vmatpush1.xpose.msra.mxu0 %v852
        %1017 = vmatprep.subr.mxu0 0.0
        %1018 = vmatpush1.xpose.msra.mxu0 %v849
        %1019 = vmatprep.subr.mxu0 0.0
        %1020 = vmatpush1.xpose.msra.mxu0 %v846
        %1021 = vmatprep.subr.mxu0 0.0
        %1022 = vmatpush2.xpose.msra.mxu0 %v939
        %1023 = vmatprep.subr.mxu0 0.0
        %1024 = vmatpush2.xpose.msra.mxu0 %v936
        %1025 = vmatprep.subr.mxu0 0.0
        %1026 = vmatpush2.xpose.msra.mxu0 %v933
        %1027 = vmatprep.subr.mxu0 0.0
        %1028 = vmatpush2.xpose.msra.mxu0 %v930
        %1029 = vmatprep.subr.mxu0 0.0
        %1030 = vmatpush2.xpose.msra.mxu0 %v927
        %1031 = vmatprep.subr.mxu0 0.0
        %1032 = vmatpush2.xpose.msra.mxu0 %v924
        %1033 = vmatprep.subr.mxu0 0.0
        %1034 = vmatpush2.xpose.msra.mxu0 %v921
        %1035 = vmatprep.subr.mxu0 0.0
        %1036 = vmatpush2.xpose.msra.mxu0 %v918
        %1037 = vmatprep.subr.mxu0 0.0
        %1038 = vmatpush2.xpose.msra.mxu0 %v915
        %1039 = vmatprep.subr.mxu0 0.0
        %1040 = vmatpush2.xpose.msra.mxu0 %v912
        %1041 = vmatprep.subr.mxu0 0.0
        %1042 = vmatpush2.xpose.msra.mxu0 %v909
        %1043 = vmatprep.subr.mxu0 0.0
        %1044 = vmatpush2.xpose.msra.mxu0 %v906
        %1045 = vmatprep.subr.mxu0 0.0
        %1046 = vmatpush2.xpose.msra.mxu0 %v903
        %1047 = vmatprep.subr.mxu0 0.0
        %1048 = vmatpush2.xpose.msra.mxu0 %v900
        %1049 = vmatprep.subr.mxu0 0.0
        %1050 = vmatpush2.xpose.msra.mxu0 %v897
        %1051 = vmatprep.subr.mxu0 0.0
        %1052 = vmatpush2.xpose.msra.mxu0 %v894
        %1053 = vmatprep.mubr.f32.mxu0 0.0
        %1054 = vmatmul.mubr.f32.gmra.mxu0 %v843
        %v1055 = vpop.f32.mrf.mxu0
        %v1056 = vadd.f32 0.0, %v1055
        %v1057 = vpop.f32.mrf.mxu0
        %v1058 = vadd.f32 0.0, %v1057
        %1059 = vdwg.mxu0
        %1060 = vmatprep.subr.mxu0 0.0
        %1061 = vmatpush1.xpose.msra.mxu0 %v987
        %1062 = vmatprep.subr.mxu0 0.0
        %1063 = vmatpush1.xpose.msra.mxu0 %v984
        %1064 = vmatprep.subr.mxu0 0.0
        %1065 = vmatpush1.xpose.msra.mxu0 %v981
        %1066 = vmatprep.subr.mxu0 0.0
        %1067 = vmatpush1.xpose.msra.mxu0 %v978
        %1068 = vmatprep.subr.mxu0 0.0
        %1069 = vmatpush1.xpose.msra.mxu0 %v975
        %1070 = vmatprep.subr.mxu0 0.0
        %1071 = vmatpush1.xpose.msra.mxu0 %v972
        %1072 = vmatprep.subr.mxu0 0.0
        %1073 = vmatpush1.xpose.msra.mxu0 %v969
        %1074 = vmatprep.subr.mxu0 0.0
        %1075 = vmatpush1.xpose.msra.mxu0 %v966
        %1076 = vmatprep.subr.mxu0 0.0
        %1077 = vmatpush1.xpose.msra.mxu0 %v963
        %1078 = vmatprep.subr.mxu0 0.0
        %1079 = vmatpush1.xpose.msra.mxu0 %v960
        %1080 = vmatprep.subr.mxu0 0.0
        %1081 = vmatpush1.xpose.msra.mxu0 %v957
        %1082 = vmatprep.subr.mxu0 0.0
        %1083 = vmatpush1.xpose.msra.mxu0 %v954
        %1084 = vmatprep.subr.mxu0 0.0
        %1085 = vmatpush1.xpose.msra.mxu0 %v951
        %1086 = vmatprep.subr.mxu0 0.0
        %1087 = vmatpush1.xpose.msra.mxu0 %v948
        %1088 = vmatprep.subr.mxu0 0.0
        %1089 = vmatpush1.xpose.msra.mxu0 %v945
        %1090 = vmatprep.subr.mxu0 0.0
        %1091 = vmatpush1.xpose.msra.mxu0 %v942
        %1092 = vmatprep.subr.mxu0 0.0
        %1093 = vmatpush2.xpose.msra.mxu0 0.0
        %1094 = vmatprep.subr.mxu0 0.0
        %1095 = vmatpush2.xpose.msra.mxu0 0.0
        %1096 = vmatprep.subr.mxu0 0.0
        %1097 = vmatpush2.xpose.msra.mxu0 0.0
        %1098 = vmatprep.subr.mxu0 0.0
        %1099 = vmatpush2.xpose.msra.mxu0 0.0
        %1100 = vmatprep.subr.mxu0 0.0
        %1101 = vmatpush2.xpose.msra.mxu0 0.0
        %1102 = vmatprep.subr.mxu0 0.0
        %1103 = vmatpush2.xpose.msra.mxu0 0.0
        %1104 = vmatprep.subr.mxu0 0.0
        %1105 = vmatpush2.xpose.msra.mxu0 0.0
        %1106 = vmatprep.subr.mxu0 0.0
        %1107 = vmatpush2.xpose.msra.mxu0 0.0
        %1108 = vmatprep.subr.mxu0 0.0
        %1109 = vmatpush2.xpose.msra.mxu0 0.0
        %1110 = vmatprep.subr.mxu0 0.0
        %1111 = vmatpush2.xpose.msra.mxu0 0.0
        %1112 = vmatprep.subr.mxu0 0.0
        %1113 = vmatpush2.xpose.msra.mxu0 0.0
        %1114 = vmatprep.subr.mxu0 0.0
        %1115 = vmatpush2.xpose.msra.mxu0 0.0
        %1116 = vmatprep.subr.mxu0 0.0
        %1117 = vmatpush2.xpose.msra.mxu0 0.0
        %1118 = vmatprep.subr.mxu0 0.0
        %1119 = vmatpush2.xpose.msra.mxu0 0.0
        %1120 = vmatprep.subr.mxu0 0.0
        %1121 = vmatpush2.xpose.msra.mxu0 0.0
        %1122 = vmatprep.subr.mxu0 0.0
        %1123 = vmatpush2.xpose.msra.mxu0 0.0
        %1124 = vmatprep.mubr.f32.mxu0 0.0
        %1125 = vmatmul.mubr.f32.gmra.mxu0 %v843
        %v1126 = vpop.f32.mrf.mxu0
        %v1127 = vadd.f32 0.0, %v1126
        %v1128 = vpop.f32.mrf.mxu0
        %1129 = vdwg.mxu0
        %v1130 = vld [vmem:[%s1] sm:$0xff]
        %v1131 = vld [vmem:[%s1 + $0x8] sm:$0xff]
        %v1132 = vld [vmem:[%s1 + $0x10] sm:$0xff]
        %v1133 = vld [vmem:[%s1 + $0x18] sm:$0xff]
        %v1134 = vld [vmem:[%s2] sm:$0xff]
        %v1135 = vld [vmem:[%s2 + $0x8] sm:$0xff]
        %v1136 = vld [vmem:[%s2 + $0x10] sm:$0xff]
        %v1137 = vld [vmem:[%s2 + $0x18] sm:$0xff]
        %1139 = vset.pattern.permute.xlu0 0
        %1140 = vperm.xlu0 %1139, %v1134
        %v1141 = vpop.permute.xlu0 %1140
        %1144 = vset.pattern.permute.xlu0 0
        %1145 = vperm.xlu0 %1144, %v1135
        %v1146 = vpop.permute.xlu0 %1145
        %1149 = vset.pattern.permute.xlu0 0
        %1150 = vperm.xlu0 %1149, %v1136
        %v1151 = vpop.permute.xlu0 %1150
        %1154 = vset.pattern.permute.xlu0 0
        %1155 = vperm.xlu0 %1154, %v1137
        %v1156 = vpop.permute.xlu0 %1155
        %v1161 = vrot.slane %v1056, 3
        %v1162 = vrot.slane %v1058, 3
        %v1163 = vrot.slane %v1127, 3
        %vm1164 = vcmask 39936
        %v1166 = vsel %vm1164, %v1130, 0
        %v1169 = vsel %vm1164, %v1131, 0
        %v1172 = vsel %vm1164, %v1132, 0
        %v1175 = vsel %vm1164, %v1133, 0
        %vm1177 = vcmask 1044480
        %v1178 = vsel %vm1177, %v1161, 0
        %v1180 = vsel %vm1177, %v1162, 0
        %v1182 = vsel %vm1177, %v1163, 0
        %1184 = vmatprep.subr.mxu0 0.0
        %1185 = vmatpush1.msra.mxu0 0.0
        %1186 = vmatprep.subr.mxu0 0.0
        %1187 = vmatpush1.msra.mxu0 0.0
        %1188 = vmatprep.subr.mxu0 0.0
        %1189 = vmatpush1.msra.mxu0 0.0
        %1190 = vmatprep.subr.mxu0 0.0
        %1191 = vmatpush1.msra.mxu0 0.0
        %1192 = vmatprep.subr.mxu0 0.0
        %1193 = vmatpush1.msra.mxu0 0.0
        %1194 = vmatprep.subr.mxu0 0.0
        %1195 = vmatpush1.msra.mxu0 0.0
        %1196 = vmatprep.subr.mxu0 0.0
        %1197 = vmatpush1.msra.mxu0 0.0
        %1198 = vmatprep.subr.mxu0 0.0
        %1199 = vmatpush1.msra.mxu0 0.0
        %1200 = vmatprep.subr.mxu0 0.0
        %1201 = vmatpush1.msra.mxu0 0.0
        %1202 = vmatprep.subr.mxu0 0.0
        %1203 = vmatpush1.msra.mxu0 0.0
        %1204 = vmatprep.subr.mxu0 0.0
        %1205 = vmatpush1.msra.mxu0 0.0
        %1206 = vmatprep.subr.mxu0 0.0
        %1207 = vmatpush1.msra.mxu0 0.0
        %1208 = vmatprep.subr.mxu0 0.0
        %1209 = vmatpush1.msra.mxu0 0.0
        %1210 = vmatprep.subr.mxu0 0.0
        %1211 = vmatpush1.msra.mxu0 0.0
        %1212 = vmatprep.subr.mxu0 0.0
        %1213 = vmatpush1.msra.mxu0 0.0
        %1214 = vmatprep.subr.mxu0 %v1180
        %1215 = vmatpush1.msra.mxu0 %v1178
        %1216 = vmatprep.subr.mxu0 0.0
        %1217 = vmatpush2.msra.mxu0 0.0
        %1218 = vmatprep.subr.mxu0 0.0
        %1219 = vmatpush2.msra.mxu0 0.0
        %1220 = vmatprep.subr.mxu0 0.0
        %1221 = vmatpush2.msra.mxu0 0.0
        %1222 = vmatprep.subr.mxu0 0.0
        %1223 = vmatpush2.msra.mxu0 0.0
        %1224 = vmatprep.subr.mxu0 0.0
        %1225 = vmatpush2.msra.mxu0 0.0
        %1226 = vmatprep.subr.mxu0 0.0
        %1227 = vmatpush2.msra.mxu0 0.0
        %1228 = vmatprep.subr.mxu0 0.0
        %1229 = vmatpush2.msra.mxu0 0.0
        %1230 = vmatprep.subr.mxu0 0.0
        %1231 = vmatpush2.msra.mxu0 0.0
        %1232 = vmatprep.subr.mxu0 0.0
        %1233 = vmatpush2.msra.mxu0 0.0
        %1234 = vmatprep.subr.mxu0 0.0
        %1235 = vmatpush2.msra.mxu0 0.0
        %1236 = vmatprep.subr.mxu0 0.0
        %1237 = vmatpush2.msra.mxu0 0.0
        %1238 = vmatprep.subr.mxu0 0.0
        %1239 = vmatpush2.msra.mxu0 0.0
        %1240 = vmatprep.subr.mxu0 0.0
        %1241 = vmatpush2.msra.mxu0 0.0
        %1242 = vmatprep.subr.mxu0 0.0
        %1243 = vmatpush2.msra.mxu0 0.0
        %1244 = vmatprep.subr.mxu0 0.0
        %1245 = vmatpush2.msra.mxu0 0.0
        %1246 = vmatprep.subr.mxu0 0.0
        %1247 = vmatpush2.msra.mxu0 0.0
        %1248 = vmatprep.mubr.f32.mxu0 0.0
        %1249 = vmatmul.mubr.f32.gmra.mxu0 %v1166
        %v1250 = vpop.f32.mrf.mxu0
        %v1251 = vadd.f32 %v1141, %v1250
        %v1252 = vpop.f32.mrf.mxu0
        %v1253 = vadd.f32 %v1141, %v1252
        %1254 = vmatprep.mubr.f32.mxu0 0.0
        %1255 = vmatmul.mubr.f32.gmra.mxu0 %v1169
        %v1256 = vpop.f32.mrf.mxu0
        %v1257 = vadd.f32 %v1146, %v1256
        %v1258 = vpop.f32.mrf.mxu0
        %v1259 = vadd.f32 %v1146, %v1258
        %1260 = vmatprep.mubr.f32.mxu0 0.0
        %1261 = vmatmul.mubr.f32.gmra.mxu0 %v1172
        %v1262 = vpop.f32.mrf.mxu0
        %v1263 = vadd.f32 %v1151, %v1262
        %v1264 = vpop.f32.mrf.mxu0
        %v1265 = vadd.f32 %v1151, %v1264
        %1266 = vmatprep.mubr.f32.mxu0 0.0
        %1267 = vmatmul.mubr.f32.gmra.mxu0 %v1175
        %v1268 = vpop.f32.mrf.mxu0
        %v1269 = vadd.f32 %v1156, %v1268
        %v1270 = vpop.f32.mrf.mxu0
        %v1271 = vadd.f32 %v1156, %v1270
        %1272 = vdwg.mxu0
        %1273 = vmatprep.subr.mxu0 0.0
        %1274 = vmatpush1.msra.mxu0 0.0
        %1275 = vmatprep.subr.mxu0 0.0
        %1276 = vmatpush1.msra.mxu0 0.0
        %1277 = vmatprep.subr.mxu0 0.0
        %1278 = vmatpush1.msra.mxu0 0.0
        %1279 = vmatprep.subr.mxu0 0.0
        %1280 = vmatpush1.msra.mxu0 0.0
        %1281 = vmatprep.subr.mxu0 0.0
        %1282 = vmatpush1.msra.mxu0 0.0
        %1283 = vmatprep.subr.mxu0 0.0
        %1284 = vmatpush1.msra.mxu0 0.0
        %1285 = vmatprep.subr.mxu0 0.0
        %1286 = vmatpush1.msra.mxu0 0.0
        %1287 = vmatprep.subr.mxu0 0.0
        %1288 = vmatpush1.msra.mxu0 0.0
        %1289 = vmatprep.subr.mxu0 0.0
        %1290 = vmatpush1.msra.mxu0 0.0
        %1291 = vmatprep.subr.mxu0 0.0
        %1292 = vmatpush1.msra.mxu0 0.0
        %1293 = vmatprep.subr.mxu0 0.0
        %1294 = vmatpush1.msra.mxu0 0.0
        %1295 = vmatprep.subr.mxu0 0.0
        %1296 = vmatpush1.msra.mxu0 0.0
        %1297 = vmatprep.subr.mxu0 0.0
        %1298 = vmatpush1.msra.mxu0 0.0
        %1299 = vmatprep.subr.mxu0 0.0
        %1300 = vmatpush1.msra.mxu0 0.0
        %1301 = vmatprep.subr.mxu0 0.0
        %1302 = vmatpush1.msra.mxu0 0.0
        %1303 = vmatprep.subr.mxu0 0.0
        %1304 = vmatpush1.msra.mxu0 %v1182
        %1305 = vmatprep.subr.mxu0 0.0
        %1306 = vmatpush2.msra.mxu0 0.0
        %1307 = vmatprep.subr.mxu0 0.0
        %1308 = vmatpush2.msra.mxu0 0.0
        %1309 = vmatprep.subr.mxu0 0.0
        %1310 = vmatpush2.msra.mxu0 0.0
        %1311 = vmatprep.subr.mxu0 0.0
        %1312 = vmatpush2.msra.mxu0 0.0
        %1313 = vmatprep.subr.mxu0 0.0
        %1314 = vmatpush2.msra.mxu0 0.0
        %1315 = vmatprep.subr.mxu0 0.0
        %1316 = vmatpush2.msra.mxu0 0.0
        %1317 = vmatprep.subr.mxu0 0.0
        %1318 = vmatpush2.msra.mxu0 0.0
        %1319 = vmatprep.subr.mxu0 0.0
        %1320 = vmatpush2.msra.mxu0 0.0
        %1321 = vmatprep.subr.mxu0 0.0
        %1322 = vmatpush2.msra.mxu0 0.0
        %1323 = vmatprep.subr.mxu0 0.0
        %1324 = vmatpush2.msra.mxu0 0.0
        %1325 = vmatprep.subr.mxu0 0.0
        %1326 = vmatpush2.msra.mxu0 0.0
        %1327 = vmatprep.subr.mxu0 0.0
        %1328 = vmatpush2.msra.mxu0 0.0
        %1329 = vmatprep.subr.mxu0 0.0
        %1330 = vmatpush2.msra.mxu0 0.0
        %1331 = vmatprep.subr.mxu0 0.0
        %1332 = vmatpush2.msra.mxu0 0.0
        %1333 = vmatprep.subr.mxu0 0.0
        %1334 = vmatpush2.msra.mxu0 0.0
        %1335 = vmatprep.subr.mxu0 0.0
        %1336 = vmatpush2.msra.mxu0 0.0
        %1337 = vmatprep.mubr.f32.mxu0 0.0
        %1338 = vmatmul.mubr.f32.gmra.mxu0 %v1166
        %v1339 = vpop.f32.mrf.mxu0
        %v1340 = vadd.f32 %v1141, %v1339
        %v1341 = vpop.f32.mrf.mxu0
        %1342 = vmatprep.mubr.f32.mxu0 0.0
        %1343 = vmatmul.mubr.f32.gmra.mxu0 %v1169
        %v1344 = vpop.f32.mrf.mxu0
        %v1345 = vadd.f32 %v1146, %v1344
        %v1346 = vpop.f32.mrf.mxu0
        %1347 = vmatprep.mubr.f32.mxu0 0.0
        %1348 = vmatmul.mubr.f32.gmra.mxu0 %v1172
        %v1349 = vpop.f32.mrf.mxu0
        %v1350 = vadd.f32 %v1151, %v1349
        %v1351 = vpop.f32.mrf.mxu0
        %1352 = vmatprep.mubr.f32.mxu0 0.0
        %1353 = vmatmul.mubr.f32.gmra.mxu0 %v1175
        %v1354 = vpop.f32.mrf.mxu0
        %v1355 = vadd.f32 %v1156, %v1354
        %v1356 = vpop.f32.mrf.mxu0
        %1357 = vdwg.mxu0
        %v1358 = vmul.f32 %v1251, 0.5
        %v1359 = vmul.f32 %v1253, 0.5
        %v1360 = vmul.f32 %v1340, 0.5
        %v1361 = vmul.f32 %v1257, 0.5
        %v1362 = vmul.f32 %v1259, 0.5
        %v1363 = vmul.f32 %v1345, 0.5
        %v1364 = vmul.f32 %v1263, 0.5
        %v1365 = vmul.f32 %v1265, 0.5
        %v1366 = vmul.f32 %v1350, 0.5
        %v1367 = vmul.f32 %v1269, 0.5
        %v1368 = vmul.f32 %v1271, 0.5
        %v1369 = vmul.f32 %v1355, 0.5
        %v1370 = vtanh.pop %v1358
        %v1371 = vtanh.pop %v1359
        %v1372 = vtanh.pop %v1360
        %v1373 = vtanh.pop %v1361
        %v1374 = vtanh.pop %v1362
        %v1375 = vtanh.pop %v1363
        %v1376 = vtanh.pop %v1364
        %v1377 = vtanh.pop %v1365
        %v1378 = vtanh.pop %v1366
        %v1379 = vtanh.pop %v1367
        %v1380 = vtanh.pop %v1368
        %v1381 = vtanh.pop %v1369
        %v1382 = vmul.f32 %v1370, 0.5
        %v1383 = vmul.f32 %v1371, 0.5
        %v1384 = vmul.f32 %v1372, 0.5
        %v1385 = vmul.f32 %v1373, 0.5
        %v1386 = vmul.f32 %v1374, 0.5
        %v1387 = vmul.f32 %v1375, 0.5
        %v1388 = vmul.f32 %v1376, 0.5
        %v1389 = vmul.f32 %v1377, 0.5
        %v1390 = vmul.f32 %v1378, 0.5
        %v1391 = vmul.f32 %v1379, 0.5
        %v1392 = vmul.f32 %v1380, 0.5
        %v1393 = vmul.f32 %v1381, 0.5
        %v1394 = vadd.f32 %v1382, 0.5
        %v1395 = vadd.f32 %v1383, 0.5
        %v1396 = vadd.f32 %v1384, 0.5
        %v1397 = vadd.f32 %v1385, 0.5
        %v1398 = vadd.f32 %v1386, 0.5
        %v1399 = vadd.f32 %v1387, 0.5
        %v1400 = vadd.f32 %v1388, 0.5
        %v1401 = vadd.f32 %v1389, 0.5
        %v1402 = vadd.f32 %v1390, 0.5
        %v1403 = vadd.f32 %v1391, 0.5
        %v1404 = vadd.f32 %v1392, 0.5
        %v1405 = vadd.f32 %v1393, 0.5
        %v1406 = vld [vmem:[%s3] sm:$0xff]
        %v1407 = vld [vmem:[%s3 + $0x8] sm:$0xff]
        %v1408 = vld [vmem:[%s3 + $0x10] sm:$0xff]
        %v1409 = vld [vmem:[%s3 + $0x18] sm:$0xff]
        %v1410 = vld [vmem:[%s4] sm:$0xff]
        %v1411 = vld [vmem:[%s4 + $0x8] sm:$0xff]
        %v1412 = vld [vmem:[%s4 + $0x10] sm:$0xff]
        %v1413 = vld [vmem:[%s4 + $0x18] sm:$0xff]
        %1415 = vset.pattern.permute.xlu0 0
        %1416 = vperm.xlu0 %1415, %v1410
        %v1417 = vpop.permute.xlu0 %1416
        %1420 = vset.pattern.permute.xlu0 0
        %1421 = vperm.xlu0 %1420, %v1411
        %v1422 = vpop.permute.xlu0 %1421
        %1425 = vset.pattern.permute.xlu0 0
        %1426 = vperm.xlu0 %1425, %v1412
        %v1427 = vpop.permute.xlu0 %1426
        %1430 = vset.pattern.permute.xlu0 0
        %1431 = vperm.xlu0 %1430, %v1413
        %v1432 = vpop.permute.xlu0 %1431
        %vm1434 = vcmask 261120
        %v1436 = vsel %vm1434, %v1406, 0
        %v1439 = vsel %vm1434, %v1407, 0
        %v1442 = vsel %vm1434, %v1408, 0
        %v1445 = vsel %vm1434, %v1409, 0
        %1447 = vmatprep.subr.mxu0 0.0
        %1448 = vmatpush1.msra.mxu0 0.0
        %1449 = vmatprep.subr.mxu0 0.0
        %1450 = vmatpush1.msra.mxu0 0.0
        %1451 = vmatprep.subr.mxu0 0.0
        %1452 = vmatpush1.msra.mxu0 0.0
        %1453 = vmatprep.subr.mxu0 0.0
        %1454 = vmatpush1.msra.mxu0 0.0
        %1455 = vmatprep.subr.mxu0 0.0
        %1456 = vmatpush1.msra.mxu0 0.0
        %1457 = vmatprep.subr.mxu0 0.0
        %1458 = vmatpush1.msra.mxu0 0.0
        %1459 = vmatprep.subr.mxu0 0.0
        %1460 = vmatpush1.msra.mxu0 0.0
        %1461 = vmatprep.subr.mxu0 0.0
        %1462 = vmatpush1.msra.mxu0 0.0
        %1463 = vmatprep.subr.mxu0 0.0
        %1464 = vmatpush1.msra.mxu0 0.0
        %1465 = vmatprep.subr.mxu0 0.0
        %1466 = vmatpush1.msra.mxu0 0.0
        %1467 = vmatprep.subr.mxu0 0.0
        %1468 = vmatpush1.msra.mxu0 0.0
        %1469 = vmatprep.subr.mxu0 0.0
        %1470 = vmatpush1.msra.mxu0 0.0
        %1471 = vmatprep.subr.mxu0 %v1404
        %1472 = vmatpush1.msra.mxu0 %v1403
        %1473 = vmatprep.subr.mxu0 %v1401
        %1474 = vmatpush1.msra.mxu0 %v1400
        %1475 = vmatprep.subr.mxu0 %v1398
        %1476 = vmatpush1.msra.mxu0 %v1397
        %1477 = vmatprep.subr.mxu0 %v1395
        %1478 = vmatpush1.msra.mxu0 %v1394
        %1479 = vmatprep.subr.mxu0 0.0
        %1480 = vmatpush2.msra.mxu0 0.0
        %1481 = vmatprep.subr.mxu0 0.0
        %1482 = vmatpush2.msra.mxu0 0.0
        %1483 = vmatprep.subr.mxu0 0.0
        %1484 = vmatpush2.msra.mxu0 0.0
        %1485 = vmatprep.subr.mxu0 0.0
        %1486 = vmatpush2.msra.mxu0 0.0
        %1487 = vmatprep.subr.mxu0 0.0
        %1488 = vmatpush2.msra.mxu0 0.0
        %1489 = vmatprep.subr.mxu0 0.0
        %1490 = vmatpush2.msra.mxu0 0.0
        %1491 = vmatprep.subr.mxu0 0.0
        %1492 = vmatpush2.msra.mxu0 0.0
        %1493 = vmatprep.subr.mxu0 0.0
        %1494 = vmatpush2.msra.mxu0 0.0
        %1495 = vmatprep.subr.mxu0 0.0
        %1496 = vmatpush2.msra.mxu0 0.0
        %1497 = vmatprep.subr.mxu0 0.0
        %1498 = vmatpush2.msra.mxu0 0.0
        %1499 = vmatprep.subr.mxu0 0.0
        %1500 = vmatpush2.msra.mxu0 0.0
        %1501 = vmatprep.subr.mxu0 0.0
        %1502 = vmatpush2.msra.mxu0 0.0
        %1503 = vmatprep.subr.mxu0 0.0
        %1504 = vmatpush2.msra.mxu0 0.0
        %1505 = vmatprep.subr.mxu0 0.0
        %1506 = vmatpush2.msra.mxu0 0.0
        %1507 = vmatprep.subr.mxu0 0.0
        %1508 = vmatpush2.msra.mxu0 0.0
        %1509 = vmatprep.subr.mxu0 0.0
        %1510 = vmatpush2.msra.mxu0 0.0
        %1511 = vmatprep.mubr.f32.mxu0 0.0
        %1512 = vmatmul.mubr.f32.gmra.mxu0 %v1436
        %v1513 = vpop.f32.mrf.mxu0
        %v1514 = vadd.f32 %v1417, %v1513
        %v1515 = vpop.f32.mrf.mxu0
        %v1516 = vadd.f32 %v1417, %v1515
        %1517 = vmatprep.mubr.f32.mxu0 0.0
        %1518 = vmatmul.mubr.f32.gmra.mxu0 %v1439
        %v1519 = vpop.f32.mrf.mxu0
        %v1520 = vadd.f32 %v1422, %v1519
        %v1521 = vpop.f32.mrf.mxu0
        %v1522 = vadd.f32 %v1422, %v1521
        %1523 = vmatprep.mubr.f32.mxu0 0.0
        %1524 = vmatmul.mubr.f32.gmra.mxu0 %v1442
        %v1525 = vpop.f32.mrf.mxu0
        %v1526 = vadd.f32 %v1427, %v1525
        %v1527 = vpop.f32.mrf.mxu0
        %v1528 = vadd.f32 %v1427, %v1527
        %1529 = vmatprep.mubr.f32.mxu0 0.0
        %1530 = vmatmul.mubr.f32.gmra.mxu0 %v1445
        %v1531 = vpop.f32.mrf.mxu0
        %v1532 = vadd.f32 %v1432, %v1531
        %v1533 = vpop.f32.mrf.mxu0
        %v1534 = vadd.f32 %v1432, %v1533
        %1535 = vdwg.mxu0
        %1536 = vmatprep.subr.mxu0 0.0
        %1537 = vmatpush1.msra.mxu0 0.0
        %1538 = vmatprep.subr.mxu0 0.0
        %1539 = vmatpush1.msra.mxu0 0.0
        %1540 = vmatprep.subr.mxu0 0.0
        %1541 = vmatpush1.msra.mxu0 0.0
        %1542 = vmatprep.subr.mxu0 0.0
        %1543 = vmatpush1.msra.mxu0 0.0
        %1544 = vmatprep.subr.mxu0 0.0
        %1545 = vmatpush1.msra.mxu0 0.0
        %1546 = vmatprep.subr.mxu0 0.0
        %1547 = vmatpush1.msra.mxu0 0.0
        %1548 = vmatprep.subr.mxu0 0.0
        %1549 = vmatpush1.msra.mxu0 0.0
        %1550 = vmatprep.subr.mxu0 0.0
        %1551 = vmatpush1.msra.mxu0 0.0
        %1552 = vmatprep.subr.mxu0 0.0
        %1553 = vmatpush1.msra.mxu0 0.0
        %1554 = vmatprep.subr.mxu0 0.0
        %1555 = vmatpush1.msra.mxu0 0.0
        %1556 = vmatprep.subr.mxu0 0.0
        %1557 = vmatpush1.msra.mxu0 0.0
        %1558 = vmatprep.subr.mxu0 0.0
        %1559 = vmatpush1.msra.mxu0 0.0
        %1560 = vmatprep.subr.mxu0 0.0
        %1561 = vmatpush1.msra.mxu0 %v1405
        %1562 = vmatprep.subr.mxu0 0.0
        %1563 = vmatpush1.msra.mxu0 %v1402
        %1564 = vmatprep.subr.mxu0 0.0
        %1565 = vmatpush1.msra.mxu0 %v1399
        %1566 = vmatprep.subr.mxu0 0.0
        %1567 = vmatpush1.msra.mxu0 %v1396
        %1568 = vmatprep.subr.mxu0 0.0
        %1569 = vmatpush2.msra.mxu0 0.0
        %1570 = vmatprep.subr.mxu0 0.0
        %1571 = vmatpush2.msra.mxu0 0.0
        %1572 = vmatprep.subr.mxu0 0.0
        %1573 = vmatpush2.msra.mxu0 0.0
        %1574 = vmatprep.subr.mxu0 0.0
        %1575 = vmatpush2.msra.mxu0 0.0
        %1576 = vmatprep.subr.mxu0 0.0
        %1577 = vmatpush2.msra.mxu0 0.0
        %1578 = vmatprep.subr.mxu0 0.0
        %1579 = vmatpush2.msra.mxu0 0.0
        %1580 = vmatprep.subr.mxu0 0.0
        %1581 = vmatpush2.msra.mxu0 0.0
        %1582 = vmatprep.subr.mxu0 0.0
        %1583 = vmatpush2.msra.mxu0 0.0
        %1584 = vmatprep.subr.mxu0 0.0
        %1585 = vmatpush2.msra.mxu0 0.0
        %1586 = vmatprep.subr.mxu0 0.0
        %1587 = vmatpush2.msra.mxu0 0.0
        %1588 = vmatprep.subr.mxu0 0.0
        %1589 = vmatpush2.msra.mxu0 0.0
        %1590 = vmatprep.subr.mxu0 0.0
        %1591 = vmatpush2.msra.mxu0 0.0
        %1592 = vmatprep.subr.mxu0 0.0
        %1593 = vmatpush2.msra.mxu0 0.0
        %1594 = vmatprep.subr.mxu0 0.0
        %1595 = vmatpush2.msra.mxu0 0.0
        %1596 = vmatprep.subr.mxu0 0.0
        %1597 = vmatpush2.msra.mxu0 0.0
        %1598 = vmatprep.subr.mxu0 0.0
        %1599 = vmatpush2.msra.mxu0 0.0
        %1600 = vmatprep.mubr.f32.mxu0 0.0
        %1601 = vmatmul.mubr.f32.gmra.mxu0 %v1436
        %v1602 = vpop.f32.mrf.mxu0
        %v1603 = vadd.f32 %v1417, %v1602
        %v1604 = vpop.f32.mrf.mxu0
        %1605 = vmatprep.mubr.f32.mxu0 0.0
        %1606 = vmatmul.mubr.f32.gmra.mxu0 %v1439
        %v1607 = vpop.f32.mrf.mxu0
        %v1608 = vadd.f32 %v1422, %v1607
        %v1609 = vpop.f32.mrf.mxu0
        %1610 = vmatprep.mubr.f32.mxu0 0.0
        %1611 = vmatmul.mubr.f32.gmra.mxu0 %v1442
        %v1612 = vpop.f32.mrf.mxu0
        %v1613 = vadd.f32 %v1427, %v1612
        %v1614 = vpop.f32.mrf.mxu0
        %1615 = vmatprep.mubr.f32.mxu0 0.0
        %1616 = vmatmul.mubr.f32.gmra.mxu0 %v1445
        %v1617 = vpop.f32.mrf.mxu0
        %v1618 = vadd.f32 %v1432, %v1617
        %v1619 = vpop.f32.mrf.mxu0
        %1620 = vdwg.mxu0
        %v1621 = vmul.f32 %v1514, 0.5
        %v1622 = vmul.f32 %v1516, 0.5
        %v1623 = vmul.f32 %v1603, 0.5
        %v1624 = vmul.f32 %v1520, 0.5
        %v1625 = vmul.f32 %v1522, 0.5
        %v1626 = vmul.f32 %v1608, 0.5
        %v1627 = vmul.f32 %v1526, 0.5
        %v1628 = vmul.f32 %v1528, 0.5
        %v1629 = vmul.f32 %v1613, 0.5
        %v1630 = vmul.f32 %v1532, 0.5
        %v1631 = vmul.f32 %v1534, 0.5
        %v1632 = vmul.f32 %v1618, 0.5
        %v1633 = vtanh.pop %v1621
        %v1634 = vtanh.pop %v1622
        %v1635 = vtanh.pop %v1623
        %v1636 = vtanh.pop %v1624
        %v1637 = vtanh.pop %v1625
        %v1638 = vtanh.pop %v1626
        %v1639 = vtanh.pop %v1627
        %v1640 = vtanh.pop %v1628
        %v1641 = vtanh.pop %v1629
        %v1642 = vtanh.pop %v1630
        %v1643 = vtanh.pop %v1631
        %v1644 = vtanh.pop %v1632
        %v1645 = vmul.f32 %v1633, 0.5
        %v1646 = vmul.f32 %v1634, 0.5
        %v1647 = vmul.f32 %v1635, 0.5
        %v1648 = vmul.f32 %v1636, 0.5
        %v1649 = vmul.f32 %v1637, 0.5
        %v1650 = vmul.f32 %v1638, 0.5
        %v1651 = vmul.f32 %v1639, 0.5
        %v1652 = vmul.f32 %v1640, 0.5
        %v1653 = vmul.f32 %v1641, 0.5
        %v1654 = vmul.f32 %v1642, 0.5
        %v1655 = vmul.f32 %v1643, 0.5
        %v1656 = vmul.f32 %v1644, 0.5
        %v1657 = vadd.f32 %v1645, 0.5
        %v1658 = vadd.f32 %v1646, 0.5
        %v1659 = vadd.f32 %v1647, 0.5
        %v1660 = vadd.f32 %v1648, 0.5
        %v1661 = vadd.f32 %v1649, 0.5
        %v1662 = vadd.f32 %v1650, 0.5
        %v1663 = vadd.f32 %v1651, 0.5
        %v1664 = vadd.f32 %v1652, 0.5
        %v1665 = vadd.f32 %v1653, 0.5
        %v1666 = vadd.f32 %v1654, 0.5
        %v1667 = vadd.f32 %v1655, 0.5
        %v1668 = vadd.f32 %v1656, 0.5
        %v1669 = vld [vmem:[%s5] sm:$0xff]
        %v1670 = vld [vmem:[%s5 + $0x8] sm:$0xff]
        %v1671 = vld [vmem:[%s5 + $0x10] sm:$0xff]
        %v1672 = vld [vmem:[%s5 + $0x18] sm:$0xff]
        %v1673 = vld [vmem:[%s6] sm:$0xff]
        %v1674 = vld [vmem:[%s6 + $0x8] sm:$0xff]
        %v1675 = vld [vmem:[%s6 + $0x10] sm:$0xff]
        %v1676 = vld [vmem:[%s6 + $0x18] sm:$0xff]
        %1678 = vset.pattern.permute.xlu0 0
        %1679 = vperm.xlu0 %1678, %v1673
        %v1680 = vpop.permute.xlu0 %1679
        %1683 = vset.pattern.permute.xlu0 0
        %1684 = vperm.xlu0 %1683, %v1674
        %v1685 = vpop.permute.xlu0 %1684
        %1688 = vset.pattern.permute.xlu0 0
        %1689 = vperm.xlu0 %1688, %v1675
        %v1690 = vpop.permute.xlu0 %1689
        %1693 = vset.pattern.permute.xlu0 0
        %1694 = vperm.xlu0 %1693, %v1676
        %v1695 = vpop.permute.xlu0 %1694
        %v1698 = vsel %vm1434, %v1669, 0
        %v1701 = vsel %vm1434, %v1670, 0
        %v1704 = vsel %vm1434, %v1671, 0
        %v1707 = vsel %vm1434, %v1672, 0
        %1709 = vmatprep.subr.mxu0 0.0
        %1710 = vmatpush1.msra.mxu0 0.0
        %1711 = vmatprep.subr.mxu0 0.0
        %1712 = vmatpush1.msra.mxu0 0.0
        %1713 = vmatprep.subr.mxu0 0.0
        %1714 = vmatpush1.msra.mxu0 0.0
        %1715 = vmatprep.subr.mxu0 0.0
        %1716 = vmatpush1.msra.mxu0 0.0
        %1717 = vmatprep.subr.mxu0 0.0
        %1718 = vmatpush1.msra.mxu0 0.0
        %1719 = vmatprep.subr.mxu0 0.0
        %1720 = vmatpush1.msra.mxu0 0.0
        %1721 = vmatprep.subr.mxu0 0.0
        %1722 = vmatpush1.msra.mxu0 0.0
        %1723 = vmatprep.subr.mxu0 0.0
        %1724 = vmatpush1.msra.mxu0 0.0
        %1725 = vmatprep.subr.mxu0 0.0
        %1726 = vmatpush1.msra.mxu0 0.0
        %1727 = vmatprep.subr.mxu0 0.0
        %1728 = vmatpush1.msra.mxu0 0.0
        %1729 = vmatprep.subr.mxu0 0.0
        %1730 = vmatpush1.msra.mxu0 0.0
        %1731 = vmatprep.subr.mxu0 0.0
        %1732 = vmatpush1.msra.mxu0 0.0
        %1733 = vmatprep.subr.mxu0 %v1667
        %1734 = vmatpush1.msra.mxu0 %v1666
        %1735 = vmatprep.subr.mxu0 %v1664
        %1736 = vmatpush1.msra.mxu0 %v1663
        %1737 = vmatprep.subr.mxu0 %v1661
        %1738 = vmatpush1.msra.mxu0 %v1660
        %1739 = vmatprep.subr.mxu0 %v1658
        %1740 = vmatpush1.msra.mxu0 %v1657
        %1741 = vmatprep.subr.mxu0 0.0
        %1742 = vmatpush2.msra.mxu0 0.0
        %1743 = vmatprep.subr.mxu0 0.0
        %1744 = vmatpush2.msra.mxu0 0.0
        %1745 = vmatprep.subr.mxu0 0.0
        %1746 = vmatpush2.msra.mxu0 0.0
        %1747 = vmatprep.subr.mxu0 0.0
        %1748 = vmatpush2.msra.mxu0 0.0
        %1749 = vmatprep.subr.mxu0 0.0
        %1750 = vmatpush2.msra.mxu0 0.0
        %1751 = vmatprep.subr.mxu0 0.0
        %1752 = vmatpush2.msra.mxu0 0.0
        %1753 = vmatprep.subr.mxu0 0.0
        %1754 = vmatpush2.msra.mxu0 0.0
        %1755 = vmatprep.subr.mxu0 0.0
        %1756 = vmatpush2.msra.mxu0 0.0
        %1757 = vmatprep.subr.mxu0 0.0
        %1758 = vmatpush2.msra.mxu0 0.0
        %1759 = vmatprep.subr.mxu0 0.0
        %1760 = vmatpush2.msra.mxu0 0.0
        %1761 = vmatprep.subr.mxu0 0.0
        %1762 = vmatpush2.msra.mxu0 0.0
        %1763 = vmatprep.subr.mxu0 0.0
        %1764 = vmatpush2.msra.mxu0 0.0
        %1765 = vmatprep.subr.mxu0 0.0
        %1766 = vmatpush2.msra.mxu0 0.0
        %1767 = vmatprep.subr.mxu0 0.0
        %1768 = vmatpush2.msra.mxu0 0.0
        %1769 = vmatprep.subr.mxu0 0.0
        %1770 = vmatpush2.msra.mxu0 0.0
        %1771 = vmatprep.subr.mxu0 0.0
        %1772 = vmatpush2.msra.mxu0 0.0
        %1773 = vmatprep.mubr.f32.mxu0 0.0
        %1774 = vmatmul.mubr.f32.gmra.mxu0 %v1698
        %v1775 = vpop.f32.mrf.mxu0
        %v1776 = vadd.f32 %v1680, %v1775
        %v1777 = vpop.f32.mrf.mxu0
        %v1778 = vadd.f32 %v1680, %v1777
        %1779 = vmatprep.mubr.f32.mxu0 0.0
        %1780 = vmatmul.mubr.f32.gmra.mxu0 %v1701
        %v1781 = vpop.f32.mrf.mxu0
        %v1782 = vadd.f32 %v1685, %v1781
        %v1783 = vpop.f32.mrf.mxu0
        %v1784 = vadd.f32 %v1685, %v1783
        %1785 = vmatprep.mubr.f32.mxu0 0.0
        %1786 = vmatmul.mubr.f32.gmra.mxu0 %v1704
        %v1787 = vpop.f32.mrf.mxu0
        %v1788 = vadd.f32 %v1690, %v1787
        %v1789 = vpop.f32.mrf.mxu0
        %v1790 = vadd.f32 %v1690, %v1789
        %1791 = vmatprep.mubr.f32.mxu0 0.0
        %1792 = vmatmul.mubr.f32.gmra.mxu0 %v1707
        %v1793 = vpop.f32.mrf.mxu0
        %v1794 = vadd.f32 %v1695, %v1793
        %v1795 = vpop.f32.mrf.mxu0
        %v1796 = vadd.f32 %v1695, %v1795
        %1797 = vdwg.mxu0
        %1798 = vmatprep.subr.mxu0 0.0
        %1799 = vmatpush1.msra.mxu0 0.0
        %1800 = vmatprep.subr.mxu0 0.0
        %1801 = vmatpush1.msra.mxu0 0.0
        %1802 = vmatprep.subr.mxu0 0.0
        %1803 = vmatpush1.msra.mxu0 0.0
        %1804 = vmatprep.subr.mxu0 0.0
        %1805 = vmatpush1.msra.mxu0 0.0
        %1806 = vmatprep.subr.mxu0 0.0
        %1807 = vmatpush1.msra.mxu0 0.0
        %1808 = vmatprep.subr.mxu0 0.0
        %1809 = vmatpush1.msra.mxu0 0.0
        %1810 = vmatprep.subr.mxu0 0.0
        %1811 = vmatpush1.msra.mxu0 0.0
        %1812 = vmatprep.subr.mxu0 0.0
        %1813 = vmatpush1.msra.mxu0 0.0
        %1814 = vmatprep.subr.mxu0 0.0
        %1815 = vmatpush1.msra.mxu0 0.0
        %1816 = vmatprep.subr.mxu0 0.0
        %1817 = vmatpush1.msra.mxu0 0.0
        %1818 = vmatprep.subr.mxu0 0.0
        %1819 = vmatpush1.msra.mxu0 0.0
        %1820 = vmatprep.subr.mxu0 0.0
        %1821 = vmatpush1.msra.mxu0 0.0
        %1822 = vmatprep.subr.mxu0 0.0
        %1823 = vmatpush1.msra.mxu0 %v1668
        %1824 = vmatprep.subr.mxu0 0.0
        %1825 = vmatpush1.msra.mxu0 %v1665
        %1826 = vmatprep.subr.mxu0 0.0
        %1827 = vmatpush1.msra.mxu0 %v1662
        %1828 = vmatprep.subr.mxu0 0.0
        %1829 = vmatpush1.msra.mxu0 %v1659
        %1830 = vmatprep.subr.mxu0 0.0
        %1831 = vmatpush2.msra.mxu0 0.0
        %1832 = vmatprep.subr.mxu0 0.0
        %1833 = vmatpush2.msra.mxu0 0.0
        %1834 = vmatprep.subr.mxu0 0.0
        %1835 = vmatpush2.msra.mxu0 0.0
        %1836 = vmatprep.subr.mxu0 0.0
        %1837 = vmatpush2.msra.mxu0 0.0
        %1838 = vmatprep.subr.mxu0 0.0
        %1839 = vmatpush2.msra.mxu0 0.0
        %1840 = vmatprep.subr.mxu0 0.0
        %1841 = vmatpush2.msra.mxu0 0.0
        %1842 = vmatprep.subr.mxu0 0.0
        %1843 = vmatpush2.msra.mxu0 0.0
        %1844 = vmatprep.subr.mxu0 0.0
        %1845 = vmatpush2.msra.mxu0 0.0
        %1846 = vmatprep.subr.mxu0 0.0
        %1847 = vmatpush2.msra.mxu0 0.0
        %1848 = vmatprep.subr.mxu0 0.0
        %1849 = vmatpush2.msra.mxu0 0.0
        %1850 = vmatprep.subr.mxu0 0.0
        %1851 = vmatpush2.msra.mxu0 0.0
        %1852 = vmatprep.subr.mxu0 0.0
        %1853 = vmatpush2.msra.mxu0 0.0
        %1854 = vmatprep.subr.mxu0 0.0
        %1855 = vmatpush2.msra.mxu0 0.0
        %1856 = vmatprep.subr.mxu0 0.0
        %1857 = vmatpush2.msra.mxu0 0.0
        %1858 = vmatprep.subr.mxu0 0.0
        %1859 = vmatpush2.msra.mxu0 0.0
        %1860 = vmatprep.subr.mxu0 0.0
        %1861 = vmatpush2.msra.mxu0 0.0
        %1862 = vmatprep.mubr.f32.mxu0 0.0
        %1863 = vmatmul.mubr.f32.gmra.mxu0 %v1698
        %v1864 = vpop.f32.mrf.mxu0
        %v1865 = vadd.f32 %v1680, %v1864
        %v1866 = vpop.f32.mrf.mxu0
        %1867 = vmatprep.mubr.f32.mxu0 0.0
        %1868 = vmatmul.mubr.f32.gmra.mxu0 %v1701
        %v1869 = vpop.f32.mrf.mxu0
        %v1870 = vadd.f32 %v1685, %v1869
        %v1871 = vpop.f32.mrf.mxu0
        %1872 = vmatprep.mubr.f32.mxu0 0.0
        %1873 = vmatmul.mubr.f32.gmra.mxu0 %v1704
        %v1874 = vpop.f32.mrf.mxu0
        %v1875 = vadd.f32 %v1690, %v1874
        %v1876 = vpop.f32.mrf.mxu0
        %1877 = vmatprep.mubr.f32.mxu0 0.0
        %1878 = vmatmul.mubr.f32.gmra.mxu0 %v1707
        %v1879 = vpop.f32.mrf.mxu0
        %v1880 = vadd.f32 %v1695, %v1879
        %v1881 = vpop.f32.mrf.mxu0
        %1882 = vdwg.mxu0
        %v1883 = vmul.f32 %v1776, 0.5
        %v1884 = vmul.f32 %v1778, 0.5
        %v1885 = vmul.f32 %v1865, 0.5
        %v1886 = vmul.f32 %v1782, 0.5
        %v1887 = vmul.f32 %v1784, 0.5
        %v1888 = vmul.f32 %v1870, 0.5
        %v1889 = vmul.f32 %v1788, 0.5
        %v1890 = vmul.f32 %v1790, 0.5
        %v1891 = vmul.f32 %v1875, 0.5
        %v1892 = vmul.f32 %v1794, 0.5
        %v1893 = vmul.f32 %v1796, 0.5
        %v1894 = vmul.f32 %v1880, 0.5
        %v1895 = vtanh.pop %v1883
        %v1896 = vtanh.pop %v1884
        %v1897 = vtanh.pop %v1885
        %v1898 = vtanh.pop %v1886
        %v1899 = vtanh.pop %v1887
        %v1900 = vtanh.pop %v1888
        %v1901 = vtanh.pop %v1889
        %v1902 = vtanh.pop %v1890
        %v1903 = vtanh.pop %v1891
        %v1904 = vtanh.pop %v1892
        %v1905 = vtanh.pop %v1893
        %v1906 = vtanh.pop %v1894
        %v1907 = vmul.f32 %v1895, 0.5
        %v1908 = vmul.f32 %v1896, 0.5
        %v1909 = vmul.f32 %v1897, 0.5
        %v1910 = vmul.f32 %v1898, 0.5
        %v1911 = vmul.f32 %v1899, 0.5
        %v1912 = vmul.f32 %v1900, 0.5
        %v1913 = vmul.f32 %v1901, 0.5
        %v1914 = vmul.f32 %v1902, 0.5
        %v1915 = vmul.f32 %v1903, 0.5
        %v1916 = vmul.f32 %v1904, 0.5
        %v1917 = vmul.f32 %v1905, 0.5
        %v1918 = vmul.f32 %v1906, 0.5
        %v1919 = vadd.f32 %v1907, 0.5
        %v1920 = vadd.f32 %v1908, 0.5
        %v1921 = vadd.f32 %v1909, 0.5
        %v1922 = vadd.f32 %v1910, 0.5
        %v1923 = vadd.f32 %v1911, 0.5
        %v1924 = vadd.f32 %v1912, 0.5
        %v1925 = vadd.f32 %v1913, 0.5
        %v1926 = vadd.f32 %v1914, 0.5
        %v1927 = vadd.f32 %v1915, 0.5
        %v1928 = vadd.f32 %v1916, 0.5
        %v1929 = vadd.f32 %v1917, 0.5
        %v1930 = vadd.f32 %v1918, 0.5
        %v1931 = vld [vmem:[%s7] sm:$0x7]
        %v1932 = vld [vmem:[%s8] sm:$0x7]
        %1934 = vset.pattern.permute.xlu0 0
        %1935 = vperm.xlu0 %1934, %v1932
        %v1936 = vpop.permute.xlu0 %1935
        %v1939 = vsel %vm1434, %v1931, 0
        %1941 = vmatprep.subr.mxu0 0.0
        %1942 = vmatpush1.msra.mxu0 0.0
        %1943 = vmatprep.subr.mxu0 0.0
        %1944 = vmatpush1.msra.mxu0 0.0
        %1945 = vmatprep.subr.mxu0 0.0
        %1946 = vmatpush1.msra.mxu0 0.0
        %1947 = vmatprep.subr.mxu0 0.0
        %1948 = vmatpush1.msra.mxu0 0.0
        %1949 = vmatprep.subr.mxu0 0.0
        %1950 = vmatpush1.msra.mxu0 0.0
        %1951 = vmatprep.subr.mxu0 0.0
        %1952 = vmatpush1.msra.mxu0 0.0
        %1953 = vmatprep.subr.mxu0 0.0
        %1954 = vmatpush1.msra.mxu0 0.0
        %1955 = vmatprep.subr.mxu0 0.0
        %1956 = vmatpush1.msra.mxu0 0.0
        %1957 = vmatprep.subr.mxu0 0.0
        %1958 = vmatpush1.msra.mxu0 0.0
        %1959 = vmatprep.subr.mxu0 0.0
        %1960 = vmatpush1.msra.mxu0 0.0
        %1961 = vmatprep.subr.mxu0 0.0
        %1962 = vmatpush1.msra.mxu0 0.0
        %1963 = vmatprep.subr.mxu0 0.0
        %1964 = vmatpush1.msra.mxu0 0.0
        %1965 = vmatprep.subr.mxu0 %v1929
        %1966 = vmatpush1.msra.mxu0 %v1928
        %1967 = vmatprep.subr.mxu0 %v1926
        %1968 = vmatpush1.msra.mxu0 %v1925
        %1969 = vmatprep.subr.mxu0 %v1923
        %1970 = vmatpush1.msra.mxu0 %v1922
        %1971 = vmatprep.subr.mxu0 %v1920
        %1972 = vmatpush1.msra.mxu0 %v1919
        %1973 = vmatprep.subr.mxu0 0.0
        %1974 = vmatpush2.msra.mxu0 0.0
        %1975 = vmatprep.subr.mxu0 0.0
        %1976 = vmatpush2.msra.mxu0 0.0
        %1977 = vmatprep.subr.mxu0 0.0
        %1978 = vmatpush2.msra.mxu0 0.0
        %1979 = vmatprep.subr.mxu0 0.0
        %1980 = vmatpush2.msra.mxu0 0.0
        %1981 = vmatprep.subr.mxu0 0.0
        %1982 = vmatpush2.msra.mxu0 0.0
        %1983 = vmatprep.subr.mxu0 0.0
        %1984 = vmatpush2.msra.mxu0 0.0
        %1985 = vmatprep.subr.mxu0 0.0
        %1986 = vmatpush2.msra.mxu0 0.0
        %1987 = vmatprep.subr.mxu0 0.0
        %1988 = vmatpush2.msra.mxu0 0.0
        %1989 = vmatprep.subr.mxu0 0.0
        %1990 = vmatpush2.msra.mxu0 0.0
        %1991 = vmatprep.subr.mxu0 0.0
        %1992 = vmatpush2.msra.mxu0 0.0
        %1993 = vmatprep.subr.mxu0 0.0
        %1994 = vmatpush2.msra.mxu0 0.0
        %1995 = vmatprep.subr.mxu0 0.0
        %1996 = vmatpush2.msra.mxu0 0.0
        %1997 = vmatprep.subr.mxu0 0.0
        %1998 = vmatpush2.msra.mxu0 0.0
        %1999 = vmatprep.subr.mxu0 0.0
        %2000 = vmatpush2.msra.mxu0 0.0
        %2001 = vmatprep.subr.mxu0 0.0
        %2002 = vmatpush2.msra.mxu0 0.0
        %2003 = vmatprep.subr.mxu0 0.0
        %2004 = vmatpush2.msra.mxu0 0.0
        %2005 = vmatprep.mubr.f32.mxu0 0.0
        %2006 = vmatmul.mubr.f32.gmra.mxu0 %v1939
        %v2007 = vpop.f32.mrf.mxu0
        %v2008 = vadd.f32 %v1936, %v2007
        %v2009 = vpop.f32.mrf.mxu0
        %v2010 = vadd.f32 %v1936, %v2009
        %2011 = vdwg.mxu0
        %2012 = vmatprep.subr.mxu0 0.0
        %2013 = vmatpush1.msra.mxu0 0.0
        %2014 = vmatprep.subr.mxu0 0.0
        %2015 = vmatpush1.msra.mxu0 0.0
        %2016 = vmatprep.subr.mxu0 0.0
        %2017 = vmatpush1.msra.mxu0 0.0
        %2018 = vmatprep.subr.mxu0 0.0
        %2019 = vmatpush1.msra.mxu0 0.0
        %2020 = vmatprep.subr.mxu0 0.0
        %2021 = vmatpush1.msra.mxu0 0.0
        %2022 = vmatprep.subr.mxu0 0.0
        %2023 = vmatpush1.msra.mxu0 0.0
        %2024 = vmatprep.subr.mxu0 0.0
        %2025 = vmatpush1.msra.mxu0 0.0
        %2026 = vmatprep.subr.mxu0 0.0
        %2027 = vmatpush1.msra.mxu0 0.0
        %2028 = vmatprep.subr.mxu0 0.0
        %2029 = vmatpush1.msra.mxu0 0.0
        %2030 = vmatprep.subr.mxu0 0.0
        %2031 = vmatpush1.msra.mxu0 0.0
        %2032 = vmatprep.subr.mxu0 0.0
        %2033 = vmatpush1.msra.mxu0 0.0
        %2034 = vmatprep.subr.mxu0 0.0
        %2035 = vmatpush1.msra.mxu0 0.0
        %2036 = vmatprep.subr.mxu0 0.0
        %2037 = vmatpush1.msra.mxu0 %v1930
        %2038 = vmatprep.subr.mxu0 0.0
        %2039 = vmatpush1.msra.mxu0 %v1927
        %2040 = vmatprep.subr.mxu0 0.0
        %2041 = vmatpush1.msra.mxu0 %v1924
        %2042 = vmatprep.subr.mxu0 0.0
        %2043 = vmatpush1.msra.mxu0 %v1921
        %2044 = vmatprep.subr.mxu0 0.0
        %2045 = vmatpush2.msra.mxu0 0.0
        %2046 = vmatprep.subr.mxu0 0.0
        %2047 = vmatpush2.msra.mxu0 0.0
        %2048 = vmatprep.subr.mxu0 0.0
        %2049 = vmatpush2.msra.mxu0 0.0
        %2050 = vmatprep.subr.mxu0 0.0
        %2051 = vmatpush2.msra.mxu0 0.0
        %2052 = vmatprep.subr.mxu0 0.0
        %2053 = vmatpush2.msra.mxu0 0.0
        %2054 = vmatprep.subr.mxu0 0.0
        %2055 = vmatpush2.msra.mxu0 0.0
        %2056 = vmatprep.subr.mxu0 0.0
        %2057 = vmatpush2.msra.mxu0 0.0
        %2058 = vmatprep.subr.mxu0 0.0
        %2059 = vmatpush2.msra.mxu0 0.0
        %2060 = vmatprep.subr.mxu0 0.0
        %2061 = vmatpush2.msra.mxu0 0.0
        %2062 = vmatprep.subr.mxu0 0.0
        %2063 = vmatpush2.msra.mxu0 0.0
        %2064 = vmatprep.subr.mxu0 0.0
        %2065 = vmatpush2.msra.mxu0 0.0
        %2066 = vmatprep.subr.mxu0 0.0
        %2067 = vmatpush2.msra.mxu0 0.0
        %2068 = vmatprep.subr.mxu0 0.0
        %2069 = vmatpush2.msra.mxu0 0.0
        %2070 = vmatprep.subr.mxu0 0.0
        %2071 = vmatpush2.msra.mxu0 0.0
        %2072 = vmatprep.subr.mxu0 0.0
        %2073 = vmatpush2.msra.mxu0 0.0
        %2074 = vmatprep.subr.mxu0 0.0
        %2075 = vmatpush2.msra.mxu0 0.0
        %2076 = vmatprep.mubr.f32.mxu0 0.0
        %2077 = vmatmul.mubr.f32.gmra.mxu0 %v1939
        %v2078 = vpop.f32.mrf.mxu0
        %v2079 = vadd.f32 %v1936, %v2078
        %v2080 = vpop.f32.mrf.mxu0
        %2081 = vdwg.mxu0
        %v2082 = vmul.f32 %v2008, 0.5
        %v2083 = vmul.f32 %v2010, 0.5
        %v2084 = vmul.f32 %v2079, 0.5
        %v2085 = vtanh.pop %v2082
        %v2086 = vtanh.pop %v2083
        %v2087 = vtanh.pop %v2084
        %v2088 = vmul.f32 %v2085, 0.5
        %v2089 = vmul.f32 %v2086, 0.5
        %v2090 = vmul.f32 %v2087, 0.5
        %v2091 = vadd.f32 %v2088, 0.5
        %v2092 = vadd.f32 %v2089, 0.5
        %v2093 = vadd.f32 %v2090, 0.5
        %v2094 = vadd.f32 %v1056, %v2091
        %v2095 = vadd.f32 %v1058, %v2092
        %v2096 = vadd.f32 %v1127, %v2093
        %v2097 = vld [vmem:[%s9] sm:$0xff]
        %v2098 = vld [vmem:[%s9 + $0x8] sm:$0xff]
        %v2099 = vld [vmem:[%s9 + $0x10] sm:$0xff]
        %v2100 = vld [vmem:[%s9 + $0x18] sm:$0xff]
        %v2101 = vld [vmem:[%s10] sm:$0xff]
        %v2102 = vld [vmem:[%s10 + $0x8] sm:$0xff]
        %v2103 = vld [vmem:[%s10 + $0x10] sm:$0xff]
        %v2104 = vld [vmem:[%s10 + $0x18] sm:$0xff]
        %2106 = vset.pattern.permute.xlu0 0
        %2107 = vperm.xlu0 %2106, %v2101
        %v2108 = vpop.permute.xlu0 %2107
        %2111 = vset.pattern.permute.xlu0 0
        %2112 = vperm.xlu0 %2111, %v2102
        %v2113 = vpop.permute.xlu0 %2112
        %2116 = vset.pattern.permute.xlu0 0
        %2117 = vperm.xlu0 %2116, %v2103
        %v2118 = vpop.permute.xlu0 %2117
        %2121 = vset.pattern.permute.xlu0 0
        %2122 = vperm.xlu0 %2121, %v2104
        %v2123 = vpop.permute.xlu0 %2122
        %vm2125 = vcmask 23552
        %v2127 = vsel %vm2125, %v2097, 0
        %v2130 = vsel %vm2125, %v2098, 0
        %v2133 = vsel %vm2125, %v2099, 0
        %v2136 = vsel %vm2125, %v2100, 0
        %vm2138 = vcmask 1042432
        %v2140 = vsel %vm2138, %v2094, 0
        %v2143 = vsel %vm2138, %v2095, 0
        %v2146 = vsel %vm2138, %v2096, 0
        %2148 = vmatprep.subr.mxu0 0.0
        %2149 = vmatpush1.msra.mxu0 0.0
        %2150 = vmatprep.subr.mxu0 0.0
        %2151 = vmatpush1.msra.mxu0 0.0
        %2152 = vmatprep.subr.mxu0 0.0
        %2153 = vmatpush1.msra.mxu0 0.0
        %2154 = vmatprep.subr.mxu0 0.0
        %2155 = vmatpush1.msra.mxu0 0.0
        %2156 = vmatprep.subr.mxu0 0.0
        %2157 = vmatpush1.msra.mxu0 0.0
        %2158 = vmatprep.subr.mxu0 0.0
        %2159 = vmatpush1.msra.mxu0 0.0
        %2160 = vmatprep.subr.mxu0 0.0
        %2161 = vmatpush1.msra.mxu0 0.0
        %2162 = vmatprep.subr.mxu0 0.0
        %2163 = vmatpush1.msra.mxu0 0.0
        %2164 = vmatprep.subr.mxu0 0.0
        %2165 = vmatpush1.msra.mxu0 0.0
        %2166 = vmatprep.subr.mxu0 0.0
        %2167 = vmatpush1.msra.mxu0 0.0
        %2168 = vmatprep.subr.mxu0 0.0
        %2169 = vmatpush1.msra.mxu0 0.0
        %2170 = vmatprep.subr.mxu0 0.0
        %2171 = vmatpush1.msra.mxu0 0.0
        %2172 = vmatprep.subr.mxu0 0.0
        %2173 = vmatpush1.msra.mxu0 0.0
        %2174 = vmatprep.subr.mxu0 0.0
        %2175 = vmatpush1.msra.mxu0 0.0
        %2176 = vmatprep.subr.mxu0 0.0
        %2177 = vmatpush1.msra.mxu0 0.0
        %2178 = vmatprep.subr.mxu0 %v2143
        %2179 = vmatpush1.msra.mxu0 %v2140
        %2180 = vmatprep.subr.mxu0 0.0
        %2181 = vmatpush2.msra.mxu0 0.0
        %2182 = vmatprep.subr.mxu0 0.0
        %2183 = vmatpush2.msra.mxu0 0.0
        %2184 = vmatprep.subr.mxu0 0.0
        %2185 = vmatpush2.msra.mxu0 0.0
        %2186 = vmatprep.subr.mxu0 0.0
        %2187 = vmatpush2.msra.mxu0 0.0
        %2188 = vmatprep.subr.mxu0 0.0
        %2189 = vmatpush2.msra.mxu0 0.0
        %2190 = vmatprep.subr.mxu0 0.0
        %2191 = vmatpush2.msra.mxu0 0.0
        %2192 = vmatprep.subr.mxu0 0.0
        %2193 = vmatpush2.msra.mxu0 0.0
        %2194 = vmatprep.subr.mxu0 0.0
        %2195 = vmatpush2.msra.mxu0 0.0
        %2196 = vmatprep.subr.mxu0 0.0
        %2197 = vmatpush2.msra.mxu0 0.0
        %2198 = vmatprep.subr.mxu0 0.0
        %2199 = vmatpush2.msra.mxu0 0.0
        %2200 = vmatprep.subr.mxu0 0.0
        %2201 = vmatpush2.msra.mxu0 0.0
        %2202 = vmatprep.subr.mxu0 0.0
        %2203 = vmatpush2.msra.mxu0 0.0
        %2204 = vmatprep.subr.mxu0 0.0
        %2205 = vmatpush2.msra.mxu0 0.0
        %2206 = vmatprep.subr.mxu0 0.0
        %2207 = vmatpush2.msra.mxu0 0.0
        %2208 = vmatprep.subr.mxu0 0.0
        %2209 = vmatpush2.msra.mxu0 0.0
        %2210 = vmatprep.subr.mxu0 0.0
        %2211 = vmatpush2.msra.mxu0 0.0
        %2212 = vmatprep.mubr.f32.mxu0 0.0
        %2213 = vmatmul.mubr.f32.gmra.mxu0 %v2127
        %v2214 = vpop.f32.mrf.mxu0
        %v2215 = vadd.f32 %v2108, %v2214
        %v2216 = vpop.f32.mrf.mxu0
        %v2217 = vadd.f32 %v2108, %v2216
        %2218 = vmatprep.mubr.f32.mxu0 0.0
        %2219 = vmatmul.mubr.f32.gmra.mxu0 %v2130
        %v2220 = vpop.f32.mrf.mxu0
        %v2221 = vadd.f32 %v2113, %v2220
        %v2222 = vpop.f32.mrf.mxu0
        %v2223 = vadd.f32 %v2113, %v2222
        %2224 = vmatprep.mubr.f32.mxu0 0.0
        %2225 = vmatmul.mubr.f32.gmra.mxu0 %v2133
        %v2226 = vpop.f32.mrf.mxu0
        %v2227 = vadd.f32 %v2118, %v2226
        %v2228 = vpop.f32.mrf.mxu0
        %v2229 = vadd.f32 %v2118, %v2228
        %2230 = vmatprep.mubr.f32.mxu0 0.0
        %2231 = vmatmul.mubr.f32.gmra.mxu0 %v2136
        %v2232 = vpop.f32.mrf.mxu0
        %v2233 = vadd.f32 %v2123, %v2232
        %v2234 = vpop.f32.mrf.mxu0
        %v2235 = vadd.f32 %v2123, %v2234
        %2236 = vdwg.mxu0
        %2237 = vmatprep.subr.mxu0 0.0
        %2238 = vmatpush1.msra.mxu0 0.0
        %2239 = vmatprep.subr.mxu0 0.0
        %2240 = vmatpush1.msra.mxu0 0.0
        %2241 = vmatprep.subr.mxu0 0.0
        %2242 = vmatpush1.msra.mxu0 0.0
        %2243 = vmatprep.subr.mxu0 0.0
        %2244 = vmatpush1.msra.mxu0 0.0
        %2245 = vmatprep.subr.mxu0 0.0
        %2246 = vmatpush1.msra.mxu0 0.0
        %2247 = vmatprep.subr.mxu0 0.0
        %2248 = vmatpush1.msra.mxu0 0.0
        %2249 = vmatprep.subr.mxu0 0.0
        %2250 = vmatpush1.msra.mxu0 0.0
        %2251 = vmatprep.subr.mxu0 0.0
        %2252 = vmatpush1.msra.mxu0 0.0
        %2253 = vmatprep.subr.mxu0 0.0
        %2254 = vmatpush1.msra.mxu0 0.0
        %2255 = vmatprep.subr.mxu0 0.0
        %2256 = vmatpush1.msra.mxu0 0.0
        %2257 = vmatprep.subr.mxu0 0.0
        %2258 = vmatpush1.msra.mxu0 0.0
        %2259 = vmatprep.subr.mxu0 0.0
        %2260 = vmatpush1.msra.mxu0 0.0
        %2261 = vmatprep.subr.mxu0 0.0
        %2262 = vmatpush1.msra.mxu0 0.0
        %2263 = vmatprep.subr.mxu0 0.0
        %2264 = vmatpush1.msra.mxu0 0.0
        %2265 = vmatprep.subr.mxu0 0.0
        %2266 = vmatpush1.msra.mxu0 0.0
        %2267 = vmatprep.subr.mxu0 0.0
        %2268 = vmatpush1.msra.mxu0 %v2146
        %2269 = vmatprep.subr.mxu0 0.0
        %2270 = vmatpush2.msra.mxu0 0.0
        %2271 = vmatprep.subr.mxu0 0.0
        %2272 = vmatpush2.msra.mxu0 0.0
        %2273 = vmatprep.subr.mxu0 0.0
        %2274 = vmatpush2.msra.mxu0 0.0
        %2275 = vmatprep.subr.mxu0 0.0
        %2276 = vmatpush2.msra.mxu0 0.0
        %2277 = vmatprep.subr.mxu0 0.0
        %2278 = vmatpush2.msra.mxu0 0.0
        %2279 = vmatprep.subr.mxu0 0.0
        %2280 = vmatpush2.msra.mxu0 0.0
        %2281 = vmatprep.subr.mxu0 0.0
        %2282 = vmatpush2.msra.mxu0 0.0
        %2283 = vmatprep.subr.mxu0 0.0
        %2284 = vmatpush2.msra.mxu0 0.0
        %2285 = vmatprep.subr.mxu0 0.0
        %2286 = vmatpush2.msra.mxu0 0.0
        %2287 = vmatprep.subr.mxu0 0.0
        %2288 = vmatpush2.msra.mxu0 0.0
        %2289 = vmatprep.subr.mxu0 0.0
        %2290 = vmatpush2.msra.mxu0 0.0
        %2291 = vmatprep.subr.mxu0 0.0
        %2292 = vmatpush2.msra.mxu0 0.0
        %2293 = vmatprep.subr.mxu0 0.0
        %2294 = vmatpush2.msra.mxu0 0.0
        %2295 = vmatprep.subr.mxu0 0.0
        %2296 = vmatpush2.msra.mxu0 0.0
        %2297 = vmatprep.subr.mxu0 0.0
        %2298 = vmatpush2.msra.mxu0 0.0
        %2299 = vmatprep.subr.mxu0 0.0
        %2300 = vmatpush2.msra.mxu0 0.0
        %2301 = vmatprep.mubr.f32.mxu0 0.0
        %2302 = vmatmul.mubr.f32.gmra.mxu0 %v2127
        %v2303 = vpop.f32.mrf.mxu0
        %v2304 = vadd.f32 %v2108, %v2303
        %v2305 = vpop.f32.mrf.mxu0
        %2306 = vmatprep.mubr.f32.mxu0 0.0
        %2307 = vmatmul.mubr.f32.gmra.mxu0 %v2130
        %v2308 = vpop.f32.mrf.mxu0
        %v2309 = vadd.f32 %v2113, %v2308
        %v2310 = vpop.f32.mrf.mxu0
        %2311 = vmatprep.mubr.f32.mxu0 0.0
        %2312 = vmatmul.mubr.f32.gmra.mxu0 %v2133
        %v2313 = vpop.f32.mrf.mxu0
        %v2314 = vadd.f32 %v2118, %v2313
        %v2315 = vpop.f32.mrf.mxu0
        %2316 = vmatprep.mubr.f32.mxu0 0.0
        %2317 = vmatmul.mubr.f32.gmra.mxu0 %v2136
        %v2318 = vpop.f32.mrf.mxu0
        %v2319 = vadd.f32 %v2123, %v2318
        %v2320 = vpop.f32.mrf.mxu0
        %2321 = vdwg.mxu0
        %v2322 = vmul.f32 %v2215, 0.5
        %v2323 = vmul.f32 %v2217, 0.5
        %v2324 = vmul.f32 %v2304, 0.5
        %v2325 = vmul.f32 %v2221, 0.5
        %v2326 = vmul.f32 %v2223, 0.5
        %v2327 = vmul.f32 %v2309, 0.5
        %v2328 = vmul.f32 %v2227, 0.5
        %v2329 = vmul.f32 %v2229, 0.5
        %v2330 = vmul.f32 %v2314, 0.5
        %v2331 = vmul.f32 %v2233, 0.5
        %v2332 = vmul.f32 %v2235, 0.5
        %v2333 = vmul.f32 %v2319, 0.5
        %v2334 = vtanh.pop %v2322
        %v2335 = vtanh.pop %v2323
        %v2336 = vtanh.pop %v2324
        %v2337 = vtanh.pop %v2325
        %v2338 = vtanh.pop %v2326
        %v2339 = vtanh.pop %v2327
        %v2340 = vtanh.pop %v2328
        %v2341 = vtanh.pop %v2329
        %v2342 = vtanh.pop %v2330
        %v2343 = vtanh.pop %v2331
        %v2344 = vtanh.pop %v2332
        %v2345 = vtanh.pop %v2333
        %v2346 = vmul.f32 %v2334, 0.5
        %v2347 = vmul.f32 %v2335, 0.5
        %v2348 = vmul.f32 %v2336, 0.5
        %v2349 = vmul.f32 %v2337, 0.5
        %v2350 = vmul.f32 %v2338, 0.5
        %v2351 = vmul.f32 %v2339, 0.5
        %v2352 = vmul.f32 %v2340, 0.5
        %v2353 = vmul.f32 %v2341, 0.5
        %v2354 = vmul.f32 %v2342, 0.5
        %v2355 = vmul.f32 %v2343, 0.5
        %v2356 = vmul.f32 %v2344, 0.5
        %v2357 = vmul.f32 %v2345, 0.5
        %v2358 = vadd.f32 %v2346, 0.5
        %v2359 = vadd.f32 %v2347, 0.5
        %v2360 = vadd.f32 %v2348, 0.5
        %v2361 = vadd.f32 %v2349, 0.5
        %v2362 = vadd.f32 %v2350, 0.5
        %v2363 = vadd.f32 %v2351, 0.5
        %v2364 = vadd.f32 %v2352, 0.5
        %v2365 = vadd.f32 %v2353, 0.5
        %v2366 = vadd.f32 %v2354, 0.5
        %v2367 = vadd.f32 %v2355, 0.5
        %v2368 = vadd.f32 %v2356, 0.5
        %v2369 = vadd.f32 %v2357, 0.5
        %v2370 = vld [vmem:[%s11] sm:$0xff]
        %v2371 = vld [vmem:[%s11 + $0x8] sm:$0xff]
        %v2372 = vld [vmem:[%s11 + $0x10] sm:$0xff]
        %v2373 = vld [vmem:[%s11 + $0x18] sm:$0xff]
        %v2374 = vld [vmem:[%s12] sm:$0xff]
        %v2375 = vld [vmem:[%s12 + $0x8] sm:$0xff]
        %v2376 = vld [vmem:[%s12 + $0x10] sm:$0xff]
        %v2377 = vld [vmem:[%s12 + $0x18] sm:$0xff]
        %2379 = vset.pattern.permute.xlu0 0
        %2380 = vperm.xlu0 %2379, %v2374
        %v2381 = vpop.permute.xlu0 %2380
        %2384 = vset.pattern.permute.xlu0 0
        %2385 = vperm.xlu0 %2384, %v2375
        %v2386 = vpop.permute.xlu0 %2385
        %2389 = vset.pattern.permute.xlu0 0
        %2390 = vperm.xlu0 %2389, %v2376
        %v2391 = vpop.permute.xlu0 %2390
        %2394 = vset.pattern.permute.xlu0 0
        %2395 = vperm.xlu0 %2394, %v2377
        %v2396 = vpop.permute.xlu0 %2395
        %v2399 = vsel %vm1434, %v2370, 0
        %v2402 = vsel %vm1434, %v2371, 0
        %v2405 = vsel %vm1434, %v2372, 0
        %v2408 = vsel %vm1434, %v2373, 0
        %2410 = vmatprep.subr.mxu0 0.0
        %2411 = vmatpush1.msra.mxu0 0.0
        %2412 = vmatprep.subr.mxu0 0.0
        %2413 = vmatpush1.msra.mxu0 0.0
        %2414 = vmatprep.subr.mxu0 0.0
        %2415 = vmatpush1.msra.mxu0 0.0
        %2416 = vmatprep.subr.mxu0 0.0
        %2417 = vmatpush1.msra.mxu0 0.0
        %2418 = vmatprep.subr.mxu0 0.0
        %2419 = vmatpush1.msra.mxu0 0.0
        %2420 = vmatprep.subr.mxu0 0.0
        %2421 = vmatpush1.msra.mxu0 0.0
        %2422 = vmatprep.subr.mxu0 0.0
        %2423 = vmatpush1.msra.mxu0 0.0
        %2424 = vmatprep.subr.mxu0 0.0
        %2425 = vmatpush1.msra.mxu0 0.0
        %2426 = vmatprep.subr.mxu0 0.0
        %2427 = vmatpush1.msra.mxu0 0.0
        %2428 = vmatprep.subr.mxu0 0.0
        %2429 = vmatpush1.msra.mxu0 0.0
        %2430 = vmatprep.subr.mxu0 0.0
        %2431 = vmatpush1.msra.mxu0 0.0
        %2432 = vmatprep.subr.mxu0 0.0
        %2433 = vmatpush1.msra.mxu0 0.0
        %2434 = vmatprep.subr.mxu0 %v2368
        %2435 = vmatpush1.msra.mxu0 %v2367
        %2436 = vmatprep.subr.mxu0 %v2365
        %2437 = vmatpush1.msra.mxu0 %v2364
        %2438 = vmatprep.subr.mxu0 %v2362
        %2439 = vmatpush1.msra.mxu0 %v2361
        %2440 = vmatprep.subr.mxu0 %v2359
        %2441 = vmatpush1.msra.mxu0 %v2358
        %2442 = vmatprep.subr.mxu0 0.0
        %2443 = vmatpush2.msra.mxu0 0.0
        %2444 = vmatprep.subr.mxu0 0.0
        %2445 = vmatpush2.msra.mxu0 0.0
        %2446 = vmatprep.subr.mxu0 0.0
        %2447 = vmatpush2.msra.mxu0 0.0
        %2448 = vmatprep.subr.mxu0 0.0
        %2449 = vmatpush2.msra.mxu0 0.0
        %2450 = vmatprep.subr.mxu0 0.0
        %2451 = vmatpush2.msra.mxu0 0.0
        %2452 = vmatprep.subr.mxu0 0.0
        %2453 = vmatpush2.msra.mxu0 0.0
        %2454 = vmatprep.subr.mxu0 0.0
        %2455 = vmatpush2.msra.mxu0 0.0
        %2456 = vmatprep.subr.mxu0 0.0
        %2457 = vmatpush2.msra.mxu0 0.0
        %2458 = vmatprep.subr.mxu0 0.0
        %2459 = vmatpush2.msra.mxu0 0.0
        %2460 = vmatprep.subr.mxu0 0.0
        %2461 = vmatpush2.msra.mxu0 0.0
        %2462 = vmatprep.subr.mxu0 0.0
        %2463 = vmatpush2.msra.mxu0 0.0
        %2464 = vmatprep.subr.mxu0 0.0
        %2465 = vmatpush2.msra.mxu0 0.0
        %2466 = vmatprep.subr.mxu0 0.0
        %2467 = vmatpush2.msra.mxu0 0.0
        %2468 = vmatprep.subr.mxu0 0.0
        %2469 = vmatpush2.msra.mxu0 0.0
        %2470 = vmatprep.subr.mxu0 0.0
        %2471 = vmatpush2.msra.mxu0 0.0
        %2472 = vmatprep.subr.mxu0 0.0
        %2473 = vmatpush2.msra.mxu0 0.0
        %2474 = vmatprep.mubr.f32.mxu0 0.0
        %2475 = vmatmul.mubr.f32.gmra.mxu0 %v2399
        %v2476 = vpop.f32.mrf.mxu0
        %v2477 = vadd.f32 %v2381, %v2476
        %v2478 = vpop.f32.mrf.mxu0
        %v2479 = vadd.f32 %v2381, %v2478
        %2480 = vmatprep.mubr.f32.mxu0 0.0
        %2481 = vmatmul.mubr.f32.gmra.mxu0 %v2402
        %v2482 = vpop.f32.mrf.mxu0
        %v2483 = vadd.f32 %v2386, %v2482
        %v2484 = vpop.f32.mrf.mxu0
        %v2485 = vadd.f32 %v2386, %v2484
        %2486 = vmatprep.mubr.f32.mxu0 0.0
        %2487 = vmatmul.mubr.f32.gmra.mxu0 %v2405
        %v2488 = vpop.f32.mrf.mxu0
        %v2489 = vadd.f32 %v2391, %v2488
        %v2490 = vpop.f32.mrf.mxu0
        %v2491 = vadd.f32 %v2391, %v2490
        %2492 = vmatprep.mubr.f32.mxu0 0.0
        %2493 = vmatmul.mubr.f32.gmra.mxu0 %v2408
        %v2494 = vpop.f32.mrf.mxu0
        %v2495 = vadd.f32 %v2396, %v2494
        %v2496 = vpop.f32.mrf.mxu0
        %v2497 = vadd.f32 %v2396, %v2496
        %2498 = vdwg.mxu0
        %2499 = vmatprep.subr.mxu0 0.0
        %2500 = vmatpush1.msra.mxu0 0.0
        %2501 = vmatprep.subr.mxu0 0.0
        %2502 = vmatpush1.msra.mxu0 0.0
        %2503 = vmatprep.subr.mxu0 0.0
        %2504 = vmatpush1.msra.mxu0 0.0
        %2505 = vmatprep.subr.mxu0 0.0
        %2506 = vmatpush1.msra.mxu0 0.0
        %2507 = vmatprep.subr.mxu0 0.0
        %2508 = vmatpush1.msra.mxu0 0.0
        %2509 = vmatprep.subr.mxu0 0.0
        %2510 = vmatpush1.msra.mxu0 0.0
        %2511 = vmatprep.subr.mxu0 0.0
        %2512 = vmatpush1.msra.mxu0 0.0
        %2513 = vmatprep.subr.mxu0 0.0
        %2514 = vmatpush1.msra.mxu0 0.0
        %2515 = vmatprep.subr.mxu0 0.0
        %2516 = vmatpush1.msra.mxu0 0.0
        %2517 = vmatprep.subr.mxu0 0.0
        %2518 = vmatpush1.msra.mxu0 0.0
        %2519 = vmatprep.subr.mxu0 0.0
        %2520 = vmatpush1.msra.mxu0 0.0
        %2521 = vmatprep.subr.mxu0 0.0
        %2522 = vmatpush1.msra.mxu0 0.0
        %2523 = vmatprep.subr.mxu0 0.0
        %2524 = vmatpush1.msra.mxu0 %v2369
        %2525 = vmatprep.subr.mxu0 0.0
        %2526 = vmatpush1.msra.mxu0 %v2366
        %2527 = vmatprep.subr.mxu0 0.0
        %2528 = vmatpush1.msra.mxu0 %v2363
        %2529 = vmatprep.subr.mxu0 0.0
        %2530 = vmatpush1.msra.mxu0 %v2360
        %2531 = vmatprep.subr.mxu0 0.0
        %2532 = vmatpush2.msra.mxu0 0.0
        %2533 = vmatprep.subr.mxu0 0.0
        %2534 = vmatpush2.msra.mxu0 0.0
        %2535 = vmatprep.subr.mxu0 0.0
        %2536 = vmatpush2.msra.mxu0 0.0
        %2537 = vmatprep.subr.mxu0 0.0
        %2538 = vmatpush2.msra.mxu0 0.0
        %2539 = vmatprep.subr.mxu0 0.0
        %2540 = vmatpush2.msra.mxu0 0.0
        %2541 = vmatprep.subr.mxu0 0.0
        %2542 = vmatpush2.msra.mxu0 0.0
        %2543 = vmatprep.subr.mxu0 0.0
        %2544 = vmatpush2.msra.mxu0 0.0
        %2545 = vmatprep.subr.mxu0 0.0
        %2546 = vmatpush2.msra.mxu0 0.0
        %2547 = vmatprep.subr.mxu0 0.0
        %2548 = vmatpush2.msra.mxu0 0.0
        %2549 = vmatprep.subr.mxu0 0.0
        %2550 = vmatpush2.msra.mxu0 0.0
        %2551 = vmatprep.subr.mxu0 0.0
        %2552 = vmatpush2.msra.mxu0 0.0
        %2553 = vmatprep.subr.mxu0 0.0
        %2554 = vmatpush2.msra.mxu0 0.0
        %2555 = vmatprep.subr.mxu0 0.0
        %2556 = vmatpush2.msra.mxu0 0.0
        %2557 = vmatprep.subr.mxu0 0.0
        %2558 = vmatpush2.msra.mxu0 0.0
        %2559 = vmatprep.subr.mxu0 0.0
        %2560 = vmatpush2.msra.mxu0 0.0
        %2561 = vmatprep.subr.mxu0 0.0
        %2562 = vmatpush2.msra.mxu0 0.0
        %2563 = vmatprep.mubr.f32.mxu0 0.0
        %2564 = vmatmul.mubr.f32.gmra.mxu0 %v2399
        %v2565 = vpop.f32.mrf.mxu0
        %v2566 = vadd.f32 %v2381, %v2565
        %v2567 = vpop.f32.mrf.mxu0
        %2568 = vmatprep.mubr.f32.mxu0 0.0
        %2569 = vmatmul.mubr.f32.gmra.mxu0 %v2402
        %v2570 = vpop.f32.mrf.mxu0
        %v2571 = vadd.f32 %v2386, %v2570
        %v2572 = vpop.f32.mrf.mxu0
        %2573 = vmatprep.mubr.f32.mxu0 0.0
        %2574 = vmatmul.mubr.f32.gmra.mxu0 %v2405
        %v2575 = vpop.f32.mrf.mxu0
        %v2576 = vadd.f32 %v2391, %v2575
        %v2577 = vpop.f32.mrf.mxu0
        %2578 = vmatprep.mubr.f32.mxu0 0.0
        %2579 = vmatmul.mubr.f32.gmra.mxu0 %v2408
        %v2580 = vpop.f32.mrf.mxu0
        %v2581 = vadd.f32 %v2396, %v2580
        %v2582 = vpop.f32.mrf.mxu0
        %2583 = vdwg.mxu0
        %v2584 = vmul.f32 %v2477, 0.5
        %v2585 = vmul.f32 %v2479, 0.5
        %v2586 = vmul.f32 %v2566, 0.5
        %v2587 = vmul.f32 %v2483, 0.5
        %v2588 = vmul.f32 %v2485, 0.5
        %v2589 = vmul.f32 %v2571, 0.5
        %v2590 = vmul.f32 %v2489, 0.5
        %v2591 = vmul.f32 %v2491, 0.5
        %v2592 = vmul.f32 %v2576, 0.5
        %v2593 = vmul.f32 %v2495, 0.5
        %v2594 = vmul.f32 %v2497, 0.5
        %v2595 = vmul.f32 %v2581, 0.5
        %v2596 = vtanh.pop %v2584
        %v2597 = vtanh.pop %v2585
        %v2598 = vtanh.pop %v2586
        %v2599 = vtanh.pop %v2587
        %v2600 = vtanh.pop %v2588
        %v2601 = vtanh.pop %v2589
        %v2602 = vtanh.pop %v2590
        %v2603 = vtanh.pop %v2591
        %v2604 = vtanh.pop %v2592
        %v2605 = vtanh.pop %v2593
        %v2606 = vtanh.pop %v2594
        %v2607 = vtanh.pop %v2595
        %v2608 = vmul.f32 %v2596, 0.5
        %v2609 = vmul.f32 %v2597, 0.5
        %v2610 = vmul.f32 %v2598, 0.5
        %v2611 = vmul.f32 %v2599, 0.5
        %v2612 = vmul.f32 %v2600, 0.5
        %v2613 = vmul.f32 %v2601, 0.5
        %v2614 = vmul.f32 %v2602, 0.5
        %v2615 = vmul.f32 %v2603, 0.5
        %v2616 = vmul.f32 %v2604, 0.5
        %v2617 = vmul.f32 %v2605, 0.5
        %v2618 = vmul.f32 %v2606, 0.5
        %v2619 = vmul.f32 %v2607, 0.5
        %v2620 = vadd.f32 %v2608, 0.5
        %v2621 = vadd.f32 %v2609, 0.5
        %v2622 = vadd.f32 %v2610, 0.5
        %v2623 = vadd.f32 %v2611, 0.5
        %v2624 = vadd.f32 %v2612, 0.5
        %v2625 = vadd.f32 %v2613, 0.5
        %v2626 = vadd.f32 %v2614, 0.5
        %v2627 = vadd.f32 %v2615, 0.5
        %v2628 = vadd.f32 %v2616, 0.5
        %v2629 = vadd.f32 %v2617, 0.5
        %v2630 = vadd.f32 %v2618, 0.5
        %v2631 = vadd.f32 %v2619, 0.5
        %v2632 = vld [vmem:[%s13] sm:$0xff]
        %v2633 = vld [vmem:[%s13 + $0x8] sm:$0xff]
        %v2634 = vld [vmem:[%s13 + $0x10] sm:$0xff]
        %v2635 = vld [vmem:[%s13 + $0x18] sm:$0xff]
        %v2636 = vld [vmem:[%s14] sm:$0xff]
        %v2637 = vld [vmem:[%s14 + $0x8] sm:$0xff]
        %v2638 = vld [vmem:[%s14 + $0x10] sm:$0xff]
        %v2639 = vld [vmem:[%s14 + $0x18] sm:$0xff]
        %2641 = vset.pattern.permute.xlu0 0
        %2642 = vperm.xlu0 %2641, %v2636
        %v2643 = vpop.permute.xlu0 %2642
        %2646 = vset.pattern.permute.xlu0 0
        %2647 = vperm.xlu0 %2646, %v2637
        %v2648 = vpop.permute.xlu0 %2647
        %2651 = vset.pattern.permute.xlu0 0
        %2652 = vperm.xlu0 %2651, %v2638
        %v2653 = vpop.permute.xlu0 %2652
        %2656 = vset.pattern.permute.xlu0 0
        %2657 = vperm.xlu0 %2656, %v2639
        %v2658 = vpop.permute.xlu0 %2657
        %v2661 = vsel %vm1434, %v2632, 0
        %v2664 = vsel %vm1434, %v2633, 0
        %v2667 = vsel %vm1434, %v2634, 0
        %v2670 = vsel %vm1434, %v2635, 0
        %2672 = vmatprep.subr.mxu0 0.0
        %2673 = vmatpush1.msra.mxu0 0.0
        %2674 = vmatprep.subr.mxu0 0.0
        %2675 = vmatpush1.msra.mxu0 0.0
        %2676 = vmatprep.subr.mxu0 0.0
        %2677 = vmatpush1.msra.mxu0 0.0
        %2678 = vmatprep.subr.mxu0 0.0
        %2679 = vmatpush1.msra.mxu0 0.0
        %2680 = vmatprep.subr.mxu0 0.0
        %2681 = vmatpush1.msra.mxu0 0.0
        %2682 = vmatprep.subr.mxu0 0.0
        %2683 = vmatpush1.msra.mxu0 0.0
        %2684 = vmatprep.subr.mxu0 0.0
        %2685 = vmatpush1.msra.mxu0 0.0
        %2686 = vmatprep.subr.mxu0 0.0
        %2687 = vmatpush1.msra.mxu0 0.0
        %2688 = vmatprep.subr.mxu0 0.0
        %2689 = vmatpush1.msra.mxu0 0.0
        %2690 = vmatprep.subr.mxu0 0.0
        %2691 = vmatpush1.msra.mxu0 0.0
        %2692 = vmatprep.subr.mxu0 0.0
        %2693 = vmatpush1.msra.mxu0 0.0
        %2694 = vmatprep.subr.mxu0 0.0
        %2695 = vmatpush1.msra.mxu0 0.0
        %2696 = vmatprep.subr.mxu0 %v2630
        %2697 = vmatpush1.msra.mxu0 %v2629
        %2698 = vmatprep.subr.mxu0 %v2627
        %2699 = vmatpush1.msra.mxu0 %v2626
        %2700 = vmatprep.subr.mxu0 %v2624
        %2701 = vmatpush1.msra.mxu0 %v2623
        %2702 = vmatprep.subr.mxu0 %v2621
        %2703 = vmatpush1.msra.mxu0 %v2620
        %2704 = vmatprep.subr.mxu0 0.0
        %2705 = vmatpush2.msra.mxu0 0.0
        %2706 = vmatprep.subr.mxu0 0.0
        %2707 = vmatpush2.msra.mxu0 0.0
        %2708 = vmatprep.subr.mxu0 0.0
        %2709 = vmatpush2.msra.mxu0 0.0
        %2710 = vmatprep.subr.mxu0 0.0
        %2711 = vmatpush2.msra.mxu0 0.0
        %2712 = vmatprep.subr.mxu0 0.0
        %2713 = vmatpush2.msra.mxu0 0.0
        %2714 = vmatprep.subr.mxu0 0.0
        %2715 = vmatpush2.msra.mxu0 0.0
        %2716 = vmatprep.subr.mxu0 0.0
        %2717 = vmatpush2.msra.mxu0 0.0
        %2718 = vmatprep.subr.mxu0 0.0
        %2719 = vmatpush2.msra.mxu0 0.0
        %2720 = vmatprep.subr.mxu0 0.0
        %2721 = vmatpush2.msra.mxu0 0.0
        %2722 = vmatprep.subr.mxu0 0.0
        %2723 = vmatpush2.msra.mxu0 0.0
        %2724 = vmatprep.subr.mxu0 0.0
        %2725 = vmatpush2.msra.mxu0 0.0
        %2726 = vmatprep.subr.mxu0 0.0
        %2727 = vmatpush2.msra.mxu0 0.0
        %2728 = vmatprep.subr.mxu0 0.0
        %2729 = vmatpush2.msra.mxu0 0.0
        %2730 = vmatprep.subr.mxu0 0.0
        %2731 = vmatpush2.msra.mxu0 0.0
        %2732 = vmatprep.subr.mxu0 0.0
        %2733 = vmatpush2.msra.mxu0 0.0
        %2734 = vmatprep.subr.mxu0 0.0
        %2735 = vmatpush2.msra.mxu0 0.0
        %2736 = vmatprep.mubr.f32.mxu0 0.0
        %2737 = vmatmul.mubr.f32.gmra.mxu0 %v2661
        %v2738 = vpop.f32.mrf.mxu0
        %v2739 = vadd.f32 %v2643, %v2738
        %v2740 = vpop.f32.mrf.mxu0
        %v2741 = vadd.f32 %v2643, %v2740
        %2742 = vmatprep.mubr.f32.mxu0 0.0
        %2743 = vmatmul.mubr.f32.gmra.mxu0 %v2664
        %v2744 = vpop.f32.mrf.mxu0
        %v2745 = vadd.f32 %v2648, %v2744
        %v2746 = vpop.f32.mrf.mxu0
        %v2747 = vadd.f32 %v2648, %v2746
        %2748 = vmatprep.mubr.f32.mxu0 0.0
        %2749 = vmatmul.mubr.f32.gmra.mxu0 %v2667
        %v2750 = vpop.f32.mrf.mxu0
        %v2751 = vadd.f32 %v2653, %v2750
        %v2752 = vpop.f32.mrf.mxu0
        %v2753 = vadd.f32 %v2653, %v2752
        %2754 = vmatprep.mubr.f32.mxu0 0.0
        %2755 = vmatmul.mubr.f32.gmra.mxu0 %v2670
        %v2756 = vpop.f32.mrf.mxu0
        %v2757 = vadd.f32 %v2658, %v2756
        %v2758 = vpop.f32.mrf.mxu0
        %v2759 = vadd.f32 %v2658, %v2758
        %2760 = vdwg.mxu0
        %2761 = vmatprep.subr.mxu0 0.0
        %2762 = vmatpush1.msra.mxu0 0.0
        %2763 = vmatprep.subr.mxu0 0.0
        %2764 = vmatpush1.msra.mxu0 0.0
        %2765 = vmatprep.subr.mxu0 0.0
        %2766 = vmatpush1.msra.mxu0 0.0
        %2767 = vmatprep.subr.mxu0 0.0
        %2768 = vmatpush1.msra.mxu0 0.0
        %2769 = vmatprep.subr.mxu0 0.0
        %2770 = vmatpush1.msra.mxu0 0.0
        %2771 = vmatprep.subr.mxu0 0.0
        %2772 = vmatpush1.msra.mxu0 0.0
        %2773 = vmatprep.subr.mxu0 0.0
        %2774 = vmatpush1.msra.mxu0 0.0
        %2775 = vmatprep.subr.mxu0 0.0
        %2776 = vmatpush1.msra.mxu0 0.0
        %2777 = vmatprep.subr.mxu0 0.0
        %2778 = vmatpush1.msra.mxu0 0.0
        %2779 = vmatprep.subr.mxu0 0.0
        %2780 = vmatpush1.msra.mxu0 0.0
        %2781 = vmatprep.subr.mxu0 0.0
        %2782 = vmatpush1.msra.mxu0 0.0
        %2783 = vmatprep.subr.mxu0 0.0
        %2784 = vmatpush1.msra.mxu0 0.0
        %2785 = vmatprep.subr.mxu0 0.0
        %2786 = vmatpush1.msra.mxu0 %v2631
        %2787 = vmatprep.subr.mxu0 0.0
        %2788 = vmatpush1.msra.mxu0 %v2628
        %2789 = vmatprep.subr.mxu0 0.0
        %2790 = vmatpush1.msra.mxu0 %v2625
        %2791 = vmatprep.subr.mxu0 0.0
        %2792 = vmatpush1.msra.mxu0 %v2622
        %2793 = vmatprep.subr.mxu0 0.0
        %2794 = vmatpush2.msra.mxu0 0.0
        %2795 = vmatprep.subr.mxu0 0.0
        %2796 = vmatpush2.msra.mxu0 0.0
        %2797 = vmatprep.subr.mxu0 0.0
        %2798 = vmatpush2.msra.mxu0 0.0
        %2799 = vmatprep.subr.mxu0 0.0
        %2800 = vmatpush2.msra.mxu0 0.0
        %2801 = vmatprep.subr.mxu0 0.0
        %2802 = vmatpush2.msra.mxu0 0.0
        %2803 = vmatprep.subr.mxu0 0.0
        %2804 = vmatpush2.msra.mxu0 0.0
        %2805 = vmatprep.subr.mxu0 0.0
        %2806 = vmatpush2.msra.mxu0 0.0
        %2807 = vmatprep.subr.mxu0 0.0
        %2808 = vmatpush2.msra.mxu0 0.0
        %2809 = vmatprep.subr.mxu0 0.0
        %2810 = vmatpush2.msra.mxu0 0.0
        %2811 = vmatprep.subr.mxu0 0.0
        %2812 = vmatpush2.msra.mxu0 0.0
        %2813 = vmatprep.subr.mxu0 0.0
        %2814 = vmatpush2.msra.mxu0 0.0
        %2815 = vmatprep.subr.mxu0 0.0
        %2816 = vmatpush2.msra.mxu0 0.0
        %2817 = vmatprep.subr.mxu0 0.0
        %2818 = vmatpush2.msra.mxu0 0.0
        %2819 = vmatprep.subr.mxu0 0.0
        %2820 = vmatpush2.msra.mxu0 0.0
        %2821 = vmatprep.subr.mxu0 0.0
        %2822 = vmatpush2.msra.mxu0 0.0
        %2823 = vmatprep.subr.mxu0 0.0
        %2824 = vmatpush2.msra.mxu0 0.0
        %2825 = vmatprep.mubr.f32.mxu0 0.0
        %2826 = vmatmul.mubr.f32.gmra.mxu0 %v2661
        %v2827 = vpop.f32.mrf.mxu0
        %v2828 = vadd.f32 %v2643, %v2827
        %v2829 = vpop.f32.mrf.mxu0
        %2830 = vmatprep.mubr.f32.mxu0 0.0
        %2831 = vmatmul.mubr.f32.gmra.mxu0 %v2664
        %v2832 = vpop.f32.mrf.mxu0
        %v2833 = vadd.f32 %v2648, %v2832
        %v2834 = vpop.f32.mrf.mxu0
        %2835 = vmatprep.mubr.f32.mxu0 0.0
        %2836 = vmatmul.mubr.f32.gmra.mxu0 %v2667
        %v2837 = vpop.f32.mrf.mxu0
        %v2838 = vadd.f32 %v2653, %v2837
        %v2839 = vpop.f32.mrf.mxu0
        %2840 = vmatprep.mubr.f32.mxu0 0.0
        %2841 = vmatmul.mubr.f32.gmra.mxu0 %v2670
        %v2842 = vpop.f32.mrf.mxu0
        %v2843 = vadd.f32 %v2658, %v2842
        %v2844 = vpop.f32.mrf.mxu0
        %2845 = vdwg.mxu0
        %v2846 = vmul.f32 %v2739, 0.5
        %v2847 = vmul.f32 %v2741, 0.5
        %v2848 = vmul.f32 %v2828, 0.5
        %v2849 = vmul.f32 %v2745, 0.5
        %v2850 = vmul.f32 %v2747, 0.5
        %v2851 = vmul.f32 %v2833, 0.5
        %v2852 = vmul.f32 %v2751, 0.5
        %v2853 = vmul.f32 %v2753, 0.5
        %v2854 = vmul.f32 %v2838, 0.5
        %v2855 = vmul.f32 %v2757, 0.5
        %v2856 = vmul.f32 %v2759, 0.5
        %v2857 = vmul.f32 %v2843, 0.5
        %v2858 = vtanh.pop %v2846
        %v2859 = vtanh.pop %v2847
        %v2860 = vtanh.pop %v2848
        %v2861 = vtanh.pop %v2849
        %v2862 = vtanh.pop %v2850
        %v2863 = vtanh.pop %v2851
        %v2864 = vtanh.pop %v2852
        %v2865 = vtanh.pop %v2853
        %v2866 = vtanh.pop %v2854
        %v2867 = vtanh.pop %v2855
        %v2868 = vtanh.pop %v2856
        %v2869 = vtanh.pop %v2857
        %v2870 = vmul.f32 %v2858, 0.5
        %v2871 = vmul.f32 %v2859, 0.5
        %v2872 = vmul.f32 %v2860, 0.5
        %v2873 = vmul.f32 %v2861, 0.5
        %v2874 = vmul.f32 %v2862, 0.5
        %v2875 = vmul.f32 %v2863, 0.5
        %v2876 = vmul.f32 %v2864, 0.5
        %v2877 = vmul.f32 %v2865, 0.5
        %v2878 = vmul.f32 %v2866, 0.5
        %v2879 = vmul.f32 %v2867, 0.5
        %v2880 = vmul.f32 %v2868, 0.5
        %v2881 = vmul.f32 %v2869, 0.5
        %v2882 = vadd.f32 %v2870, 0.5
        %v2883 = vadd.f32 %v2871, 0.5
        %v2884 = vadd.f32 %v2872, 0.5
        %v2885 = vadd.f32 %v2873, 0.5
        %v2886 = vadd.f32 %v2874, 0.5
        %v2887 = vadd.f32 %v2875, 0.5
        %v2888 = vadd.f32 %v2876, 0.5
        %v2889 = vadd.f32 %v2877, 0.5
        %v2890 = vadd.f32 %v2878, 0.5
        %v2891 = vadd.f32 %v2879, 0.5
        %v2892 = vadd.f32 %v2880, 0.5
        %v2893 = vadd.f32 %v2881, 0.5
        %v2894 = vld [vmem:[%s15] sm:$0x1f]
        %v2895 = vld [vmem:[%s16] sm:$0x1f]
        %2897 = vset.pattern.permute.xlu0 0
        %2898 = vperm.xlu0 %2897, %v2895
        %v2899 = vpop.permute.xlu0 %2898
        %v2902 = vsel %vm1434, %v2894, 0
        %2904 = vmatprep.subr.mxu0 0.0
        %2905 = vmatpush1.msra.mxu0 0.0
        %2906 = vmatprep.subr.mxu0 0.0
        %2907 = vmatpush1.msra.mxu0 0.0
        %2908 = vmatprep.subr.mxu0 0.0
        %2909 = vmatpush1.msra.mxu0 0.0
        %2910 = vmatprep.subr.mxu0 0.0
        %2911 = vmatpush1.msra.mxu0 0.0
        %2912 = vmatprep.subr.mxu0 0.0
        %2913 = vmatpush1.msra.mxu0 0.0
        %2914 = vmatprep.subr.mxu0 0.0
        %2915 = vmatpush1.msra.mxu0 0.0
        %2916 = vmatprep.subr.mxu0 0.0
        %2917 = vmatpush1.msra.mxu0 0.0
        %2918 = vmatprep.subr.mxu0 0.0
        %2919 = vmatpush1.msra.mxu0 0.0
        %2920 = vmatprep.subr.mxu0 0.0
        %2921 = vmatpush1.msra.mxu0 0.0
        %2922 = vmatprep.subr.mxu0 0.0
        %2923 = vmatpush1.msra.mxu0 0.0
        %2924 = vmatprep.subr.mxu0 0.0
        %2925 = vmatpush1.msra.mxu0 0.0
        %2926 = vmatprep.subr.mxu0 0.0
        %2927 = vmatpush1.msra.mxu0 0.0
        %2928 = vmatprep.subr.mxu0 %v2892
        %2929 = vmatpush1.msra.mxu0 %v2891
        %2930 = vmatprep.subr.mxu0 %v2889
        %2931 = vmatpush1.msra.mxu0 %v2888
        %2932 = vmatprep.subr.mxu0 %v2886
        %2933 = vmatpush1.msra.mxu0 %v2885
        %2934 = vmatprep.subr.mxu0 %v2883
        %2935 = vmatpush1.msra.mxu0 %v2882
        %2936 = vmatprep.subr.mxu0 0.0
        %2937 = vmatpush2.msra.mxu0 0.0
        %2938 = vmatprep.subr.mxu0 0.0
        %2939 = vmatpush2.msra.mxu0 0.0
        %2940 = vmatprep.subr.mxu0 0.0
        %2941 = vmatpush2.msra.mxu0 0.0
        %2942 = vmatprep.subr.mxu0 0.0
        %2943 = vmatpush2.msra.mxu0 0.0
        %2944 = vmatprep.subr.mxu0 0.0
        %2945 = vmatpush2.msra.mxu0 0.0
        %2946 = vmatprep.subr.mxu0 0.0
        %2947 = vmatpush2.msra.mxu0 0.0
        %2948 = vmatprep.subr.mxu0 0.0
        %2949 = vmatpush2.msra.mxu0 0.0
        %2950 = vmatprep.subr.mxu0 0.0
        %2951 = vmatpush2.msra.mxu0 0.0
        %2952 = vmatprep.subr.mxu0 0.0
        %2953 = vmatpush2.msra.mxu0 0.0
        %2954 = vmatprep.subr.mxu0 0.0
        %2955 = vmatpush2.msra.mxu0 0.0
        %2956 = vmatprep.subr.mxu0 0.0
        %2957 = vmatpush2.msra.mxu0 0.0
        %2958 = vmatprep.subr.mxu0 0.0
        %2959 = vmatpush2.msra.mxu0 0.0
        %2960 = vmatprep.subr.mxu0 0.0
        %2961 = vmatpush2.msra.mxu0 0.0
        %2962 = vmatprep.subr.mxu0 0.0
        %2963 = vmatpush2.msra.mxu0 0.0
        %2964 = vmatprep.subr.mxu0 0.0
        %2965 = vmatpush2.msra.mxu0 0.0
        %2966 = vmatprep.subr.mxu0 0.0
        %2967 = vmatpush2.msra.mxu0 0.0
        %2968 = vmatprep.mubr.f32.mxu0 0.0
        %2969 = vmatmul.mubr.f32.gmra.mxu0 %v2902
        %v2970 = vpop.f32.mrf.mxu0
        %v2971 = vadd.f32 %v2899, %v2970
        %v2972 = vpop.f32.mrf.mxu0
        %v2973 = vadd.f32 %v2899, %v2972
        %2974 = vdwg.mxu0
        %2975 = vmatprep.subr.mxu0 0.0
        %2976 = vmatpush1.msra.mxu0 0.0
        %2977 = vmatprep.subr.mxu0 0.0
        %2978 = vmatpush1.msra.mxu0 0.0
        %2979 = vmatprep.subr.mxu0 0.0
        %2980 = vmatpush1.msra.mxu0 0.0
        %2981 = vmatprep.subr.mxu0 0.0
        %2982 = vmatpush1.msra.mxu0 0.0
        %2983 = vmatprep.subr.mxu0 0.0
        %2984 = vmatpush1.msra.mxu0 0.0
        %2985 = vmatprep.subr.mxu0 0.0
        %2986 = vmatpush1.msra.mxu0 0.0
        %2987 = vmatprep.subr.mxu0 0.0
        %2988 = vmatpush1.msra.mxu0 0.0
        %2989 = vmatprep.subr.mxu0 0.0
        %2990 = vmatpush1.msra.mxu0 0.0
        %2991 = vmatprep.subr.mxu0 0.0
        %2992 = vmatpush1.msra.mxu0 0.0
        %2993 = vmatprep.subr.mxu0 0.0
        %2994 = vmatpush1.msra.mxu0 0.0
        %2995 = vmatprep.subr.mxu0 0.0
        %2996 = vmatpush1.msra.mxu0 0.0
        %2997 = vmatprep.subr.mxu0 0.0
        %2998 = vmatpush1.msra.mxu0 0.0
        %2999 = vmatprep.subr.mxu0 0.0
        %3000 = vmatpush1.msra.mxu0 %v2893
        %3001 = vmatprep.subr.mxu0 0.0
        %3002 = vmatpush1.msra.mxu0 %v2890
        %3003 = vmatprep.subr.mxu0 0.0
        %3004 = vmatpush1.msra.mxu0 %v2887
        %3005 = vmatprep.subr.mxu0 0.0
        %3006 = vmatpush1.msra.mxu0 %v2884
        %3007 = vmatprep.subr.mxu0 0.0
        %3008 = vmatpush2.msra.mxu0 0.0
        %3009 = vmatprep.subr.mxu0 0.0
        %3010 = vmatpush2.msra.mxu0 0.0
        %3011 = vmatprep.subr.mxu0 0.0
        %3012 = vmatpush2.msra.mxu0 0.0
        %3013 = vmatprep.subr.mxu0 0.0
        %3014 = vmatpush2.msra.mxu0 0.0
        %3015 = vmatprep.subr.mxu0 0.0
        %3016 = vmatpush2.msra.mxu0 0.0
        %3017 = vmatprep.subr.mxu0 0.0
        %3018 = vmatpush2.msra.mxu0 0.0
        %3019 = vmatprep.subr.mxu0 0.0
        %3020 = vmatpush2.msra.mxu0 0.0
        %3021 = vmatprep.subr.mxu0 0.0
        %3022 = vmatpush2.msra.mxu0 0.0
        %3023 = vmatprep.subr.mxu0 0.0
        %3024 = vmatpush2.msra.mxu0 0.0
        %3025 = vmatprep.subr.mxu0 0.0
        %3026 = vmatpush2.msra.mxu0 0.0
        %3027 = vmatprep.subr.mxu0 0.0
        %3028 = vmatpush2.msra.mxu0 0.0
        %3029 = vmatprep.subr.mxu0 0.0
        %3030 = vmatpush2.msra.mxu0 0.0
        %3031 = vmatprep.subr.mxu0 0.0
        %3032 = vmatpush2.msra.mxu0 0.0
        %3033 = vmatprep.subr.mxu0 0.0
        %3034 = vmatpush2.msra.mxu0 0.0
        %3035 = vmatprep.subr.mxu0 0.0
        %3036 = vmatpush2.msra.mxu0 0.0
        %3037 = vmatprep.subr.mxu0 0.0
        %3038 = vmatpush2.msra.mxu0 0.0
        %3039 = vmatprep.mubr.f32.mxu0 0.0
        %3040 = vmatmul.mubr.f32.gmra.mxu0 %v2902
        %v3041 = vpop.f32.mrf.mxu0
        %v3042 = vadd.f32 %v2899, %v3041
        %v3043 = vpop.f32.mrf.mxu0
        %3044 = vdwg.mxu0
        %v3045 = vmul.f32 %v2971, 0.5
        %v3046 = vmul.f32 %v2973, 0.5
        %v3047 = vmul.f32 %v3042, 0.5
        %v3048 = vtanh.pop %v3045
        %v3049 = vtanh.pop %v3046
        %v3050 = vtanh.pop %v3047
        %v3051 = vmul.f32 %v3048, 0.5
        %v3052 = vmul.f32 %v3049, 0.5
        %v3053 = vmul.f32 %v3050, 0.5
        %v3054 = vadd.f32 %v3051, 0.5
        %v3055 = vadd.f32 %v3052, 0.5
        %v3056 = vadd.f32 %v3053, 0.5
        %v3060 = vrot.slane %v3054, 5
        %v3061 = vrot.slane %v3055, 5
        %v3062 = vrot.slane %v3056, 5
        %v3066 = vadd.f32 %v1056, %v3060
        %v3067 = vadd.f32 %v1058, %v3061
        %v3068 = vadd.f32 %v1127, %v3062
        %v3069 = vld [vmem:[%s17] sm:$0xff]
        %v3070 = vld [vmem:[%s17 + $0x8] sm:$0xff]
        %v3071 = vld [vmem:[%s17 + $0x10] sm:$0xff]
        %v3072 = vld [vmem:[%s17 + $0x18] sm:$0xff]
        %v3073 = vld [vmem:[%s18] sm:$0xff]
        %v3074 = vld [vmem:[%s18 + $0x8] sm:$0xff]
        %v3075 = vld [vmem:[%s18 + $0x10] sm:$0xff]
        %v3076 = vld [vmem:[%s18 + $0x18] sm:$0xff]
        %3078 = vset.pattern.permute.xlu0 0
        %3079 = vperm.xlu0 %3078, %v3073
        %v3080 = vpop.permute.xlu0 %3079
        %3083 = vset.pattern.permute.xlu0 0
        %3084 = vperm.xlu0 %3083, %v3074
        %v3085 = vpop.permute.xlu0 %3084
        %3088 = vset.pattern.permute.xlu0 0
        %3089 = vperm.xlu0 %3088, %v3075
        %v3090 = vpop.permute.xlu0 %3089
        %3093 = vset.pattern.permute.xlu0 0
        %3094 = vperm.xlu0 %3093, %v3076
        %v3095 = vpop.permute.xlu0 %3094
        %v3100 = vrot.slane %v3066, 3
        %v3101 = vrot.slane %v3067, 3
        %v3102 = vrot.slane %v3068, 3
        %v3104 = vsel %vm1164, %v3069, 0
        %v3107 = vsel %vm1164, %v3070, 0
        %v3110 = vsel %vm1164, %v3071, 0
        %v3113 = vsel %vm1164, %v3072, 0
        %v3115 = vsel %vm1177, %v3100, 0
        %v3117 = vsel %vm1177, %v3101, 0
        %v3119 = vsel %vm1177, %v3102, 0
        %3121 = vmatprep.subr.mxu0 0.0
        %3122 = vmatpush1.msra.mxu0 0.0
        %3123 = vmatprep.subr.mxu0 0.0
        %3124 = vmatpush1.msra.mxu0 0.0
        %3125 = vmatprep.subr.mxu0 0.0
        %3126 = vmatpush1.msra.mxu0 0.0
        %3127 = vmatprep.subr.mxu0 0.0
        %3128 = vmatpush1.msra.mxu0 0.0
        %3129 = vmatprep.subr.mxu0 0.0
        %3130 = vmatpush1.msra.mxu0 0.0
        %3131 = vmatprep.subr.mxu0 0.0
        %3132 = vmatpush1.msra.mxu0 0.0
        %3133 = vmatprep.subr.mxu0 0.0
        %3134 = vmatpush1.msra.mxu0 0.0
        %3135 = vmatprep.subr.mxu0 0.0
        %3136 = vmatpush1.msra.mxu0 0.0
        %3137 = vmatprep.subr.mxu0 0.0
        %3138 = vmatpush1.msra.mxu0 0.0
        %3139 = vmatprep.subr.mxu0 0.0
        %3140 = vmatpush1.msra.mxu0 0.0
        %3141 = vmatprep.subr.mxu0 0.0
        %3142 = vmatpush1.msra.mxu0 0.0
        %3143 = vmatprep.subr.mxu0 0.0
        %3144 = vmatpush1.msra.mxu0 0.0
        %3145 = vmatprep.subr.mxu0 0.0
        %3146 = vmatpush1.msra.mxu0 0.0
        %3147 = vmatprep.subr.mxu0 0.0
        %3148 = vmatpush1.msra.mxu0 0.0
        %3149 = vmatprep.subr.mxu0 0.0
        %3150 = vmatpush1.msra.mxu0 0.0
        %3151 = vmatprep.subr.mxu0 %v3117
        %3152 = vmatpush1.msra.mxu0 %v3115
        %3153 = vmatprep.subr.mxu0 0.0
        %3154 = vmatpush2.msra.mxu0 0.0
        %3155 = vmatprep.subr.mxu0 0.0
        %3156 = vmatpush2.msra.mxu0 0.0
        %3157 = vmatprep.subr.mxu0 0.0
        %3158 = vmatpush2.msra.mxu0 0.0
        %3159 = vmatprep.subr.mxu0 0.0
        %3160 = vmatpush2.msra.mxu0 0.0
        %3161 = vmatprep.subr.mxu0 0.0
        %3162 = vmatpush2.msra.mxu0 0.0
        %3163 = vmatprep.subr.mxu0 0.0
        %3164 = vmatpush2.msra.mxu0 0.0
        %3165 = vmatprep.subr.mxu0 0.0
        %3166 = vmatpush2.msra.mxu0 0.0
        %3167 = vmatprep.subr.mxu0 0.0
        %3168 = vmatpush2.msra.mxu0 0.0
        %3169 = vmatprep.subr.mxu0 0.0
        %3170 = vmatpush2.msra.mxu0 0.0
        %3171 = vmatprep.subr.mxu0 0.0
        %3172 = vmatpush2.msra.mxu0 0.0
        %3173 = vmatprep.subr.mxu0 0.0
        %3174 = vmatpush2.msra.mxu0 0.0
        %3175 = vmatprep.subr.mxu0 0.0
        %3176 = vmatpush2.msra.mxu0 0.0
        %3177 = vmatprep.subr.mxu0 0.0
        %3178 = vmatpush2.msra.mxu0 0.0
        %3179 = vmatprep.subr.mxu0 0.0
        %3180 = vmatpush2.msra.mxu0 0.0
        %3181 = vmatprep.subr.mxu0 0.0
        %3182 = vmatpush2.msra.mxu0 0.0
        %3183 = vmatprep.subr.mxu0 0.0
        %3184 = vmatpush2.msra.mxu0 0.0
        %3185 = vmatprep.mubr.f32.mxu0 0.0
        %3186 = vmatmul.mubr.f32.gmra.mxu0 %v3104
        %v3187 = vpop.f32.mrf.mxu0
        %v3188 = vadd.f32 %v3080, %v3187
        %v3189 = vpop.f32.mrf.mxu0
        %v3190 = vadd.f32 %v3080, %v3189
        %3191 = vmatprep.mubr.f32.mxu0 0.0
        %3192 = vmatmul.mubr.f32.gmra.mxu0 %v3107
        %v3193 = vpop.f32.mrf.mxu0
        %v3194 = vadd.f32 %v3085, %v3193
        %v3195 = vpop.f32.mrf.mxu0
        %v3196 = vadd.f32 %v3085, %v3195
        %3197 = vmatprep.mubr.f32.mxu0 0.0
        %3198 = vmatmul.mubr.f32.gmra.mxu0 %v3110
        %v3199 = vpop.f32.mrf.mxu0
        %v3200 = vadd.f32 %v3090, %v3199
        %v3201 = vpop.f32.mrf.mxu0
        %v3202 = vadd.f32 %v3090, %v3201
        %3203 = vmatprep.mubr.f32.mxu0 0.0
        %3204 = vmatmul.mubr.f32.gmra.mxu0 %v3113
        %v3205 = vpop.f32.mrf.mxu0
        %v3206 = vadd.f32 %v3095, %v3205
        %v3207 = vpop.f32.mrf.mxu0
        %v3208 = vadd.f32 %v3095, %v3207
        %3209 = vdwg.mxu0
        %3210 = vmatprep.subr.mxu0 0.0
        %3211 = vmatpush1.msra.mxu0 0.0
        %3212 = vmatprep.subr.mxu0 0.0
        %3213 = vmatpush1.msra.mxu0 0.0
        %3214 = vmatprep.subr.mxu0 0.0
        %3215 = vmatpush1.msra.mxu0 0.0
        %3216 = vmatprep.subr.mxu0 0.0
        %3217 = vmatpush1.msra.mxu0 0.0
        %3218 = vmatprep.subr.mxu0 0.0
        %3219 = vmatpush1.msra.mxu0 0.0
        %3220 = vmatprep.subr.mxu0 0.0
        %3221 = vmatpush1.msra.mxu0 0.0
        %3222 = vmatprep.subr.mxu0 0.0
        %3223 = vmatpush1.msra.mxu0 0.0
        %3224 = vmatprep.subr.mxu0 0.0
        %3225 = vmatpush1.msra.mxu0 0.0
        %3226 = vmatprep.subr.mxu0 0.0
        %3227 = vmatpush1.msra.mxu0 0.0
        %3228 = vmatprep.subr.mxu0 0.0
        %3229 = vmatpush1.msra.mxu0 0.0
        %3230 = vmatprep.subr.mxu0 0.0
        %3231 = vmatpush1.msra.mxu0 0.0
        %3232 = vmatprep.subr.mxu0 0.0
        %3233 = vmatpush1.msra.mxu0 0.0
        %3234 = vmatprep.subr.mxu0 0.0
        %3235 = vmatpush1.msra.mxu0 0.0
        %3236 = vmatprep.subr.mxu0 0.0
        %3237 = vmatpush1.msra.mxu0 0.0
        %3238 = vmatprep.subr.mxu0 0.0
        %3239 = vmatpush1.msra.mxu0 0.0
        %3240 = vmatprep.subr.mxu0 0.0
        %3241 = vmatpush1.msra.mxu0 %v3119
        %3242 = vmatprep.subr.mxu0 0.0
        %3243 = vmatpush2.msra.mxu0 0.0
        %3244 = vmatprep.subr.mxu0 0.0
        %3245 = vmatpush2.msra.mxu0 0.0
        %3246 = vmatprep.subr.mxu0 0.0
        %3247 = vmatpush2.msra.mxu0 0.0
        %3248 = vmatprep.subr.mxu0 0.0
        %3249 = vmatpush2.msra.mxu0 0.0
        %3250 = vmatprep.subr.mxu0 0.0
        %3251 = vmatpush2.msra.mxu0 0.0
        %3252 = vmatprep.subr.mxu0 0.0
        %3253 = vmatpush2.msra.mxu0 0.0
        %3254 = vmatprep.subr.mxu0 0.0
        %3255 = vmatpush2.msra.mxu0 0.0
        %3256 = vmatprep.subr.mxu0 0.0
        %3257 = vmatpush2.msra.mxu0 0.0
        %3258 = vmatprep.subr.mxu0 0.0
        %3259 = vmatpush2.msra.mxu0 0.0
        %3260 = vmatprep.subr.mxu0 0.0
        %3261 = vmatpush2.msra.mxu0 0.0
        %3262 = vmatprep.subr.mxu0 0.0
        %3263 = vmatpush2.msra.mxu0 0.0
        %3264 = vmatprep.subr.mxu0 0.0
        %3265 = vmatpush2.msra.mxu0 0.0
        %3266 = vmatprep.subr.mxu0 0.0
        %3267 = vmatpush2.msra.mxu0 0.0
        %3268 = vmatprep.subr.mxu0 0.0
        %3269 = vmatpush2.msra.mxu0 0.0
        %3270 = vmatprep.subr.mxu0 0.0
        %3271 = vmatpush2.msra.mxu0 0.0
        %3272 = vmatprep.subr.mxu0 0.0
        %3273 = vmatpush2.msra.mxu0 0.0
        %3274 = vmatprep.mubr.f32.mxu0 0.0
        %3275 = vmatmul.mubr.f32.gmra.mxu0 %v3104
        %v3276 = vpop.f32.mrf.mxu0
        %v3277 = vadd.f32 %v3080, %v3276
        %v3278 = vpop.f32.mrf.mxu0
        %3279 = vmatprep.mubr.f32.mxu0 0.0
        %3280 = vmatmul.mubr.f32.gmra.mxu0 %v3107
        %v3281 = vpop.f32.mrf.mxu0
        %v3282 = vadd.f32 %v3085, %v3281
        %v3283 = vpop.f32.mrf.mxu0
        %3284 = vmatprep.mubr.f32.mxu0 0.0
        %3285 = vmatmul.mubr.f32.gmra.mxu0 %v3110
        %v3286 = vpop.f32.mrf.mxu0
        %v3287 = vadd.f32 %v3090, %v3286
        %v3288 = vpop.f32.mrf.mxu0
        %3289 = vmatprep.mubr.f32.mxu0 0.0
        %3290 = vmatmul.mubr.f32.gmra.mxu0 %v3113
        %v3291 = vpop.f32.mrf.mxu0
        %v3292 = vadd.f32 %v3095, %v3291
        %v3293 = vpop.f32.mrf.mxu0
        %3294 = vdwg.mxu0
        %v3295 = vmul.f32 %v3188, 0.5
        %v3296 = vmul.f32 %v3190, 0.5
        %v3297 = vmul.f32 %v3277, 0.5
        %v3298 = vmul.f32 %v3194, 0.5
        %v3299 = vmul.f32 %v3196, 0.5
        %v3300 = vmul.f32 %v3282, 0.5
        %v3301 = vmul.f32 %v3200, 0.5
        %v3302 = vmul.f32 %v3202, 0.5
        %v3303 = vmul.f32 %v3287, 0.5
        %v3304 = vmul.f32 %v3206, 0.5
        %v3305 = vmul.f32 %v3208, 0.5
        %v3306 = vmul.f32 %v3292, 0.5
        %v3307 = vtanh.pop %v3295
        %v3308 = vtanh.pop %v3296
        %v3309 = vtanh.pop %v3297
        %v3310 = vtanh.pop %v3298
        %v3311 = vtanh.pop %v3299
        %v3312 = vtanh.pop %v3300
        %v3313 = vtanh.pop %v3301
        %v3314 = vtanh.pop %v3302
        %v3315 = vtanh.pop %v3303
        %v3316 = vtanh.pop %v3304
        %v3317 = vtanh.pop %v3305
        %v3318 = vtanh.pop %v3306
        %v3319 = vmul.f32 %v3307, 0.5
        %v3320 = vmul.f32 %v3308, 0.5
        %v3321 = vmul.f32 %v3309, 0.5
        %v3322 = vmul.f32 %v3310, 0.5
        %v3323 = vmul.f32 %v3311, 0.5
        %v3324 = vmul.f32 %v3312, 0.5
        %v3325 = vmul.f32 %v3313, 0.5
        %v3326 = vmul.f32 %v3314, 0.5
        %v3327 = vmul.f32 %v3315, 0.5
        %v3328 = vmul.f32 %v3316, 0.5
        %v3329 = vmul.f32 %v3317, 0.5
        %v3330 = vmul.f32 %v3318, 0.5
        %v3331 = vadd.f32 %v3319, 0.5
        %v3332 = vadd.f32 %v3320, 0.5
        %v3333 = vadd.f32 %v3321, 0.5
        %v3334 = vadd.f32 %v3322, 0.5
        %v3335 = vadd.f32 %v3323, 0.5
        %v3336 = vadd.f32 %v3324, 0.5
        %v3337 = vadd.f32 %v3325, 0.5
        %v3338 = vadd.f32 %v3326, 0.5
        %v3339 = vadd.f32 %v3327, 0.5
        %v3340 = vadd.f32 %v3328, 0.5
        %v3341 = vadd.f32 %v3329, 0.5
        %v3342 = vadd.f32 %v3330, 0.5
        %v3343 = vld [vmem:[%s19] sm:$0xff]
        %v3344 = vld [vmem:[%s19 + $0x8] sm:$0xff]
        %v3345 = vld [vmem:[%s19 + $0x10] sm:$0xff]
        %v3346 = vld [vmem:[%s19 + $0x18] sm:$0xff]
        %v3347 = vld [vmem:[%s20] sm:$0xff]
        %v3348 = vld [vmem:[%s20 + $0x8] sm:$0xff]
        %v3349 = vld [vmem:[%s20 + $0x10] sm:$0xff]
        %v3350 = vld [vmem:[%s20 + $0x18] sm:$0xff]
        %3352 = vset.pattern.permute.xlu0 0
        %3353 = vperm.xlu0 %3352, %v3347
        %v3354 = vpop.permute.xlu0 %3353
        %3357 = vset.pattern.permute.xlu0 0
        %3358 = vperm.xlu0 %3357, %v3348
        %v3359 = vpop.permute.xlu0 %3358
        %3362 = vset.pattern.permute.xlu0 0
        %3363 = vperm.xlu0 %3362, %v3349
        %v3364 = vpop.permute.xlu0 %3363
        %3367 = vset.pattern.permute.xlu0 0
        %3368 = vperm.xlu0 %3367, %v3350
        %v3369 = vpop.permute.xlu0 %3368
        %v3372 = vsel %vm1434, %v3343, 0
        %v3375 = vsel %vm1434, %v3344, 0
        %v3378 = vsel %vm1434, %v3345, 0
        %v3381 = vsel %vm1434, %v3346, 0
        %3383 = vmatprep.subr.mxu0 0.0
        %3384 = vmatpush1.msra.mxu0 0.0
        %3385 = vmatprep.subr.mxu0 0.0
        %3386 = vmatpush1.msra.mxu0 0.0
        %3387 = vmatprep.subr.mxu0 0.0
        %3388 = vmatpush1.msra.mxu0 0.0
        %3389 = vmatprep.subr.mxu0 0.0
        %3390 = vmatpush1.msra.mxu0 0.0
        %3391 = vmatprep.subr.mxu0 0.0
        %3392 = vmatpush1.msra.mxu0 0.0
        %3393 = vmatprep.subr.mxu0 0.0
        %3394 = vmatpush1.msra.mxu0 0.0
        %3395 = vmatprep.subr.mxu0 0.0
        %3396 = vmatpush1.msra.mxu0 0.0
        %3397 = vmatprep.subr.mxu0 0.0
        %3398 = vmatpush1.msra.mxu0 0.0
        %3399 = vmatprep.subr.mxu0 0.0
        %3400 = vmatpush1.msra.mxu0 0.0
        %3401 = vmatprep.subr.mxu0 0.0
        %3402 = vmatpush1.msra.mxu0 0.0
        %3403 = vmatprep.subr.mxu0 0.0
        %3404 = vmatpush1.msra.mxu0 0.0
        %3405 = vmatprep.subr.mxu0 0.0
        %3406 = vmatpush1.msra.mxu0 0.0
        %3407 = vmatprep.subr.mxu0 %v3341
        %3408 = vmatpush1.msra.mxu0 %v3340
        %3409 = vmatprep.subr.mxu0 %v3338
        %3410 = vmatpush1.msra.mxu0 %v3337
        %3411 = vmatprep.subr.mxu0 %v3335
        %3412 = vmatpush1.msra.mxu0 %v3334
        %3413 = vmatprep.subr.mxu0 %v3332
        %3414 = vmatpush1.msra.mxu0 %v3331
        %3415 = vmatprep.subr.mxu0 0.0
        %3416 = vmatpush2.msra.mxu0 0.0
        %3417 = vmatprep.subr.mxu0 0.0
        %3418 = vmatpush2.msra.mxu0 0.0
        %3419 = vmatprep.subr.mxu0 0.0
        %3420 = vmatpush2.msra.mxu0 0.0
        %3421 = vmatprep.subr.mxu0 0.0
        %3422 = vmatpush2.msra.mxu0 0.0
        %3423 = vmatprep.subr.mxu0 0.0
        %3424 = vmatpush2.msra.mxu0 0.0
        %3425 = vmatprep.subr.mxu0 0.0
        %3426 = vmatpush2.msra.mxu0 0.0
        %3427 = vmatprep.subr.mxu0 0.0
        %3428 = vmatpush2.msra.mxu0 0.0
        %3429 = vmatprep.subr.mxu0 0.0
        %3430 = vmatpush2.msra.mxu0 0.0
        %3431 = vmatprep.subr.mxu0 0.0
        %3432 = vmatpush2.msra.mxu0 0.0
        %3433 = vmatprep.subr.mxu0 0.0
        %3434 = vmatpush2.msra.mxu0 0.0
        %3435 = vmatprep.subr.mxu0 0.0
        %3436 = vmatpush2.msra.mxu0 0.0
        %3437 = vmatprep.subr.mxu0 0.0
        %3438 = vmatpush2.msra.mxu0 0.0
        %3439 = vmatprep.subr.mxu0 0.0
        %3440 = vmatpush2.msra.mxu0 0.0
        %3441 = vmatprep.subr.mxu0 0.0
        %3442 = vmatpush2.msra.mxu0 0.0
        %3443 = vmatprep.subr.mxu0 0.0
        %3444 = vmatpush2.msra.mxu0 0.0
        %3445 = vmatprep.subr.mxu0 0.0
        %3446 = vmatpush2.msra.mxu0 0.0
        %3447 = vmatprep.mubr.f32.mxu0 0.0
        %3448 = vmatmul.mubr.f32.gmra.mxu0 %v3372
        %v3449 = vpop.f32.mrf.mxu0
        %v3450 = vadd.f32 %v3354, %v3449
        %v3451 = vpop.f32.mrf.mxu0
        %v3452 = vadd.f32 %v3354, %v3451
        %3453 = vmatprep.mubr.f32.mxu0 0.0
        %3454 = vmatmul.mubr.f32.gmra.mxu0 %v3375
        %v3455 = vpop.f32.mrf.mxu0
        %v3456 = vadd.f32 %v3359, %v3455
        %v3457 = vpop.f32.mrf.mxu0
        %v3458 = vadd.f32 %v3359, %v3457
        %3459 = vmatprep.mubr.f32.mxu0 0.0
        %3460 = vmatmul.mubr.f32.gmra.mxu0 %v3378
        %v3461 = vpop.f32.mrf.mxu0
        %v3462 = vadd.f32 %v3364, %v3461
        %v3463 = vpop.f32.mrf.mxu0
        %v3464 = vadd.f32 %v3364, %v3463
        %3465 = vmatprep.mubr.f32.mxu0 0.0
        %3466 = vmatmul.mubr.f32.gmra.mxu0 %v3381
        %v3467 = vpop.f32.mrf.mxu0
        %v3468 = vadd.f32 %v3369, %v3467
        %v3469 = vpop.f32.mrf.mxu0
        %v3470 = vadd.f32 %v3369, %v3469
        %3471 = vdwg.mxu0
        %3472 = vmatprep.subr.mxu0 0.0
        %3473 = vmatpush1.msra.mxu0 0.0
        %3474 = vmatprep.subr.mxu0 0.0
        %3475 = vmatpush1.msra.mxu0 0.0
        %3476 = vmatprep.subr.mxu0 0.0
        %3477 = vmatpush1.msra.mxu0 0.0
        %3478 = vmatprep.subr.mxu0 0.0
        %3479 = vmatpush1.msra.mxu0 0.0
        %3480 = vmatprep.subr.mxu0 0.0
        %3481 = vmatpush1.msra.mxu0 0.0
        %3482 = vmatprep.subr.mxu0 0.0
        %3483 = vmatpush1.msra.mxu0 0.0
        %3484 = vmatprep.subr.mxu0 0.0
        %3485 = vmatpush1.msra.mxu0 0.0
        %3486 = vmatprep.subr.mxu0 0.0
        %3487 = vmatpush1.msra.mxu0 0.0
        %3488 = vmatprep.subr.mxu0 0.0
        %3489 = vmatpush1.msra.mxu0 0.0
        %3490 = vmatprep.subr.mxu0 0.0
        %3491 = vmatpush1.msra.mxu0 0.0
        %3492 = vmatprep.subr.mxu0 0.0
        %3493 = vmatpush1.msra.mxu0 0.0
        %3494 = vmatprep.subr.mxu0 0.0
        %3495 = vmatpush1.msra.mxu0 0.0
        %3496 = vmatprep.subr.mxu0 0.0
        %3497 = vmatpush1.msra.mxu0 %v3342
        %3498 = vmatprep.subr.mxu0 0.0
        %3499 = vmatpush1.msra.mxu0 %v3339
        %3500 = vmatprep.subr.mxu0 0.0
        %3501 = vmatpush1.msra.mxu0 %v3336
        %3502 = vmatprep.subr.mxu0 0.0
        %3503 = vmatpush1.msra.mxu0 %v3333
        %3504 = vmatprep.subr.mxu0 0.0
        %3505 = vmatpush2.msra.mxu0 0.0
        %3506 = vmatprep.subr.mxu0 0.0
        %3507 = vmatpush2.msra.mxu0 0.0
        %3508 = vmatprep.subr.mxu0 0.0
        %3509 = vmatpush2.msra.mxu0 0.0
        %3510 = vmatprep.subr.mxu0 0.0
        %3511 = vmatpush2.msra.mxu0 0.0
        %3512 = vmatprep.subr.mxu0 0.0
        %3513 = vmatpush2.msra.mxu0 0.0
        %3514 = vmatprep.subr.mxu0 0.0
        %3515 = vmatpush2.msra.mxu0 0.0
        %3516 = vmatprep.subr.mxu0 0.0
        %3517 = vmatpush2.msra.mxu0 0.0
        %3518 = vmatprep.subr.mxu0 0.0
        %3519 = vmatpush2.msra.mxu0 0.0
        %3520 = vmatprep.subr.mxu0 0.0
        %3521 = vmatpush2.msra.mxu0 0.0
        %3522 = vmatprep.subr.mxu0 0.0
        %3523 = vmatpush2.msra.mxu0 0.0
        %3524 = vmatprep.subr.mxu0 0.0
        %3525 = vmatpush2.msra.mxu0 0.0
        %3526 = vmatprep.subr.mxu0 0.0
        %3527 = vmatpush2.msra.mxu0 0.0
        %3528 = vmatprep.subr.mxu0 0.0
        %3529 = vmatpush2.msra.mxu0 0.0
        %3530 = vmatprep.subr.mxu0 0.0
        %3531 = vmatpush2.msra.mxu0 0.0
        %3532 = vmatprep.subr.mxu0 0.0
        %3533 = vmatpush2.msra.mxu0 0.0
        %3534 = vmatprep.subr.mxu0 0.0
        %3535 = vmatpush2.msra.mxu0 0.0
        %3536 = vmatprep.mubr.f32.mxu0 0.0
        %3537 = vmatmul.mubr.f32.gmra.mxu0 %v3372
        %v3538 = vpop.f32.mrf.mxu0
        %v3539 = vadd.f32 %v3354, %v3538
        %v3540 = vpop.f32.mrf.mxu0
        %3541 = vmatprep.mubr.f32.mxu0 0.0
        %3542 = vmatmul.mubr.f32.gmra.mxu0 %v3375
        %v3543 = vpop.f32.mrf.mxu0
        %v3544 = vadd.f32 %v3359, %v3543
        %v3545 = vpop.f32.mrf.mxu0
        %3546 = vmatprep.mubr.f32.mxu0 0.0
        %3547 = vmatmul.mubr.f32.gmra.mxu0 %v3378
        %v3548 = vpop.f32.mrf.mxu0
        %v3549 = vadd.f32 %v3364, %v3548
        %v3550 = vpop.f32.mrf.mxu0
        %3551 = vmatprep.mubr.f32.mxu0 0.0
        %3552 = vmatmul.mubr.f32.gmra.mxu0 %v3381
        %v3553 = vpop.f32.mrf.mxu0
        %v3554 = vadd.f32 %v3369, %v3553
        %v3555 = vpop.f32.mrf.mxu0
        %3556 = vdwg.mxu0
        %v3557 = vmul.f32 %v3450, 0.5
        %v3558 = vmul.f32 %v3452, 0.5
        %v3559 = vmul.f32 %v3539, 0.5
        %v3560 = vmul.f32 %v3456, 0.5
        %v3561 = vmul.f32 %v3458, 0.5
        %v3562 = vmul.f32 %v3544, 0.5
        %v3563 = vmul.f32 %v3462, 0.5
        %v3564 = vmul.f32 %v3464, 0.5
        %v3565 = vmul.f32 %v3549, 0.5
        %v3566 = vmul.f32 %v3468, 0.5
        %v3567 = vmul.f32 %v3470, 0.5
        %v3568 = vmul.f32 %v3554, 0.5
        %v3569 = vtanh.pop %v3557
        %v3570 = vtanh.pop %v3558
        %v3571 = vtanh.pop %v3559
        %v3572 = vtanh.pop %v3560
        %v3573 = vtanh.pop %v3561
        %v3574 = vtanh.pop %v3562
        %v3575 = vtanh.pop %v3563
        %v3576 = vtanh.pop %v3564
        %v3577 = vtanh.pop %v3565
        %v3578 = vtanh.pop %v3566
        %v3579 = vtanh.pop %v3567
        %v3580 = vtanh.pop %v3568
        %v3581 = vmul.f32 %v3569, 0.5
        %v3582 = vmul.f32 %v3570, 0.5
        %v3583 = vmul.f32 %v3571, 0.5
        %v3584 = vmul.f32 %v3572, 0.5
        %v3585 = vmul.f32 %v3573, 0.5
        %v3586 = vmul.f32 %v3574, 0.5
        %v3587 = vmul.f32 %v3575, 0.5
        %v3588 = vmul.f32 %v3576, 0.5
        %v3589 = vmul.f32 %v3577, 0.5
        %v3590 = vmul.f32 %v3578, 0.5
        %v3591 = vmul.f32 %v3579, 0.5
        %v3592 = vmul.f32 %v3580, 0.5
        %v3593 = vadd.f32 %v3581, 0.5
        %v3594 = vadd.f32 %v3582, 0.5
        %v3595 = vadd.f32 %v3583, 0.5
        %v3596 = vadd.f32 %v3584, 0.5
        %v3597 = vadd.f32 %v3585, 0.5
        %v3598 = vadd.f32 %v3586, 0.5
        %v3599 = vadd.f32 %v3587, 0.5
        %v3600 = vadd.f32 %v3588, 0.5
        %v3601 = vadd.f32 %v3589, 0.5
        %v3602 = vadd.f32 %v3590, 0.5
        %v3603 = vadd.f32 %v3591, 0.5
        %v3604 = vadd.f32 %v3592, 0.5
        %v3605 = vld [vmem:[%s21] sm:$0xff]
        %v3606 = vld [vmem:[%s21 + $0x8] sm:$0xff]
        %v3607 = vld [vmem:[%s21 + $0x10] sm:$0xff]
        %v3608 = vld [vmem:[%s21 + $0x18] sm:$0xff]
        %v3609 = vld [vmem:[%s22] sm:$0xff]
        %v3610 = vld [vmem:[%s22 + $0x8] sm:$0xff]
        %v3611 = vld [vmem:[%s22 + $0x10] sm:$0xff]
        %v3612 = vld [vmem:[%s22 + $0x18] sm:$0xff]
        %3614 = vset.pattern.permute.xlu0 0
        %3615 = vperm.xlu0 %3614, %v3609
        %v3616 = vpop.permute.xlu0 %3615
        %3619 = vset.pattern.permute.xlu0 0
        %3620 = vperm.xlu0 %3619, %v3610
        %v3621 = vpop.permute.xlu0 %3620
        %3624 = vset.pattern.permute.xlu0 0
        %3625 = vperm.xlu0 %3624, %v3611
        %v3626 = vpop.permute.xlu0 %3625
        %3629 = vset.pattern.permute.xlu0 0
        %3630 = vperm.xlu0 %3629, %v3612
        %v3631 = vpop.permute.xlu0 %3630
        %v3634 = vsel %vm1434, %v3605, 0
        %v3637 = vsel %vm1434, %v3606, 0
        %v3640 = vsel %vm1434, %v3607, 0
        %v3643 = vsel %vm1434, %v3608, 0
        %3645 = vmatprep.subr.mxu0 0.0
        %3646 = vmatpush1.msra.mxu0 0.0
        %3647 = vmatprep.subr.mxu0 0.0
        %3648 = vmatpush1.msra.mxu0 0.0
        %3649 = vmatprep.subr.mxu0 0.0
        %3650 = vmatpush1.msra.mxu0 0.0
        %3651 = vmatprep.subr.mxu0 0.0
        %3652 = vmatpush1.msra.mxu0 0.0
        %3653 = vmatprep.subr.mxu0 0.0
        %3654 = vmatpush1.msra.mxu0 0.0
        %3655 = vmatprep.subr.mxu0 0.0
        %3656 = vmatpush1.msra.mxu0 0.0
        %3657 = vmatprep.subr.mxu0 0.0
        %3658 = vmatpush1.msra.mxu0 0.0
        %3659 = vmatprep.subr.mxu0 0.0
        %3660 = vmatpush1.msra.mxu0 0.0
        %3661 = vmatprep.subr.mxu0 0.0
        %3662 = vmatpush1.msra.mxu0 0.0
        %3663 = vmatprep.subr.mxu0 0.0
        %3664 = vmatpush1.msra.mxu0 0.0
        %3665 = vmatprep.subr.mxu0 0.0
        %3666 = vmatpush1.msra.mxu0 0.0
        %3667 = vmatprep.subr.mxu0 0.0
        %3668 = vmatpush1.msra.mxu0 0.0
        %3669 = vmatprep.subr.mxu0 %v3603
        %3670 = vmatpush1.msra.mxu0 %v3602
        %3671 = vmatprep.subr.mxu0 %v3600
        %3672 = vmatpush1.msra.mxu0 %v3599
        %3673 = vmatprep.subr.mxu0 %v3597
        %3674 = vmatpush1.msra.mxu0 %v3596
        %3675 = vmatprep.subr.mxu0 %v3594
        %3676 = vmatpush1.msra.mxu0 %v3593
        %3677 = vmatprep.subr.mxu0 0.0
        %3678 = vmatpush2.msra.mxu0 0.0
        %3679 = vmatprep.subr.mxu0 0.0
        %3680 = vmatpush2.msra.mxu0 0.0
        %3681 = vmatprep.subr.mxu0 0.0
        %3682 = vmatpush2.msra.mxu0 0.0
        %3683 = vmatprep.subr.mxu0 0.0
        %3684 = vmatpush2.msra.mxu0 0.0
        %3685 = vmatprep.subr.mxu0 0.0
        %3686 = vmatpush2.msra.mxu0 0.0
        %3687 = vmatprep.subr.mxu0 0.0
        %3688 = vmatpush2.msra.mxu0 0.0
        %3689 = vmatprep.subr.mxu0 0.0
        %3690 = vmatpush2.msra.mxu0 0.0
        %3691 = vmatprep.subr.mxu0 0.0
        %3692 = vmatpush2.msra.mxu0 0.0
        %3693 = vmatprep.subr.mxu0 0.0
        %3694 = vmatpush2.msra.mxu0 0.0
        %3695 = vmatprep.subr.mxu0 0.0
        %3696 = vmatpush2.msra.mxu0 0.0
        %3697 = vmatprep.subr.mxu0 0.0
        %3698 = vmatpush2.msra.mxu0 0.0
        %3699 = vmatprep.subr.mxu0 0.0
        %3700 = vmatpush2.msra.mxu0 0.0
        %3701 = vmatprep.subr.mxu0 0.0
        %3702 = vmatpush2.msra.mxu0 0.0
        %3703 = vmatprep.subr.mxu0 0.0
        %3704 = vmatpush2.msra.mxu0 0.0
        %3705 = vmatprep.subr.mxu0 0.0
        %3706 = vmatpush2.msra.mxu0 0.0
        %3707 = vmatprep.subr.mxu0 0.0
        %3708 = vmatpush2.msra.mxu0 0.0
        %3709 = vmatprep.mubr.f32.mxu0 0.0
        %3710 = vmatmul.mubr.f32.gmra.mxu0 %v3634
        %v3711 = vpop.f32.mrf.mxu0
        %v3712 = vadd.f32 %v3616, %v3711
        %v3713 = vpop.f32.mrf.mxu0
        %v3714 = vadd.f32 %v3616, %v3713
        %3715 = vmatprep.mubr.f32.mxu0 0.0
        %3716 = vmatmul.mubr.f32.gmra.mxu0 %v3637
        %v3717 = vpop.f32.mrf.mxu0
        %v3718 = vadd.f32 %v3621, %v3717
        %v3719 = vpop.f32.mrf.mxu0
        %v3720 = vadd.f32 %v3621, %v3719
        %3721 = vmatprep.mubr.f32.mxu0 0.0
        %3722 = vmatmul.mubr.f32.gmra.mxu0 %v3640
        %v3723 = vpop.f32.mrf.mxu0
        %v3724 = vadd.f32 %v3626, %v3723
        %v3725 = vpop.f32.mrf.mxu0
        %v3726 = vadd.f32 %v3626, %v3725
        %3727 = vmatprep.mubr.f32.mxu0 0.0
        %3728 = vmatmul.mubr.f32.gmra.mxu0 %v3643
        %v3729 = vpop.f32.mrf.mxu0
        %v3730 = vadd.f32 %v3631, %v3729
        %v3731 = vpop.f32.mrf.mxu0
        %v3732 = vadd.f32 %v3631, %v3731
        %3733 = vdwg.mxu0
        %3734 = vmatprep.subr.mxu0 0.0
        %3735 = vmatpush1.msra.mxu0 0.0
        %3736 = vmatprep.subr.mxu0 0.0
        %3737 = vmatpush1.msra.mxu0 0.0
        %3738 = vmatprep.subr.mxu0 0.0
        %3739 = vmatpush1.msra.mxu0 0.0
        %3740 = vmatprep.subr.mxu0 0.0
        %3741 = vmatpush1.msra.mxu0 0.0
        %3742 = vmatprep.subr.mxu0 0.0
        %3743 = vmatpush1.msra.mxu0 0.0
        %3744 = vmatprep.subr.mxu0 0.0
        %3745 = vmatpush1.msra.mxu0 0.0
        %3746 = vmatprep.subr.mxu0 0.0
        %3747 = vmatpush1.msra.mxu0 0.0
        %3748 = vmatprep.subr.mxu0 0.0
        %3749 = vmatpush1.msra.mxu0 0.0
        %3750 = vmatprep.subr.mxu0 0.0
        %3751 = vmatpush1.msra.mxu0 0.0
        %3752 = vmatprep.subr.mxu0 0.0
        %3753 = vmatpush1.msra.mxu0 0.0
        %3754 = vmatprep.subr.mxu0 0.0
        %3755 = vmatpush1.msra.mxu0 0.0
        %3756 = vmatprep.subr.mxu0 0.0
        %3757 = vmatpush1.msra.mxu0 0.0
        %3758 = vmatprep.subr.mxu0 0.0
        %3759 = vmatpush1.msra.mxu0 %v3604
        %3760 = vmatprep.subr.mxu0 0.0
        %3761 = vmatpush1.msra.mxu0 %v3601
        %3762 = vmatprep.subr.mxu0 0.0
        %3763 = vmatpush1.msra.mxu0 %v3598
        %3764 = vmatprep.subr.mxu0 0.0
        %3765 = vmatpush1.msra.mxu0 %v3595
        %3766 = vmatprep.subr.mxu0 0.0
        %3767 = vmatpush2.msra.mxu0 0.0
        %3768 = vmatprep.subr.mxu0 0.0
        %3769 = vmatpush2.msra.mxu0 0.0
        %3770 = vmatprep.subr.mxu0 0.0
        %3771 = vmatpush2.msra.mxu0 0.0
        %3772 = vmatprep.subr.mxu0 0.0
        %3773 = vmatpush2.msra.mxu0 0.0
        %3774 = vmatprep.subr.mxu0 0.0
        %3775 = vmatpush2.msra.mxu0 0.0
        %3776 = vmatprep.subr.mxu0 0.0
        %3777 = vmatpush2.msra.mxu0 0.0
        %3778 = vmatprep.subr.mxu0 0.0
        %3779 = vmatpush2.msra.mxu0 0.0
        %3780 = vmatprep.subr.mxu0 0.0
        %3781 = vmatpush2.msra.mxu0 0.0
        %3782 = vmatprep.subr.mxu0 0.0
        %3783 = vmatpush2.msra.mxu0 0.0
        %3784 = vmatprep.subr.mxu0 0.0
        %3785 = vmatpush2.msra.mxu0 0.0
        %3786 = vmatprep.subr.mxu0 0.0
        %3787 = vmatpush2.msra.mxu0 0.0
        %3788 = vmatprep.subr.mxu0 0.0
        %3789 = vmatpush2.msra.mxu0 0.0
        %3790 = vmatprep.subr.mxu0 0.0
        %3791 = vmatpush2.msra.mxu0 0.0
        %3792 = vmatprep.subr.mxu0 0.0
        %3793 = vmatpush2.msra.mxu0 0.0
        %3794 = vmatprep.subr.mxu0 0.0
        %3795 = vmatpush2.msra.mxu0 0.0
        %3796 = vmatprep.subr.mxu0 0.0
        %3797 = vmatpush2.msra.mxu0 0.0
        %3798 = vmatprep.mubr.f32.mxu0 0.0
        %3799 = vmatmul.mubr.f32.gmra.mxu0 %v3634
        %v3800 = vpop.f32.mrf.mxu0
        %v3801 = vadd.f32 %v3616, %v3800
        %v3802 = vpop.f32.mrf.mxu0
        %3803 = vmatprep.mubr.f32.mxu0 0.0
        %3804 = vmatmul.mubr.f32.gmra.mxu0 %v3637
        %v3805 = vpop.f32.mrf.mxu0
        %v3806 = vadd.f32 %v3621, %v3805
        %v3807 = vpop.f32.mrf.mxu0
        %3808 = vmatprep.mubr.f32.mxu0 0.0
        %3809 = vmatmul.mubr.f32.gmra.mxu0 %v3640
        %v3810 = vpop.f32.mrf.mxu0
        %v3811 = vadd.f32 %v3626, %v3810
        %v3812 = vpop.f32.mrf.mxu0
        %3813 = vmatprep.mubr.f32.mxu0 0.0
        %3814 = vmatmul.mubr.f32.gmra.mxu0 %v3643
        %v3815 = vpop.f32.mrf.mxu0
        %v3816 = vadd.f32 %v3631, %v3815
        %v3817 = vpop.f32.mrf.mxu0
        %3818 = vdwg.mxu0
        %v3819 = vmul.f32 %v3712, 0.5
        %v3820 = vmul.f32 %v3714, 0.5
        %v3821 = vmul.f32 %v3801, 0.5
        %v3822 = vmul.f32 %v3718, 0.5
        %v3823 = vmul.f32 %v3720, 0.5
        %v3824 = vmul.f32 %v3806, 0.5
        %v3825 = vmul.f32 %v3724, 0.5
        %v3826 = vmul.f32 %v3726, 0.5
        %v3827 = vmul.f32 %v3811, 0.5
        %v3828 = vmul.f32 %v3730, 0.5
        %v3829 = vmul.f32 %v3732, 0.5
        %v3830 = vmul.f32 %v3816, 0.5
        %v3831 = vtanh.pop %v3819
        %v3832 = vtanh.pop %v3820
        %v3833 = vtanh.pop %v3821
        %v3834 = vtanh.pop %v3822
        %v3835 = vtanh.pop %v3823
        %v3836 = vtanh.pop %v3824
        %v3837 = vtanh.pop %v3825
        %v3838 = vtanh.pop %v3826
        %v3839 = vtanh.pop %v3827
        %v3840 = vtanh.pop %v3828
        %v3841 = vtanh.pop %v3829
        %v3842 = vtanh.pop %v3830
        %v3843 = vmul.f32 %v3831, 0.5
        %v3844 = vmul.f32 %v3832, 0.5
        %v3845 = vmul.f32 %v3833, 0.5
        %v3846 = vmul.f32 %v3834, 0.5
        %v3847 = vmul.f32 %v3835, 0.5
        %v3848 = vmul.f32 %v3836, 0.5
        %v3849 = vmul.f32 %v3837, 0.5
        %v3850 = vmul.f32 %v3838, 0.5
        %v3851 = vmul.f32 %v3839, 0.5
        %v3852 = vmul.f32 %v3840, 0.5
        %v3853 = vmul.f32 %v3841, 0.5
        %v3854 = vmul.f32 %v3842, 0.5
        %v3855 = vadd.f32 %v3843, 0.5
        %v3856 = vadd.f32 %v3844, 0.5
        %v3857 = vadd.f32 %v3845, 0.5
        %v3858 = vadd.f32 %v3846, 0.5
        %v3859 = vadd.f32 %v3847, 0.5
        %v3860 = vadd.f32 %v3848, 0.5
        %v3861 = vadd.f32 %v3849, 0.5
        %v3862 = vadd.f32 %v3850, 0.5
        %v3863 = vadd.f32 %v3851, 0.5
        %v3864 = vadd.f32 %v3852, 0.5
        %v3865 = vadd.f32 %v3853, 0.5
        %v3866 = vadd.f32 %v3854, 0.5
        %v3867 = vld [vmem:[%s23] sm:$0x7]
        %v3868 = vld [vmem:[%s24] sm:$0x7]
        %3870 = vset.pattern.permute.xlu0 0
        %3871 = vperm.xlu0 %3870, %v3868
        %v3872 = vpop.permute.xlu0 %3871
        %v3875 = vsel %vm1434, %v3867, 0
        %3877 = vmatprep.subr.mxu0 0.0
        %3878 = vmatpush1.msra.mxu0 0.0
        %3879 = vmatprep.subr.mxu0 0.0
        %3880 = vmatpush1.msra.mxu0 0.0
        %3881 = vmatprep.subr.mxu0 0.0
        %3882 = vmatpush1.msra.mxu0 0.0
        %3883 = vmatprep.subr.mxu0 0.0
        %3884 = vmatpush1.msra.mxu0 0.0
        %3885 = vmatprep.subr.mxu0 0.0
        %3886 = vmatpush1.msra.mxu0 0.0
        %3887 = vmatprep.subr.mxu0 0.0
        %3888 = vmatpush1.msra.mxu0 0.0
        %3889 = vmatprep.subr.mxu0 0.0
        %3890 = vmatpush1.msra.mxu0 0.0
        %3891 = vmatprep.subr.mxu0 0.0
        %3892 = vmatpush1.msra.mxu0 0.0
        %3893 = vmatprep.subr.mxu0 0.0
        %3894 = vmatpush1.msra.mxu0 0.0
        %3895 = vmatprep.subr.mxu0 0.0
        %3896 = vmatpush1.msra.mxu0 0.0
        %3897 = vmatprep.subr.mxu0 0.0
        %3898 = vmatpush1.msra.mxu0 0.0
        %3899 = vmatprep.subr.mxu0 0.0
        %3900 = vmatpush1.msra.mxu0 0.0
        %3901 = vmatprep.subr.mxu0 %v3865
        %3902 = vmatpush1.msra.mxu0 %v3864
        %3903 = vmatprep.subr.mxu0 %v3862
        %3904 = vmatpush1.msra.mxu0 %v3861
        %3905 = vmatprep.subr.mxu0 %v3859
        %3906 = vmatpush1.msra.mxu0 %v3858
        %3907 = vmatprep.subr.mxu0 %v3856
        %3908 = vmatpush1.msra.mxu0 %v3855
        %3909 = vmatprep.subr.mxu0 0.0
        %3910 = vmatpush2.msra.mxu0 0.0
        %3911 = vmatprep.subr.mxu0 0.0
        %3912 = vmatpush2.msra.mxu0 0.0
        %3913 = vmatprep.subr.mxu0 0.0
        %3914 = vmatpush2.msra.mxu0 0.0
        %3915 = vmatprep.subr.mxu0 0.0
        %3916 = vmatpush2.msra.mxu0 0.0
        %3917 = vmatprep.subr.mxu0 0.0
        %3918 = vmatpush2.msra.mxu0 0.0
        %3919 = vmatprep.subr.mxu0 0.0
        %3920 = vmatpush2.msra.mxu0 0.0
        %3921 = vmatprep.subr.mxu0 0.0
        %3922 = vmatpush2.msra.mxu0 0.0
        %3923 = vmatprep.subr.mxu0 0.0
        %3924 = vmatpush2.msra.mxu0 0.0
        %3925 = vmatprep.subr.mxu0 0.0
        %3926 = vmatpush2.msra.mxu0 0.0
        %3927 = vmatprep.subr.mxu0 0.0
        %3928 = vmatpush2.msra.mxu0 0.0
        %3929 = vmatprep.subr.mxu0 0.0
        %3930 = vmatpush2.msra.mxu0 0.0
        %3931 = vmatprep.subr.mxu0 0.0
        %3932 = vmatpush2.msra.mxu0 0.0
        %3933 = vmatprep.subr.mxu0 0.0
        %3934 = vmatpush2.msra.mxu0 0.0
        %3935 = vmatprep.subr.mxu0 0.0
        %3936 = vmatpush2.msra.mxu0 0.0
        %3937 = vmatprep.subr.mxu0 0.0
        %3938 = vmatpush2.msra.mxu0 0.0
        %3939 = vmatprep.subr.mxu0 0.0
        %3940 = vmatpush2.msra.mxu0 0.0
        %3941 = vmatprep.mubr.f32.mxu0 0.0
        %3942 = vmatmul.mubr.f32.gmra.mxu0 %v3875
        %v3943 = vpop.f32.mrf.mxu0
        %v3944 = vadd.f32 %v3872, %v3943
        %v3945 = vpop.f32.mrf.mxu0
        %v3946 = vadd.f32 %v3872, %v3945
        %3947 = vdwg.mxu0
        %3948 = vmatprep.subr.mxu0 0.0
        %3949 = vmatpush1.msra.mxu0 0.0
        %3950 = vmatprep.subr.mxu0 0.0
        %3951 = vmatpush1.msra.mxu0 0.0
        %3952 = vmatprep.subr.mxu0 0.0
        %3953 = vmatpush1.msra.mxu0 0.0
        %3954 = vmatprep.subr.mxu0 0.0
        %3955 = vmatpush1.msra.mxu0 0.0
        %3956 = vmatprep.subr.mxu0 0.0
        %3957 = vmatpush1.msra.mxu0 0.0
        %3958 = vmatprep.subr.mxu0 0.0
        %3959 = vmatpush1.msra.mxu0 0.0
        %3960 = vmatprep.subr.mxu0 0.0
        %3961 = vmatpush1.msra.mxu0 0.0
        %3962 = vmatprep.subr.mxu0 0.0
        %3963 = vmatpush1.msra.mxu0 0.0
        %3964 = vmatprep.subr.mxu0 0.0
        %3965 = vmatpush1.msra.mxu0 0.0
        %3966 = vmatprep.subr.mxu0 0.0
        %3967 = vmatpush1.msra.mxu0 0.0
        %3968 = vmatprep.subr.mxu0 0.0
        %3969 = vmatpush1.msra.mxu0 0.0
        %3970 = vmatprep.subr.mxu0 0.0
        %3971 = vmatpush1.msra.mxu0 0.0
        %3972 = vmatprep.subr.mxu0 0.0
        %3973 = vmatpush1.msra.mxu0 %v3866
        %3974 = vmatprep.subr.mxu0 0.0
        %3975 = vmatpush1.msra.mxu0 %v3863
        %3976 = vmatprep.subr.mxu0 0.0
        %3977 = vmatpush1.msra.mxu0 %v3860
        %3978 = vmatprep.subr.mxu0 0.0
        %3979 = vmatpush1.msra.mxu0 %v3857
        %3980 = vmatprep.subr.mxu0 0.0
        %3981 = vmatpush2.msra.mxu0 0.0
        %3982 = vmatprep.subr.mxu0 0.0
        %3983 = vmatpush2.msra.mxu0 0.0
        %3984 = vmatprep.subr.mxu0 0.0
        %3985 = vmatpush2.msra.mxu0 0.0
        %3986 = vmatprep.subr.mxu0 0.0
        %3987 = vmatpush2.msra.mxu0 0.0
        %3988 = vmatprep.subr.mxu0 0.0
        %3989 = vmatpush2.msra.mxu0 0.0
        %3990 = vmatprep.subr.mxu0 0.0
        %3991 = vmatpush2.msra.mxu0 0.0
        %3992 = vmatprep.subr.mxu0 0.0
        %3993 = vmatpush2.msra.mxu0 0.0
        %3994 = vmatprep.subr.mxu0 0.0
        %3995 = vmatpush2.msra.mxu0 0.0
        %3996 = vmatprep.subr.mxu0 0.0
        %3997 = vmatpush2.msra.mxu0 0.0
        %3998 = vmatprep.subr.mxu0 0.0
        %3999 = vmatpush2.msra.mxu0 0.0
        %4000 = vmatprep.subr.mxu0 0.0
        %4001 = vmatpush2.msra.mxu0 0.0
        %4002 = vmatprep.subr.mxu0 0.0
        %4003 = vmatpush2.msra.mxu0 0.0
        %4004 = vmatprep.subr.mxu0 0.0
        %4005 = vmatpush2.msra.mxu0 0.0
        %4006 = vmatprep.subr.mxu0 0.0
        %4007 = vmatpush2.msra.mxu0 0.0
        %4008 = vmatprep.subr.mxu0 0.0
        %4009 = vmatpush2.msra.mxu0 0.0
        %4010 = vmatprep.subr.mxu0 0.0
        %4011 = vmatpush2.msra.mxu0 0.0
        %4012 = vmatprep.mubr.f32.mxu0 0.0
        %4013 = vmatmul.mubr.f32.gmra.mxu0 %v3875
        %v4014 = vpop.f32.mrf.mxu0
        %v4015 = vadd.f32 %v3872, %v4014
        %v4016 = vpop.f32.mrf.mxu0
        %4017 = vdwg.mxu0
        %v4018 = vmul.f32 %v3944, 0.5
        %v4019 = vmul.f32 %v3946, 0.5
        %v4020 = vmul.f32 %v4015, 0.5
        %v4021 = vtanh.pop %v4018
        %v4022 = vtanh.pop %v4019
        %v4023 = vtanh.pop %v4020
        %v4024 = vmul.f32 %v4021, 0.5
        %v4025 = vmul.f32 %v4022, 0.5
        %v4026 = vmul.f32 %v4023, 0.5
        %v4027 = vadd.f32 %v4024, 0.5
        %v4028 = vadd.f32 %v4025, 0.5
        %v4029 = vadd.f32 %v4026, 0.5
        %v4030 = vadd.f32 %v2094, %v4027
        %v4031 = vadd.f32 %v2095, %v4028
        %v4032 = vadd.f32 %v2096, %v4029
        %v4033 = vsel %vm2138, %v4030, %v3066
        %v4034 = vsel %vm2138, %v4031, %v3067
        %v4035 = vsel %vm2138, %v4032, %v3068
        %4036 = vxpose.xlu0.b32.start [1/16] %v4033, 128
        %4037 = vxpose.xlu0.b32.cont [2/16] 0.0, 128
        %4038 = vxpose.xlu0.b32.cont [3/16] 0.0, 128
        %4039 = vxpose.xlu0.b32.cont [4/16] 0.0, 128
        %4040 = vxpose.xlu0.b32.cont [5/16] 0.0, 128
        %4041 = vxpose.xlu0.b32.cont [6/16] 0.0, 128
        %4042 = vxpose.xlu0.b32.cont [7/16] 0.0, 128
        %4043 = vxpose.xlu0.b32.cont [8/16] 0.0, 128
        %4044 = vxpose.xlu0.b32.cont [9/16] 0.0, 128
        %4045 = vxpose.xlu0.b32.cont [10/16] 0.0, 128
        %4046 = vxpose.xlu0.b32.cont [11/16] 0.0, 128
        %4047 = vxpose.xlu0.b32.cont [12/16] 0.0, 128
        %4048 = vxpose.xlu0.b32.cont [13/16] 0.0, 128
        %4049 = vxpose.xlu0.b32.cont [14/16] 0.0, 128
        %4050 = vxpose.xlu0.b32.cont [15/16] 0.0, 128
        %4051 = vxpose.xlu0.b32.end [16/16] 0.0, 128
        %v4052 = vpop.trf.xlu0
        %v4053 = vpop.trf.xlu0
        %v4054 = vpop.trf.xlu0
        %v4055 = vpop.trf.xlu0
        %v4056 = vpop.trf.xlu0
        %v4057 = vpop.trf.xlu0
        %v4058 = vpop.trf.xlu0
        %v4059 = vpop.trf.xlu0
        %v4060 = vpop.trf.xlu0
        %v4061 = vpop.trf.xlu0
        %v4062 = vpop.trf.xlu0
        %v4063 = vpop.trf.xlu0
        %v4064 = vpop.trf.xlu0
        %v4065 = vpop.trf.xlu0
        %v4066 = vpop.trf.xlu0
        %v4067 = vpop.trf.xlu0
        %4068 = vxpose.xlu0.b32.start [1/16] %v4034, 128
        %4069 = vxpose.xlu0.b32.cont [2/16] 0.0, 128
        %4070 = vxpose.xlu0.b32.cont [3/16] 0.0, 128
        %4071 = vxpose.xlu0.b32.cont [4/16] 0.0, 128
        %4072 = vxpose.xlu0.b32.cont [5/16] 0.0, 128
        %4073 = vxpose.xlu0.b32.cont [6/16] 0.0, 128
        %4074 = vxpose.xlu0.b32.cont [7/16] 0.0, 128
        %4075 = vxpose.xlu0.b32.cont [8/16] 0.0, 128
        %4076 = vxpose.xlu0.b32.cont [9/16] 0.0, 128
        %4077 = vxpose.xlu0.b32.cont [10/16] 0.0, 128
        %4078 = vxpose.xlu0.b32.cont [11/16] 0.0, 128
        %4079 = vxpose.xlu0.b32.cont [12/16] 0.0, 128
        %4080 = vxpose.xlu0.b32.cont [13/16] 0.0, 128
        %4081 = vxpose.xlu0.b32.cont [14/16] 0.0, 128
        %4082 = vxpose.xlu0.b32.cont [15/16] 0.0, 128
        %4083 = vxpose.xlu0.b32.end [16/16] 0.0, 128
        %v4084 = vpop.trf.xlu0
        %v4085 = vpop.trf.xlu0
        %v4086 = vpop.trf.xlu0
        %v4087 = vpop.trf.xlu0
        %v4088 = vpop.trf.xlu0
        %v4089 = vpop.trf.xlu0
        %v4090 = vpop.trf.xlu0
        %v4091 = vpop.trf.xlu0
        %v4092 = vpop.trf.xlu0
        %v4093 = vpop.trf.xlu0
        %v4094 = vpop.trf.xlu0
        %v4095 = vpop.trf.xlu0
        %v4096 = vpop.trf.xlu0
        %v4097 = vpop.trf.xlu0
        %v4098 = vpop.trf.xlu0
        %v4099 = vpop.trf.xlu0
        %4100 = vxpose.xlu0.b32.start [1/16] %v4035, 128
        %4101 = vxpose.xlu0.b32.cont [2/16] 0.0, 128
        %4102 = vxpose.xlu0.b32.cont [3/16] 0.0, 128
        %4103 = vxpose.xlu0.b32.cont [4/16] 0.0, 128
        %4104 = vxpose.xlu0.b32.cont [5/16] 0.0, 128
        %4105 = vxpose.xlu0.b32.cont [6/16] 0.0, 128
        %4106 = vxpose.xlu0.b32.cont [7/16] 0.0, 128
        %4107 = vxpose.xlu0.b32.cont [8/16] 0.0, 128
        %4108 = vxpose.xlu0.b32.cont [9/16] 0.0, 128
        %4109 = vxpose.xlu0.b32.cont [10/16] 0.0, 128
        %4110 = vxpose.xlu0.b32.cont [11/16] 0.0, 128
        %4111 = vxpose.xlu0.b32.cont [12/16] 0.0, 128
        %4112 = vxpose.xlu0.b32.cont [13/16] 0.0, 128
        %4113 = vxpose.xlu0.b32.cont [14/16] 0.0, 128
        %4114 = vxpose.xlu0.b32.cont [15/16] 0.0, 128
        %4115 = vxpose.xlu0.b32.end [16/16] 0.0, 128
        %v4116 = vpop.trf.xlu0
        %v4117 = vpop.trf.xlu0
        %v4118 = vpop.trf.xlu0
        %v4119 = vpop.trf.xlu0
        %v4120 = vpop.trf.xlu0
        %v4121 = vpop.trf.xlu0
        %v4122 = vpop.trf.xlu0
        %v4123 = vpop.trf.xlu0
        %v4124 = vpop.trf.xlu0
        %v4125 = vpop.trf.xlu0
        %v4126 = vpop.trf.xlu0
        %v4127 = vpop.trf.xlu0
        %v4128 = vpop.trf.xlu0
        %v4129 = vpop.trf.xlu0
        %v4130 = vpop.trf.xlu0
        %v4131 = vpop.trf.xlu0
        %4132 = vst.msk [vmem:[%s766] sm:$0xff] %vm841, %v4052
        %4133 = vst.msk [vmem:[%s766 + $0x8] sm:$0xff] %vm841, %v4053
        %4134 = vst.msk [vmem:[%s766 + $0x10] sm:$0xff] %vm841, %v4054
        %4135 = vst.msk [vmem:[%s766 + $0x18] sm:$0xff] %vm841, %v4055
        %4136 = vst.msk [vmem:[%s766 + $0x20] sm:$0xff] %vm841, %v4056
        %4137 = vst.msk [vmem:[%s766 + $0x28] sm:$0xff] %vm841, %v4057
        %4138 = vst.msk [vmem:[%s766 + $0x30] sm:$0xff] %vm841, %v4058
        %4139 = vst.msk [vmem:[%s766 + $0x38] sm:$0xff] %vm841, %v4059
        %4140 = vst.msk [vmem:[%s766 + $0x40] sm:$0xff] %vm841, %v4060
        %4141 = vst.msk [vmem:[%s766 + $0x48] sm:$0xff] %vm841, %v4061
        %4142 = vst.msk [vmem:[%s766 + $0x50] sm:$0xff] %vm841, %v4062
        %4143 = vst.msk [vmem:[%s766 + $0x58] sm:$0xff] %vm841, %v4063
        %4144 = vst.msk [vmem:[%s766 + $0x60] sm:$0xff] %vm841, %v4064
        %4145 = vst.msk [vmem:[%s766 + $0x68] sm:$0xff] %vm841, %v4065
        %4146 = vst.msk [vmem:[%s766 + $0x70] sm:$0xff] %vm841, %v4066
        %4147 = vst.msk [vmem:[%s766 + $0x78] sm:$0xff] %vm841, %v4067
        %4148 = vst.msk [vmem:[%s766 + $0x80] sm:$0xff] %vm841, %v4084
        %4149 = vst.msk [vmem:[%s766 + $0x88] sm:$0xff] %vm841, %v4085
        %4150 = vst.msk [vmem:[%s766 + $0x90] sm:$0xff] %vm841, %v4086
        %4151 = vst.msk [vmem:[%s766 + $0x98] sm:$0xff] %vm841, %v4087
        %4152 = vst.msk [vmem:[%s766 + $0xa0] sm:$0xff] %vm841, %v4088
        %4153 = vst.msk [vmem:[%s766 + $0xa8] sm:$0xff] %vm841, %v4089
        %4154 = vst.msk [vmem:[%s766 + $0xb0] sm:$0xff] %vm841, %v4090
        %4155 = vst.msk [vmem:[%s766 + $0xb8] sm:$0xff] %vm841, %v4091
        %4156 = vst.msk [vmem:[%s766 + $0xc0] sm:$0xff] %vm841, %v4092
        %4157 = vst.msk [vmem:[%s766 + $0xc8] sm:$0xff] %vm841, %v4093
        %4158 = vst.msk [vmem:[%s766 + $0xd0] sm:$0xff] %vm841, %v4094
        %4159 = vst.msk [vmem:[%s766 + $0xd8] sm:$0xff] %vm841, %v4095
        %4160 = vst.msk [vmem:[%s766 + $0xe0] sm:$0xff] %vm841, %v4096
        %4161 = vst.msk [vmem:[%s766 + $0xe8] sm:$0xff] %vm841, %v4097
        %4162 = vst.msk [vmem:[%s766 + $0xf0] sm:$0xff] %vm841, %v4098
        %4163 = vst.msk [vmem:[%s766 + $0xf8] sm:$0xff] %vm841, %v4099
        %4164 = vst.msk [vmem:[%s766 + $0x100] sm:$0xff] %vm841, %v4116
        %4165 = vst.msk [vmem:[%s766 + $0x108] sm:$0xff] %vm841, %v4117
        %4166 = vst.msk [vmem:[%s766 + $0x110] sm:$0xff] %vm841, %v4118
        %4167 = vst.msk [vmem:[%s766 + $0x118] sm:$0xff] %vm841, %v4119
        %4168 = vst.msk [vmem:[%s766 + $0x120] sm:$0xff] %vm841, %v4120
        %4169 = vst.msk [vmem:[%s766 + $0x128] sm:$0xff] %vm841, %v4121
        %4170 = vst.msk [vmem:[%s766 + $0x130] sm:$0xff] %vm841, %v4122
        %4171 = vst.msk [vmem:[%s766 + $0x138] sm:$0xff] %vm841, %v4123
        %4172 = vst.msk [vmem:[%s766 + $0x140] sm:$0xff] %vm841, %v4124
        %4173 = vst.msk [vmem:[%s766 + $0x148] sm:$0xff] %vm841, %v4125
        %4174 = vst.msk [vmem:[%s766 + $0x150] sm:$0xff] %vm841, %v4126
        %4175 = vst.msk [vmem:[%s766 + $0x158] sm:$0xff] %vm841, %v4127
        %4176 = vst.msk [vmem:[%s766 + $0x160] sm:$0xff] %vm841, %v4128
        %4177 = vst.msk [vmem:[%s766 + $0x168] sm:$0xff] %vm841, %v4129
        %4178 = vst.msk [vmem:[%s766 + $0x170] sm:$0xff] %vm841, %v4130
        %4179 = vst.msk [vmem:[%s766 + $0x178] sm:$0xff] %vm841, %v4131
        %s4180 = sand.u32 %s574, 1
        %s4181 = sand.u32 %s574, 1
        %s4182 = smul.addr %s4181, 384
        %s4183 = scalar_lea.vmem [#allocation2], %s4182
        // Predicated region
        $region121: #{inn_forward.1} parent=119 // pred_check
          %p4184 = pneg %p584
        $region122: #{inn_forward.1} parent=119 // pred_check_branch
          %4186 = sbr.rel (%p4184) target = $region124
        $region123: #{inn_forward.1} parent=119 // pred_region
          %s4187 = smul.u32 48, %s36
          %s4188 = ssub.s32 75, %s4187
          %p4189 = scmp.lt.s32.totalorder %s4188, 48
          %s4190 = scalar_select %p4189, %s4188, 48
          %s4191 = smul.u32 128, %s4190
          %p4192 = scmp.ne.s32.totalorder 0, %s4191
          %s4193 = smul.addr %s4187, 8
          %s4194 = scalar_lea.vmem %s25, %s4193
          // Predicated region
          $region125: #{inn_forward.1} parent=123 // pred_check
            %p4195 = pneg %p4192
          $region126: #{inn_forward.1} parent=123 // pred_check_branch
            %4197 = sbr.rel (%p4195) target = $region128
          $region127: #{inn_forward.1} parent=123 // pred_region
            // Predicated region
            $region129: #{inn_forward.1} parent=127 // pred_check
              _
            $region130: #{inn_forward.1} parent=127 // pred_check_branch
              %4199 = sbr.rel (0) target = $region132
            $region131: #{inn_forward.1} parent=127 // pred_region
              // Predicated region
              $region151: #{inn_forward.1} parent=131 // pred_check
                _
              $region152: #{inn_forward.1} parent=131 // pred_check_branch
                %4344 = sbr.rel (0) target = $region154
              $region153: #{inn_forward.1} parent=131 // pred_region
                %s4345 = sdiv.u32.pop %s4190, 48
                %s4346 = srem.u32.pop %s4190, 48
                // While loop
                $region155: #{inn_forward.1} parent=153 // loop_pre_header
                  _
                $region156: #{inn_forward.1} parent=153 // loop_header
                  %s4348 = sphi 0, %s4350
                  %p4349 = scmp.ge.s32.totalorder %s4348, %s4345
                  %s4353 = sphi 0, %s4454
                  %s4354 = sphi %s4183, %s4457
                  %s4355 = sphi %s4194, %s4458
                $region157: #{inn_forward.1} parent=153 // loop_header_branch
                  %4352 = sbr.rel (%p4349) target = $region161
                $region158: #{inn_forward.1} parent=153 // loop_body
                  %v4356 = vld [vmem:[%s4354] sm:$0xff]
                  %4357 = vst [vmem:[%s4355] sm:$0xff] %v4356
                  %v4358 = vld [vmem:[%s4354 + $0x8] sm:$0xff]
                  %4359 = vst [vmem:[%s4355 + $0x8] sm:$0xff] %v4358
                  %v4360 = vld [vmem:[%s4354 + $0x10] sm:$0xff]
                  %4361 = vst [vmem:[%s4355 + $0x10] sm:$0xff] %v4360
                  %v4362 = vld [vmem:[%s4354 + $0x18] sm:$0xff]
                  %4363 = vst [vmem:[%s4355 + $0x18] sm:$0xff] %v4362
                  %v4364 = vld [vmem:[%s4354 + $0x20] sm:$0xff]
                  %4365 = vst [vmem:[%s4355 + $0x20] sm:$0xff] %v4364
                  %v4366 = vld [vmem:[%s4354 + $0x28] sm:$0xff]
                  %4367 = vst [vmem:[%s4355 + $0x28] sm:$0xff] %v4366
                  %v4368 = vld [vmem:[%s4354 + $0x30] sm:$0xff]
                  %4369 = vst [vmem:[%s4355 + $0x30] sm:$0xff] %v4368
                  %v4370 = vld [vmem:[%s4354 + $0x38] sm:$0xff]
                  %4371 = vst [vmem:[%s4355 + $0x38] sm:$0xff] %v4370
                  %v4372 = vld [vmem:[%s4354 + $0x40] sm:$0xff]
                  %4373 = vst [vmem:[%s4355 + $0x40] sm:$0xff] %v4372
                  %v4374 = vld [vmem:[%s4354 + $0x48] sm:$0xff]
                  %4375 = vst [vmem:[%s4355 + $0x48] sm:$0xff] %v4374
                  %v4376 = vld [vmem:[%s4354 + $0x50] sm:$0xff]
                  %4377 = vst [vmem:[%s4355 + $0x50] sm:$0xff] %v4376
                  %v4378 = vld [vmem:[%s4354 + $0x58] sm:$0xff]
                  %4379 = vst [vmem:[%s4355 + $0x58] sm:$0xff] %v4378
                  %v4380 = vld [vmem:[%s4354 + $0x60] sm:$0xff]
                  %4381 = vst [vmem:[%s4355 + $0x60] sm:$0xff] %v4380
                  %v4382 = vld [vmem:[%s4354 + $0x68] sm:$0xff]
                  %4383 = vst [vmem:[%s4355 + $0x68] sm:$0xff] %v4382
                  %v4384 = vld [vmem:[%s4354 + $0x70] sm:$0xff]
                  %4385 = vst [vmem:[%s4355 + $0x70] sm:$0xff] %v4384
                  %v4386 = vld [vmem:[%s4354 + $0x78] sm:$0xff]
                  %4387 = vst [vmem:[%s4355 + $0x78] sm:$0xff] %v4386
                  %v4388 = vld [vmem:[%s4354 + $0x80] sm:$0xff]
                  %4389 = vst [vmem:[%s4355 + $0x80] sm:$0xff] %v4388
                  %v4390 = vld [vmem:[%s4354 + $0x88] sm:$0xff]
                  %4391 = vst [vmem:[%s4355 + $0x88] sm:$0xff] %v4390
                  %v4392 = vld [vmem:[%s4354 + $0x90] sm:$0xff]
                  %4393 = vst [vmem:[%s4355 + $0x90] sm:$0xff] %v4392
                  %v4394 = vld [vmem:[%s4354 + $0x98] sm:$0xff]
                  %4395 = vst [vmem:[%s4355 + $0x98] sm:$0xff] %v4394
                  %v4396 = vld [vmem:[%s4354 + $0xa0] sm:$0xff]
                  %4397 = vst [vmem:[%s4355 + $0xa0] sm:$0xff] %v4396
                  %v4398 = vld [vmem:[%s4354 + $0xa8] sm:$0xff]
                  %4399 = vst [vmem:[%s4355 + $0xa8] sm:$0xff] %v4398
                  %v4400 = vld [vmem:[%s4354 + $0xb0] sm:$0xff]
                  %4401 = vst [vmem:[%s4355 + $0xb0] sm:$0xff] %v4400
                  %v4402 = vld [vmem:[%s4354 + $0xb8] sm:$0xff]
                  %4403 = vst [vmem:[%s4355 + $0xb8] sm:$0xff] %v4402
                  %v4404 = vld [vmem:[%s4354 + $0xc0] sm:$0xff]
                  %4405 = vst [vmem:[%s4355 + $0xc0] sm:$0xff] %v4404
                  %v4406 = vld [vmem:[%s4354 + $0xc8] sm:$0xff]
                  %4407 = vst [vmem:[%s4355 + $0xc8] sm:$0xff] %v4406
                  %v4408 = vld [vmem:[%s4354 + $0xd0] sm:$0xff]
                  %4409 = vst [vmem:[%s4355 + $0xd0] sm:$0xff] %v4408
                  %v4410 = vld [vmem:[%s4354 + $0xd8] sm:$0xff]
                  %4411 = vst [vmem:[%s4355 + $0xd8] sm:$0xff] %v4410
                  %v4412 = vld [vmem:[%s4354 + $0xe0] sm:$0xff]
                  %4413 = vst [vmem:[%s4355 + $0xe0] sm:$0xff] %v4412
                  %v4414 = vld [vmem:[%s4354 + $0xe8] sm:$0xff]
                  %4415 = vst [vmem:[%s4355 + $0xe8] sm:$0xff] %v4414
                  %v4416 = vld [vmem:[%s4354 + $0xf0] sm:$0xff]
                  %4417 = vst [vmem:[%s4355 + $0xf0] sm:$0xff] %v4416
                  %v4418 = vld [vmem:[%s4354 + $0xf8] sm:$0xff]
                  %4419 = vst [vmem:[%s4355 + $0xf8] sm:$0xff] %v4418
                  %v4420 = vld [vmem:[%s4354 + $0x100] sm:$0xff]
                  %4421 = vst [vmem:[%s4355 + $0x100] sm:$0xff] %v4420
                  %v4422 = vld [vmem:[%s4354 + $0x108] sm:$0xff]
                  %4423 = vst [vmem:[%s4355 + $0x108] sm:$0xff] %v4422
                  %v4424 = vld [vmem:[%s4354 + $0x110] sm:$0xff]
                  %4425 = vst [vmem:[%s4355 + $0x110] sm:$0xff] %v4424
                  %v4426 = vld [vmem:[%s4354 + $0x118] sm:$0xff]
                  %4427 = vst [vmem:[%s4355 + $0x118] sm:$0xff] %v4426
                  %v4428 = vld [vmem:[%s4354 + $0x120] sm:$0xff]
                  %4429 = vst [vmem:[%s4355 + $0x120] sm:$0xff] %v4428
                  %v4430 = vld [vmem:[%s4354 + $0x128] sm:$0xff]
                  %4431 = vst [vmem:[%s4355 + $0x128] sm:$0xff] %v4430
                  %v4432 = vld [vmem:[%s4354 + $0x130] sm:$0xff]
                  %4433 = vst [vmem:[%s4355 + $0x130] sm:$0xff] %v4432
                  %v4434 = vld [vmem:[%s4354 + $0x138] sm:$0xff]
                  %4435 = vst [vmem:[%s4355 + $0x138] sm:$0xff] %v4434
                  %v4436 = vld [vmem:[%s4354 + $0x140] sm:$0xff]
                  %4437 = vst [vmem:[%s4355 + $0x140] sm:$0xff] %v4436
                  %v4438 = vld [vmem:[%s4354 + $0x148] sm:$0xff]
                  %4439 = vst [vmem:[%s4355 + $0x148] sm:$0xff] %v4438
                  %v4440 = vld [vmem:[%s4354 + $0x150] sm:$0xff]
                  %4441 = vst [vmem:[%s4355 + $0x150] sm:$0xff] %v4440
                  %v4442 = vld [vmem:[%s4354 + $0x158] sm:$0xff]
                  %4443 = vst [vmem:[%s4355 + $0x158] sm:$0xff] %v4442
                  %v4444 = vld [vmem:[%s4354 + $0x160] sm:$0xff]
                  %4445 = vst [vmem:[%s4355 + $0x160] sm:$0xff] %v4444
                  %v4446 = vld [vmem:[%s4354 + $0x168] sm:$0xff]
                  %4447 = vst [vmem:[%s4355 + $0x168] sm:$0xff] %v4446
                  %v4448 = vld [vmem:[%s4354 + $0x170] sm:$0xff]
                  %4449 = vst [vmem:[%s4355 + $0x170] sm:$0xff] %v4448
                  %v4450 = vld [vmem:[%s4354 + $0x178] sm:$0xff]
                  %4451 = vst [vmem:[%s4355 + $0x178] sm:$0xff] %v4450
                  %s4452 = sadd.s32 1, %s4353
                  %p4453 = scmp.ge.s32.totalorder %s4452, %s4345
                  %s4454 = scalar_select %p4453, 0, %s4452
                  %s4455 = smul.u32 %s4454, 384
                  %s4456 = smul.u32 %s4454, 384
                  %s4457 = scalar_lea.vmem %s4183, %s4455 [#allocation2]
                  %s4458 = scalar_lea.vmem %s4194, %s4456
                $region159: #{inn_forward.1} parent=153 // loop_footer
                  %s4350 = sadd.s32 %s4348, 1
                $region160: #{inn_forward.1} parent=153 // loop_footer_branch
                  %4347 = sbr.rel target = $region156
                $region161: #{inn_forward.1} parent=153 // loop_exit
                  _
                %s4459 = sdiv.u32.pop %s4190, 48
                %s4460 = srem.u32.pop %s4190, 48
                %s4461 = smul.u32 %s4459, 48
                %s4462 = smul.u32 8, %s4461
                %s4463 = scalar_lea.vmem %s4183, %s4462 [#allocation2]
                %s4464 = smul.u32 8, %s4461
                %s4465 = scalar_lea.vmem %s4194, %s4464
                // While loop
                $region162: #{inn_forward.1} parent=153 // loop_pre_header
                  _
                $region163: #{inn_forward.1} parent=153 // loop_header
                  %s4467 = sphi 0, %s4469
                  %p4468 = scmp.ge.s32.totalorder %s4467, %s4460
                  %s4472 = sphi 0, %s4479
                  %s4473 = sphi %s4463, %s4482
                  %s4474 = sphi %s4465, %s4483
                $region164: #{inn_forward.1} parent=153 // loop_header_branch
                  %4471 = sbr.rel (%p4468) target = $region168
                $region165: #{inn_forward.1} parent=153 // loop_body
                  %v4475 = vld [vmem:[%s4473] sm:$0xff]
                  %4476 = vst [vmem:[%s4474] sm:$0xff] %v4475
                  %s4477 = sadd.s32 1, %s4472
                  %p4478 = scmp.ge.s32.totalorder %s4477, %s4460
                  %s4479 = scalar_select %p4478, 0, %s4477
                  %s4480 = smul.u32 %s4479, 8
                  %s4481 = smul.u32 %s4479, 8
                  %s4482 = scalar_lea.vmem %s4463, %s4480 [#allocation2]
                  %s4483 = scalar_lea.vmem %s4465, %s4481
                $region166: #{inn_forward.1} parent=153 // loop_footer
                  %s4469 = sadd.s32 %s4467, 1
                $region167: #{inn_forward.1} parent=153 // loop_footer_branch
                  %4466 = sbr.rel target = $region163
                $region168: #{inn_forward.1} parent=153 // loop_exit
                  _
              $region154: #{inn_forward.1} parent=131 // pred_fallthru
                _
              // Predicated region
              $region169: #{inn_forward.1} parent=131 // pred_check
                _
              $region170: #{inn_forward.1} parent=131 // pred_check_branch
                %4485 = sbr.rel target = $region172
              $region171: #{inn_forward.1} parent=131 // pred_region
                _
              $region172: #{inn_forward.1} parent=131 // pred_fallthru
                _
            $region132: #{inn_forward.1} parent=127 // pred_fallthru
              _
            // Predicated region
            $region133: #{inn_forward.1} parent=127 // pred_check
              _
            $region134: #{inn_forward.1} parent=127 // pred_check_branch
              %4201 = sbr.rel target = $region136
            $region135: #{inn_forward.1} parent=127 // pred_region
              %s4203 = ssub.s32 256, 1
              %s4204 = sdiv.u32.pop %s4190, 48
              %s4205 = srem.u32.pop %s4190, 48
              // While loop
              $region137: #{inn_forward.1} parent=135 // loop_pre_header
                _
              $region138: #{inn_forward.1} parent=135 // loop_header
                %s4207 = sphi 0, %s4209
                %p4208 = scmp.ge.s32.totalorder %s4207, %s4204
                %s4212 = sphi 0, %s4313
                %s4213 = sphi %s4183, %s4316
                %s4214 = sphi %s4194, %s4317
              $region139: #{inn_forward.1} parent=135 // loop_header_branch
                %4211 = sbr.rel (%p4208) target = $region143
              $region140: #{inn_forward.1} parent=135 // loop_body
                %v4215 = vld [vmem:[%s4213] sm:%s4203]
                %4216 = vst [vmem:[%s4214] sm:%s4203] %v4215
                %v4217 = vld [vmem:[%s4213 + $0x8] sm:%s4203]
                %4218 = vst [vmem:[%s4214 + $0x8] sm:%s4203] %v4217
                %v4219 = vld [vmem:[%s4213 + $0x10] sm:%s4203]
                %4220 = vst [vmem:[%s4214 + $0x10] sm:%s4203] %v4219
                %v4221 = vld [vmem:[%s4213 + $0x18] sm:%s4203]
                %4222 = vst [vmem:[%s4214 + $0x18] sm:%s4203] %v4221
                %v4223 = vld [vmem:[%s4213 + $0x20] sm:%s4203]
                %4224 = vst [vmem:[%s4214 + $0x20] sm:%s4203] %v4223
                %v4225 = vld [vmem:[%s4213 + $0x28] sm:%s4203]
                %4226 = vst [vmem:[%s4214 + $0x28] sm:%s4203] %v4225
                %v4227 = vld [vmem:[%s4213 + $0x30] sm:%s4203]
                %4228 = vst [vmem:[%s4214 + $0x30] sm:%s4203] %v4227
                %v4229 = vld [vmem:[%s4213 + $0x38] sm:%s4203]
                %4230 = vst [vmem:[%s4214 + $0x38] sm:%s4203] %v4229
                %v4231 = vld [vmem:[%s4213 + $0x40] sm:%s4203]
                %4232 = vst [vmem:[%s4214 + $0x40] sm:%s4203] %v4231
                %v4233 = vld [vmem:[%s4213 + $0x48] sm:%s4203]
                %4234 = vst [vmem:[%s4214 + $0x48] sm:%s4203] %v4233
                %v4235 = vld [vmem:[%s4213 + $0x50] sm:%s4203]
                %4236 = vst [vmem:[%s4214 + $0x50] sm:%s4203] %v4235
                %v4237 = vld [vmem:[%s4213 + $0x58] sm:%s4203]
                %4238 = vst [vmem:[%s4214 + $0x58] sm:%s4203] %v4237
                %v4239 = vld [vmem:[%s4213 + $0x60] sm:%s4203]
                %4240 = vst [vmem:[%s4214 + $0x60] sm:%s4203] %v4239
                %v4241 = vld [vmem:[%s4213 + $0x68] sm:%s4203]
                %4242 = vst [vmem:[%s4214 + $0x68] sm:%s4203] %v4241
                %v4243 = vld [vmem:[%s4213 + $0x70] sm:%s4203]
                %4244 = vst [vmem:[%s4214 + $0x70] sm:%s4203] %v4243
                %v4245 = vld [vmem:[%s4213 + $0x78] sm:%s4203]
                %4246 = vst [vmem:[%s4214 + $0x78] sm:%s4203] %v4245
                %v4247 = vld [vmem:[%s4213 + $0x80] sm:%s4203]
                %4248 = vst [vmem:[%s4214 + $0x80] sm:%s4203] %v4247
                %v4249 = vld [vmem:[%s4213 + $0x88] sm:%s4203]
                %4250 = vst [vmem:[%s4214 + $0x88] sm:%s4203] %v4249
                %v4251 = vld [vmem:[%s4213 + $0x90] sm:%s4203]
                %4252 = vst [vmem:[%s4214 + $0x90] sm:%s4203] %v4251
                %v4253 = vld [vmem:[%s4213 + $0x98] sm:%s4203]
                %4254 = vst [vmem:[%s4214 + $0x98] sm:%s4203] %v4253
                %v4255 = vld [vmem:[%s4213 + $0xa0] sm:%s4203]
                %4256 = vst [vmem:[%s4214 + $0xa0] sm:%s4203] %v4255
                %v4257 = vld [vmem:[%s4213 + $0xa8] sm:%s4203]
                %4258 = vst [vmem:[%s4214 + $0xa8] sm:%s4203] %v4257
                %v4259 = vld [vmem:[%s4213 + $0xb0] sm:%s4203]
                %4260 = vst [vmem:[%s4214 + $0xb0] sm:%s4203] %v4259
                %v4261 = vld [vmem:[%s4213 + $0xb8] sm:%s4203]
                %4262 = vst [vmem:[%s4214 + $0xb8] sm:%s4203] %v4261
                %v4263 = vld [vmem:[%s4213 + $0xc0] sm:%s4203]
                %4264 = vst [vmem:[%s4214 + $0xc0] sm:%s4203] %v4263
                %v4265 = vld [vmem:[%s4213 + $0xc8] sm:%s4203]
                %4266 = vst [vmem:[%s4214 + $0xc8] sm:%s4203] %v4265
                %v4267 = vld [vmem:[%s4213 + $0xd0] sm:%s4203]
                %4268 = vst [vmem:[%s4214 + $0xd0] sm:%s4203] %v4267
                %v4269 = vld [vmem:[%s4213 + $0xd8] sm:%s4203]
                %4270 = vst [vmem:[%s4214 + $0xd8] sm:%s4203] %v4269
                %v4271 = vld [vmem:[%s4213 + $0xe0] sm:%s4203]
                %4272 = vst [vmem:[%s4214 + $0xe0] sm:%s4203] %v4271
                %v4273 = vld [vmem:[%s4213 + $0xe8] sm:%s4203]
                %4274 = vst [vmem:[%s4214 + $0xe8] sm:%s4203] %v4273
                %v4275 = vld [vmem:[%s4213 + $0xf0] sm:%s4203]
                %4276 = vst [vmem:[%s4214 + $0xf0] sm:%s4203] %v4275
                %v4277 = vld [vmem:[%s4213 + $0xf8] sm:%s4203]
                %4278 = vst [vmem:[%s4214 + $0xf8] sm:%s4203] %v4277
                %v4279 = vld [vmem:[%s4213 + $0x100] sm:%s4203]
                %4280 = vst [vmem:[%s4214 + $0x100] sm:%s4203] %v4279
                %v4281 = vld [vmem:[%s4213 + $0x108] sm:%s4203]
                %4282 = vst [vmem:[%s4214 + $0x108] sm:%s4203] %v4281
                %v4283 = vld [vmem:[%s4213 + $0x110] sm:%s4203]
                %4284 = vst [vmem:[%s4214 + $0x110] sm:%s4203] %v4283
                %v4285 = vld [vmem:[%s4213 + $0x118] sm:%s4203]
                %4286 = vst [vmem:[%s4214 + $0x118] sm:%s4203] %v4285
                %v4287 = vld [vmem:[%s4213 + $0x120] sm:%s4203]
                %4288 = vst [vmem:[%s4214 + $0x120] sm:%s4203] %v4287
                %v4289 = vld [vmem:[%s4213 + $0x128] sm:%s4203]
                %4290 = vst [vmem:[%s4214 + $0x128] sm:%s4203] %v4289
                %v4291 = vld [vmem:[%s4213 + $0x130] sm:%s4203]
                %4292 = vst [vmem:[%s4214 + $0x130] sm:%s4203] %v4291
                %v4293 = vld [vmem:[%s4213 + $0x138] sm:%s4203]
                %4294 = vst [vmem:[%s4214 + $0x138] sm:%s4203] %v4293
                %v4295 = vld [vmem:[%s4213 + $0x140] sm:%s4203]
                %4296 = vst [vmem:[%s4214 + $0x140] sm:%s4203] %v4295
                %v4297 = vld [vmem:[%s4213 + $0x148] sm:%s4203]
                %4298 = vst [vmem:[%s4214 + $0x148] sm:%s4203] %v4297
                %v4299 = vld [vmem:[%s4213 + $0x150] sm:%s4203]
                %4300 = vst [vmem:[%s4214 + $0x150] sm:%s4203] %v4299
                %v4301 = vld [vmem:[%s4213 + $0x158] sm:%s4203]
                %4302 = vst [vmem:[%s4214 + $0x158] sm:%s4203] %v4301
                %v4303 = vld [vmem:[%s4213 + $0x160] sm:%s4203]
                %4304 = vst [vmem:[%s4214 + $0x160] sm:%s4203] %v4303
                %v4305 = vld [vmem:[%s4213 + $0x168] sm:%s4203]
                %4306 = vst [vmem:[%s4214 + $0x168] sm:%s4203] %v4305
                %v4307 = vld [vmem:[%s4213 + $0x170] sm:%s4203]
                %4308 = vst [vmem:[%s4214 + $0x170] sm:%s4203] %v4307
                %v4309 = vld [vmem:[%s4213 + $0x178] sm:%s4203]
                %4310 = vst [vmem:[%s4214 + $0x178] sm:%s4203] %v4309
                %s4311 = sadd.s32 1, %s4212
                %p4312 = scmp.ge.s32.totalorder %s4311, %s4204
                %s4313 = scalar_select %p4312, 0, %s4311
                %s4314 = smul.u32 %s4313, 384
                %s4315 = smul.u32 %s4313, 384
                %s4316 = scalar_lea.vmem %s4183, %s4314 [#allocation2]
                %s4317 = scalar_lea.vmem %s4194, %s4315
              $region141: #{inn_forward.1} parent=135 // loop_footer
                %s4209 = sadd.s32 %s4207, 1
              $region142: #{inn_forward.1} parent=135 // loop_footer_branch
                %4206 = sbr.rel target = $region138
              $region143: #{inn_forward.1} parent=135 // loop_exit
                _
              %s4318 = sdiv.u32.pop %s4190, 48
              %s4319 = srem.u32.pop %s4190, 48
              %s4320 = smul.u32 %s4318, 48
              %s4321 = smul.u32 8, %s4320
              %s4322 = scalar_lea.vmem %s4183, %s4321 [#allocation2]
              %s4323 = smul.u32 8, %s4320
              %s4324 = scalar_lea.vmem %s4194, %s4323
              // While loop
              $region144: #{inn_forward.1} parent=135 // loop_pre_header
                _
              $region145: #{inn_forward.1} parent=135 // loop_header
                %s4326 = sphi 0, %s4328
                %p4327 = scmp.ge.s32.totalorder %s4326, %s4319
                %s4331 = sphi 0, %s4338
                %s4332 = sphi %s4322, %s4341
                %s4333 = sphi %s4324, %s4342
              $region146: #{inn_forward.1} parent=135 // loop_header_branch
                %4330 = sbr.rel (%p4327) target = $region150
              $region147: #{inn_forward.1} parent=135 // loop_body
                %v4334 = vld [vmem:[%s4332] sm:%s4203]
                %4335 = vst [vmem:[%s4333] sm:%s4203] %v4334
                %s4336 = sadd.s32 1, %s4331
                %p4337 = scmp.ge.s32.totalorder %s4336, %s4319
                %s4338 = scalar_select %p4337, 0, %s4336
                %s4339 = smul.u32 %s4338, 8
                %s4340 = smul.u32 %s4338, 8
                %s4341 = scalar_lea.vmem %s4322, %s4339 [#allocation2]
                %s4342 = scalar_lea.vmem %s4324, %s4340
              $region148: #{inn_forward.1} parent=135 // loop_footer
                %s4328 = sadd.s32 %s4326, 1
              $region149: #{inn_forward.1} parent=135 // loop_footer_branch
                %4325 = sbr.rel target = $region145
              $region150: #{inn_forward.1} parent=135 // loop_exit
                _
            $region136: #{inn_forward.1} parent=127 // pred_fallthru
              _
          $region128: #{inn_forward.1} parent=123 // pred_fallthru
            _
          %4486 = vnop
        $region124: #{inn_forward.1} parent=119 // pred_fallthru
          _
      $region120: #{inn_forward.1} parent=5 // pred_fallthru
        _
      %p4487 = scmp.le.s32.totalorder 2, %s31
      // Predicated region
      $region173: #{inn_forward.1} parent=5 // pred_check
        %p4488 = pneg %p4487
      $region174: #{inn_forward.1} parent=5 // pred_check_branch
        %4490 = sbr.rel (%p4488) target = $region176
      $region175: #{inn_forward.1} parent=5 // pred_region
        %s4491 = ssub.s32 %s31, 2
        // Predicated region
        $region177: #{inn_forward.1} parent=175 // pred_check
          %p4492 = pneg %p590
        $region178: #{inn_forward.1} parent=175 // pred_check_branch
          %4494 = sbr.rel (%p4492) target = $region180
        $region179: #{inn_forward.1} parent=175 // pred_region
          %s4495 = sand.u32 %s575, 1
          %s4496 = sand.u32 %s575, 1
          %s4497 = smul.addr %s4496, 384
          %s4498 = scalar_lea.vmem [#allocation2], %s4497
        $region180: #{inn_forward.1} parent=175 // pred_fallthru
          _
      $region176: #{inn_forward.1} parent=5 // pred_fallthru
        _
    $region6: #{inn_forward.1} parent=1 // loop_footer
      %s35 = sadd.s32 1, %s31
    $region7: #{inn_forward.1} parent=1 // loop_footer_branch
      %30 = sbr.rel target = $region3
    $region8: #{inn_forward.1} parent=1 // loop_exit
      _

</llo_original>
